<compile_context>
chip_gen: v6e
topology: v6e:2x2x1
jax: 0.10.0
libtpu: 0.0.40
codegen_flags: <defaults>
</compile_context>

<pallas_src>
import numpy as np
import jax
import jax.numpy as jnp
from jax.experimental import pallas as pl
from jax.experimental.pallas import tpu as pltpu

LEAKY_SLOPE = 0.2
BN_EPS = 0.8   # nn.BatchNorm1d(out_feat, 0.8): second positional arg is eps
ZP = 128       # latent path padded to a full 128-lane width


def _leaky_relu(x):
    # For slope in (0,1), max(x, slope*x) == LeakyReLU(slope): one mul + one max.
    return jnp.maximum(x, LEAKY_SLOPE * x)


def _batchnorm_train(x, gamma, beta):
    # PyTorch module default is training mode -> batch statistics, biased variance.
    mu = jnp.mean(x, axis=0, keepdims=True)
    var = jnp.mean((x - mu) ** 2, axis=0, keepdims=True)
    return (x - mu) * jax.lax.rsqrt(var + BN_EPS) * gamma + beta


def generator_kernel(feat_ref, z_ref, wmw1_ref, p_ref,
                     w2_hbm, w3_hbm, w4_hbm, w5_hbm,
                     out_ref,
                     w2_buf, w3_buf, w4_buf, w5_buf, sem):
    # Manual weight DMAs, issued in the order the layers consume them so every
    # wait() completes as early as possible while later transfers keep streaming.
    cp2 = pltpu.make_async_copy(w2_hbm, w2_buf, sem.at[0])
    cp3 = pltpu.make_async_copy(w3_hbm, w3_buf, sem.at[1])
    cp4 = pltpu.make_async_copy(w4_hbm, w4_buf, sem.at[2])
    cp5 = pltpu.make_async_copy(w5_hbm, w5_buf, sem.at[3])
    cp2.start()
    cp3.start()
    cp4.start()
    cp5.start()

    C = feat_ref.shape[1]        # feature channels (2*C == 512 for mlp_layer)
    Z = z_ref.shape[1]           # latent_z_dim
    out_dim = out_ref.shape[1]
    n1, n2 = w2_buf.shape        # 128, 256
    n3 = w3_buf.shape[1]         # 512
    n4 = w4_buf.shape[1]         # 1024
    bf16 = jnp.bfloat16

    # Static, 128-aligned offsets into the packed small-parameter buffer.
    sizes = (ZP, n1, n2, n2, n2, n3, n3, n3, n4, n4, n4, out_dim, n4, out_dim)
    offs = []
    o = 0
    for s in sizes:
        offs.append(o)
        o += s

    def p(i):
        return p_ref[:, offs[i]:offs[i] + sizes[i]]

    bm, b1 = p(0), p(1)
    b2, g2, be2 = p(2), p(3), p(4)
    b3, g3, be3 = p(5), p(6), p(7)
    b4, g4, be4 = p(8), p(9), p(10)
    b5, s4, s5 = p(11), p(12), p(13)

    # Adaptive avg/max pooling over the spatial (lane) axis.  Features arrive
    # as a free reshape of NCHW -> (B, C, H*W); no wrapper transpose/cast op.
    f = feat_ref[...]                               # (B, C, H*W) f32
    favg = jnp.mean(f, axis=-1).astype(bf16)        # (B, C)
    fmax = jnp.max(f, axis=-1).astype(bf16)         # (B, C)

    # mlp_layer(cat(avg, max)): cat @ Wm + bm == avg @ Wm[:C] + max @ Wm[C:] + bm.
    # bf16 weight slices straight off the stacked ref -> MXU, f32 accumulate.
    disturb = (jnp.dot(favg, wmw1_ref[0:C, :], preferred_element_type=jnp.float32)
               + jnp.dot(fmax, wmw1_ref[C:2 * C, :], preferred_element_type=jnp.float32)
               + bm)                                # (B, ZP) f32, cols Z.. are zero

    # block(2Z, 128, normalize=False): Linear on cat(disturb, z) + LeakyReLU.
    w1o = 2 * C
    h = (jnp.dot(disturb.astype(bf16), wmw1_ref[w1o:w1o + ZP, :],
                 preferred_element_type=jnp.float32)
         + jnp.dot(z_ref[...].astype(bf16), wmw1_ref[w1o + ZP:w1o + ZP + Z, :],
                   preferred_element_type=jnp.float32)
         + b1)
    h = _leaky_relu(h)

    # block(128, 256): Linear + BatchNorm1d(eps=0.8) + LeakyReLU.
    cp2.wait()
    h = jnp.dot(h.astype(bf16), w2_buf[...], preferred_element_type=jnp.float32) + b2
    h = _leaky_relu(_batchnorm_train(h, g2, be2))

    # block(256, 512)
    cp3.wait()
    h = jnp.dot(h.astype(bf16), w3_buf[...], preferred_element_type=jnp.float32) + b3
    h = _leaky_relu(_batchnorm_train(h, g3, be3))

    # block(512, 1024): int8 weights; per-column scale folded into the bias add
    # (int8 -> bf16 convert is exact, so no dequant rounding at all).
    cp4.wait()
    h = (jnp.dot(h.astype(bf16), w4_buf[...].astype(bf16),
                 preferred_element_type=jnp.float32) * s4 + b4)
    h = _leaky_relu(_batchnorm_train(h, g4, be4))

    # Linear(1024, prod(img_shape)) + Tanh, int8 weights.
    cp5.wait()
    out_ref[...] = jnp.tanh(
        jnp.dot(h.astype(bf16), w5_buf[...].astype(bf16),
                preferred_element_type=jnp.float32) * s5 + b5)


def _linear_init(key, fan_in, fan_out):
    kw, kb = jax.random.split(key)
    bound = 1.0 / np.sqrt(fan_in)
    w = jax.random.uniform(kw, (fan_in, fan_out), jnp.float32, -bound, bound)
    b = jax.random.uniform(kb, (1, fan_out), jnp.float32, -bound, bound)
    return w, b


def _bn_init(key, n):
    kg, kb = jax.random.split(key)
    g = 1.0 + 0.1 * jax.random.normal(kg, (1, n), jnp.float32)
    be = 0.1 * jax.random.normal(kb, (1, n), jnp.float32)
    return g, be


def init_params(key, img_shape, latent_z_dim):
    out_dim = int(np.prod(img_shape))
    keys = jax.random.split(key, 9)
    wm, bm = _linear_init(keys[0], 512, latent_z_dim)
    w1, b1 = _linear_init(keys[1], 2 * latent_z_dim, 128)
    w2, b2 = _linear_init(keys[2], 128, 256)
    w3, b3 = _linear_init(keys[3], 256, 512)
    w4, b4 = _linear_init(keys[4], 512, 1024)
    w5, b5 = _linear_init(keys[5], 1024, out_dim)
    g2, be2 = _bn_init(keys[6], 256)
    g3, be3 = _bn_init(keys[7], 512)
    g4, be4 = _bn_init(keys[8], 1024)
    return dict(wm=wm, bm=bm, w1=w1, b1=b1, w2=w2, b2=b2, g2=g2, be2=be2,
                w3=w3, b3=b3, g3=g3, be3=be3, w4=w4, b4=b4, g4=g4, be4=be4,
                w5=w5, b5=b5)


def _quantize_per_column(w):
    # Symmetric int8 with a per-output-column scale; scale applied post-matmul.
    amax = jnp.max(jnp.abs(w), axis=0, keepdims=True)
    scale = jnp.where(amax > 0, amax / 127.0, 1.0).astype(jnp.float32)
    q = jnp.clip(jnp.rint(w / scale), -127, 127).astype(jnp.int8)
    return q, scale


def pack_params(params, latent_z_dim):
    """Kernel-side arguments: stacked bf16 wm/w1, bf16 w2/w3, int8 w4/w5 with
    per-column scales, and one packed f32 buffer for all small vectors."""
    Z = latent_z_dim
    two_c = params["wm"].shape[0]                 # 512
    out_dim = params["w5"].shape[1]
    # Lane-aligned packing + unmasked final stores require a 128-multiple width.
    assert out_dim % 128 == 0, "prod(img_shape) must be a multiple of 128 for lane-aligned packing"

    # Zero-pad the latent path to 128 lanes (padded cols/rows contribute zero).
    wm_p = jnp.zeros((two_c, ZP), jnp.float32).at[:, :Z].set(params["wm"])
    bm_p = jnp.zeros((1, ZP), jnp.float32).at[:, :Z].set(params["bm"])
    w1_p = jnp.zeros((ZP + Z, 128), jnp.float32)
    w1_p = w1_p.at[:Z, :].set(params["w1"][:Z, :])
    w1_p = w1_p.at[ZP:, :].set(params["w1"][Z:, :])
    # Single stacked (2C + 128 + Z, 128) bf16 buffer -> one DMA instead of two.
    wmw1 = jnp.concatenate([wm_p, w1_p], axis=0).astype(jnp.bfloat16)

    # int8 compression of the two dominant weights (cuts the dominant DMA 2x).
    w4q, s4 = _quantize_per_column(params["w4"])
    w5q, s5 = _quantize_per_column(params["w5"])

    # All biases / BN params / int8 scales coalesced into one f32 buffer
    # (one DMA; every segment width is a multiple of 128 here).
    pvec = jnp.concatenate(
        [bm_p, params["b1"],
         params["b2"], params["g2"], params["be2"],
         params["b3"], params["g3"], params["be3"],
         params["b4"], params["g4"], params["be4"],
         params["b5"], s4, s5], axis=1)

    bf16 = jnp.bfloat16
    return dict(wmw1=wmw1,
                w2=params["w2"].astype(bf16), w3=params["w3"].astype(bf16),
                w4q=w4q, w5q=w5q, s4=s4, s5=s5, pvec=pvec)


def generator_forward(packed, features, z, img_shape):
    B, C, H, W = features.shape
    out_dim = int(np.prod(img_shape))
    Z = z.shape[1]
    assert packed["wmw1"].shape[0] == 2 * C + ZP + Z, "wm/w1 packing inconsistent with C / latent_z_dim"
    assert packed["w5q"].shape[1] == out_dim, "final Linear width != prod(img_shape)"

    # Free reshape of NCHW (no transpose, no cast): pooling is done in-kernel.
    feat = features.reshape(B, C, H * W)

    vmem = pl.BlockSpec(memory_space=pltpu.MemorySpace.VMEM)
    hbm = pl.BlockSpec(memory_space=pl.ANY)   # raw HBM refs; DMA'd manually in-kernel

    out = pl.pallas_call(
        generator_kernel,
        out_shape=jax.ShapeDtypeStruct((B, out_dim), jnp.float32),
        in_specs=[vmem, vmem, vmem, vmem, hbm, hbm, hbm, hbm],
        out_specs=vmem,
        scratch_shapes=[
            pltpu.VMEM(packed["w2"].shape, jnp.bfloat16),
            pltpu.VMEM(packed["w3"].shape, jnp.bfloat16),
            pltpu.VMEM(packed["w4q"].shape, jnp.int8),
            pltpu.VMEM(packed["w5q"].shape, jnp.int8),
            pltpu.SemaphoreType.DMA((4,)),
        ],
    )(feat, z, packed["wmw1"], packed["pvec"],
      packed["w2"], packed["w3"], packed["w4q"], packed["w5q"])
    return out.reshape(B, *img_shape)


def generator_reference(params, packed, features, z, img_shape):
    # Pure-JAX reference mirroring the PyTorch forward (training-mode BN) with the
    # same storage formats the kernel uses: bf16 wm/w1/w2/w3, int8+scale w4/w5,
    # bf16 rounding of each matmul LHS (the MXU operand cast).
    B = features.shape[0]

    def r(w):   # bf16 weight storage rounding
        return w.astype(jnp.bfloat16).astype(jnp.float32)

    def a(x):   # bf16 activation (matmul LHS) rounding
        return x.astype(jnp.bfloat16).astype(jnp.float32)

    def lrelu(x):
        return jnp.where(x > 0, x, LEAKY_SLOPE * x)

    def bn(x, g, b):
        mu = jnp.mean(x, axis=0, keepdims=True)
        var = jnp.mean((x - mu) ** 2, axis=0, keepdims=True)
        return (x - mu) / jnp.sqrt(var + BN_EPS) * g + b

    favg = jnp.mean(features, axis=(2, 3))
    fmax = jnp.max(features, axis=(2, 3))
    newf = jnp.concatenate([favg, fmax], axis=1)
    disturb = a(newf) @ r(params["wm"]) + params["bm"]
    new_z = jnp.concatenate([disturb, z], axis=1)

    h = lrelu(a(new_z) @ r(params["w1"]) + params["b1"])
    h = lrelu(bn(a(h) @ r(params["w2"]) + params["b2"], params["g2"], params["be2"]))
    h = lrelu(bn(a(h) @ r(params["w3"]) + params["b3"], params["g3"], params["be3"]))
    h = lrelu(bn((a(h) @ packed["w4q"].astype(jnp.float32)) * packed["s4"] + params["b4"],
                 params["g4"], params["be4"]))
    img = jnp.tanh((a(h) @ packed["w5q"].astype(jnp.float32)) * packed["s5"] + params["b5"])
    return img.reshape(B, *img_shape)


if __name__ == "__main__":
    key = jax.random.PRNGKey(0)
    img_shape = (1, 16, 16)      # prod = 256
    latent_z_dim = 32
    # C must be 256 so cat(avg_pool, max_pool) has 512 features for mlp_layer(512, Z).
    B, C, H, W = 2, 256, 8, 8

    kp, kf, kz = jax.random.split(key, 3)
    params = init_params(kp, img_shape, latent_z_dim)
    packed = pack_params(params, latent_z_dim)
    features = jax.random.normal(kf, (B, C, H, W), jnp.float32)
    z = jax.random.normal(kz, (B, latent_z_dim), jnp.float32)

    fwd = jax.jit(generator_forward, static_argnums=(3,))
    out = jax.block_until_ready(fwd(packed, features, z, img_shape))
    ref = generator_reference(params, packed, features, z, img_shape)

    assert out.shape == (B,) + img_shape, out.shape
    err = float(np.max(np.abs(np.asarray(out) - np.asarray(ref))))
    assert np.allclose(np.asarray(out), np.asarray(ref), rtol=2e-2, atol=2e-2), err
    print("KERNEL_OK")
</pallas_src>

<mosaic_0001>
module attributes {stable_mosaic.version = 11 : i64} {
  func.func @generator_kernel(%arg0: memref<2x256x64xf32, #tpu.memory_space<vmem>>, %arg1: memref<2x32xf32, #tpu.memory_space<vmem>>, %arg2: memref<672x128xbf16, #tpu.memory_space<vmem>>, %arg3: memref<1x7168xf32, #tpu.memory_space<vmem>>, %arg4: memref<128x256xbf16, #tpu.memory_space<any>>, %arg5: memref<256x512xbf16, #tpu.memory_space<any>>, %arg6: memref<512x1024xi8, #tpu.memory_space<any>>, %arg7: memref<1024x256xi8, #tpu.memory_space<any>>, %arg8: memref<2x256xf32, #tpu.memory_space<vmem>>, %arg9: memref<128x256xbf16, #tpu.memory_space<vmem>>, %arg10: memref<256x512xbf16, #tpu.memory_space<vmem>>, %arg11: memref<512x1024xi8, #tpu.memory_space<vmem>>, %arg12: memref<1024x256xi8, #tpu.memory_space<vmem>>, %arg13: memref<4x!tpu.dma_semaphore, #tpu.memory_space<semaphore_mem>>) attributes {dimension_semantics = [], scalar_prefetch = 0 : i64, scratch_operands = 5 : i64, tpu.core_type = #tpu.core_type<tc>} {
    %c0_i32 = arith.constant 0 : i32
    %0 = tpu.memref_slice %arg13[%c0_i32] : memref<4x!tpu.dma_semaphore, #tpu.memory_space<semaphore_mem>> -> memref<1x!tpu.dma_semaphore, #tpu.memory_space<semaphore_mem>>
    %1 = tpu.memref_squeeze %0 : memref<1x!tpu.dma_semaphore, #tpu.memory_space<semaphore_mem>> -> memref<!tpu.dma_semaphore, #tpu.memory_space<semaphore_mem>>
    tpu.enqueue_dma source(%arg4 : memref<128x256xbf16, #tpu.memory_space<any>>) target(%arg9 : memref<128x256xbf16, #tpu.memory_space<vmem>>) target_semaphore(%1 : memref<!tpu.dma_semaphore, #tpu.memory_space<semaphore_mem>>)
    %c1_i32 = arith.constant 1 : i32
    %2 = tpu.memref_slice %arg13[%c1_i32] : memref<4x!tpu.dma_semaphore, #tpu.memory_space<semaphore_mem>> -> memref<1x!tpu.dma_semaphore, #tpu.memory_space<semaphore_mem>>
    %3 = tpu.memref_squeeze %2 : memref<1x!tpu.dma_semaphore, #tpu.memory_space<semaphore_mem>> -> memref<!tpu.dma_semaphore, #tpu.memory_space<semaphore_mem>>
    tpu.enqueue_dma source(%arg5 : memref<256x512xbf16, #tpu.memory_space<any>>) target(%arg10 : memref<256x512xbf16, #tpu.memory_space<vmem>>) target_semaphore(%3 : memref<!tpu.dma_semaphore, #tpu.memory_space<semaphore_mem>>)
    %c2_i32 = arith.constant 2 : i32
    %4 = tpu.memref_slice %arg13[%c2_i32] : memref<4x!tpu.dma_semaphore, #tpu.memory_space<semaphore_mem>> -> memref<1x!tpu.dma_semaphore, #tpu.memory_space<semaphore_mem>>
    %5 = tpu.memref_squeeze %4 : memref<1x!tpu.dma_semaphore, #tpu.memory_space<semaphore_mem>> -> memref<!tpu.dma_semaphore, #tpu.memory_space<semaphore_mem>>
    tpu.enqueue_dma source(%arg6 : memref<512x1024xi8, #tpu.memory_space<any>>) target(%arg11 : memref<512x1024xi8, #tpu.memory_space<vmem>>) target_semaphore(%5 : memref<!tpu.dma_semaphore, #tpu.memory_space<semaphore_mem>>)
    %c3_i32 = arith.constant 3 : i32
    %6 = tpu.memref_slice %arg13[%c3_i32] : memref<4x!tpu.dma_semaphore, #tpu.memory_space<semaphore_mem>> -> memref<1x!tpu.dma_semaphore, #tpu.memory_space<semaphore_mem>>
    %7 = tpu.memref_squeeze %6 : memref<1x!tpu.dma_semaphore, #tpu.memory_space<semaphore_mem>> -> memref<!tpu.dma_semaphore, #tpu.memory_space<semaphore_mem>>
    tpu.enqueue_dma source(%arg7 : memref<1024x256xi8, #tpu.memory_space<any>>) target(%arg12 : memref<1024x256xi8, #tpu.memory_space<vmem>>) target_semaphore(%7 : memref<!tpu.dma_semaphore, #tpu.memory_space<semaphore_mem>>)
    %c0 = arith.constant 0 : index
    %c0_0 = arith.constant 0 : index
    %8 = vector.load %arg3[%c0, %c0_0] : memref<1x7168xf32, #tpu.memory_space<vmem>>, vector<1x128xf32>
    %c0_1 = arith.constant 0 : index
    %c128 = arith.constant 128 : index
    %9 = vector.load %arg3[%c0_1, %c128] : memref<1x7168xf32, #tpu.memory_space<vmem>>, vector<1x128xf32>
    %c0_2 = arith.constant 0 : index
    %c256 = arith.constant 256 : index
    %10 = vector.load %arg3[%c0_2, %c256] : memref<1x7168xf32, #tpu.memory_space<vmem>>, vector<1x256xf32>
    %c0_3 = arith.constant 0 : index
    %c512 = arith.constant 512 : index
    %11 = vector.load %arg3[%c0_3, %c512] : memref<1x7168xf32, #tpu.memory_space<vmem>>, vector<1x256xf32>
    %c0_4 = arith.constant 0 : index
    %c768 = arith.constant 768 : index
    %12 = vector.load %arg3[%c0_4, %c768] : memref<1x7168xf32, #tpu.memory_space<vmem>>, vector<1x256xf32>
    %c0_5 = arith.constant 0 : index
    %c1024 = arith.constant 1024 : index
    %13 = vector.load %arg3[%c0_5, %c1024] : memref<1x7168xf32, #tpu.memory_space<vmem>>, vector<1x512xf32>
    %c0_6 = arith.constant 0 : index
    %c1536 = arith.constant 1536 : index
    %14 = vector.load %arg3[%c0_6, %c1536] : memref<1x7168xf32, #tpu.memory_space<vmem>>, vector<1x512xf32>
    %c0_7 = arith.constant 0 : index
    %c2048 = arith.constant 2048 : index
    %15 = vector.load %arg3[%c0_7, %c2048] : memref<1x7168xf32, #tpu.memory_space<vmem>>, vector<1x512xf32>
    %c0_8 = arith.constant 0 : index
    %c2560 = arith.constant 2560 : index
    %16 = vector.load %arg3[%c0_8, %c2560] : memref<1x7168xf32, #tpu.memory_space<vmem>>, vector<1x1024xf32>
    %c0_9 = arith.constant 0 : index
    %c3584 = arith.constant 3584 : index
    %17 = vector.load %arg3[%c0_9, %c3584] : memref<1x7168xf32, #tpu.memory_space<vmem>>, vector<1x1024xf32>
    %c0_10 = arith.constant 0 : index
    %c4608 = arith.constant 4608 : index
    %18 = vector.load %arg3[%c0_10, %c4608] : memref<1x7168xf32, #tpu.memory_space<vmem>>, vector<1x1024xf32>
    %c0_11 = arith.constant 0 : index
    %c5632 = arith.constant 5632 : index
    %19 = vector.load %arg3[%c0_11, %c5632] : memref<1x7168xf32, #tpu.memory_space<vmem>>, vector<1x256xf32>
    %c0_12 = arith.constant 0 : index
    %c5888 = arith.constant 5888 : index
    %20 = vector.load %arg3[%c0_12, %c5888] : memref<1x7168xf32, #tpu.memory_space<vmem>>, vector<1x1024xf32>
    %c0_13 = arith.constant 0 : index
    %c6912 = arith.constant 6912 : index
    %21 = vector.load %arg3[%c0_13, %c6912] : memref<1x7168xf32, #tpu.memory_space<vmem>>, vector<1x256xf32>
    %c0_14 = arith.constant 0 : index
    %c0_15 = arith.constant 0 : index
    %c0_16 = arith.constant 0 : index
    %22 = vector.load %arg0[%c0_14, %c0_15, %c0_16] : memref<2x256x64xf32, #tpu.memory_space<vmem>>, vector<2x256x64xf32>
    %cst = arith.constant dense<0.000000e+00> : vector<2x256xf32>
    %23 = vector.multi_reduction <add>, %22, %cst [2] : vector<2x256x64xf32> to vector<2x256xf32>
    %cst_17 = arith.constant 6.400000e+01 : f32
    %24 = vector.broadcast %cst_17 : f32 to vector<2x256xf32>
    %25 = arith.divf %23, %24 : vector<2x256xf32>
    %26 = arith.truncf %25 : vector<2x256xf32> to vector<2x256xbf16>
    %cst_18 = arith.constant dense<0xFF800000> : vector<2x256xf32>
    %27 = vector.multi_reduction <maximumf>, %22, %cst_18 [2] : vector<2x256x64xf32> to vector<2x256xf32>
    %28 = arith.truncf %27 : vector<2x256xf32> to vector<2x256xbf16>
    %c0_19 = arith.constant 0 : index
    %c0_20 = arith.constant 0 : index
    %29 = vector.load %arg2[%c0_19, %c0_20] : memref<672x128xbf16, #tpu.memory_space<vmem>>, vector<256x128xbf16>
    %cst_21 = arith.constant dense<0.000000e+00> : vector<2x128xf32>
    %30 = tpu.matmul %26, %29, %cst_21 {dimension_numbers = #tpu.dot_dimension_numbers<[1], [0], [0], [1], [0, 0, 1, 1], [], []>} : vector<2x256xbf16>, vector<256x128xbf16>, vector<2x128xf32> -> vector<2x128xf32>
    %c256_22 = arith.constant 256 : index
    %c0_23 = arith.constant 0 : index
    %31 = vector.load %arg2[%c256_22, %c0_23] : memref<672x128xbf16, #tpu.memory_space<vmem>>, vector<256x128xbf16>
    %cst_24 = arith.constant dense<0.000000e+00> : vector<2x128xf32>
    %32 = tpu.matmul %28, %31, %cst_24 {dimension_numbers = #tpu.dot_dimension_numbers<[1], [0], [0], [1], [0, 0, 1, 1], [], []>} : vector<2x256xbf16>, vector<256x128xbf16>, vector<2x128xf32> -> vector<2x128xf32>
    %33 = arith.addf %30, %32 : vector<2x128xf32>
    %34 = vector.broadcast %8 : vector<1x128xf32> to vector<2x128xf32>
    %35 = arith.addf %33, %34 : vector<2x128xf32>
    %36 = arith.truncf %35 : vector<2x128xf32> to vector<2x128xbf16>
    %c512_25 = arith.constant 512 : index
    %c0_26 = arith.constant 0 : index
    %37 = vector.load %arg2[%c512_25, %c0_26] : memref<672x128xbf16, #tpu.memory_space<vmem>>, vector<128x128xbf16>
    %cst_27 = arith.constant dense<0.000000e+00> : vector<2x128xf32>
    %38 = tpu.matmul %36, %37, %cst_27 {dimension_numbers = #tpu.dot_dimension_numbers<[1], [0], [0], [1], [0, 0, 1, 1], [], []>} : vector<2x128xbf16>, vector<128x128xbf16>, vector<2x128xf32> -> vector<2x128xf32>
    %c0_28 = arith.constant 0 : index
    %c0_29 = arith.constant 0 : index
    %39 = vector.load %arg1[%c0_28, %c0_29] : memref<2x32xf32, #tpu.memory_space<vmem>>, vector<2x32xf32>
    %40 = arith.truncf %39 : vector<2x32xf32> to vector<2x32xbf16>
    %c640 = arith.constant 640 : index
    %c0_30 = arith.constant 0 : index
    %41 = vector.load %arg2[%c640, %c0_30] : memref<672x128xbf16, #tpu.memory_space<vmem>>, vector<32x128xbf16>
    %cst_31 = arith.constant dense<0.000000e+00> : vector<2x128xf32>
    %42 = tpu.matmul %40, %41, %cst_31 {dimension_numbers = #tpu.dot_dimension_numbers<[1], [0], [0], [1], [0, 0, 1, 1], [], []>} : vector<2x32xbf16>, vector<32x128xbf16>, vector<2x128xf32> -> vector<2x128xf32>
    %43 = arith.addf %38, %42 : vector<2x128xf32>
    %44 = vector.broadcast %9 : vector<1x128xf32> to vector<2x128xf32>
    %45 = arith.addf %43, %44 : vector<2x128xf32>
    %cst_32 = arith.constant 2.000000e-01 : f32
    %46 = vector.broadcast %cst_32 : f32 to vector<2x128xf32>
    %47 = arith.mulf %46, %45 : vector<2x128xf32>
    %48 = arith.maximumf %45, %47 : vector<2x128xf32>
    %c0_i32_33 = arith.constant 0 : i32
    %49 = tpu.memref_slice %arg13[%c0_i32_33] : memref<4x!tpu.dma_semaphore, #tpu.memory_space<semaphore_mem>> -> memref<1x!tpu.dma_semaphore, #tpu.memory_space<semaphore_mem>>
    %50 = tpu.memref_squeeze %49 : memref<1x!tpu.dma_semaphore, #tpu.memory_space<semaphore_mem>> -> memref<!tpu.dma_semaphore, #tpu.memory_space<semaphore_mem>>
    tpu.wait_dma2 semaphore(%50 : memref<!tpu.dma_semaphore, #tpu.memory_space<semaphore_mem>>) src(%arg4 : memref<128x256xbf16, #tpu.memory_space<any>>) dst(%arg9 : memref<128x256xbf16, #tpu.memory_space<vmem>>)
    %51 = arith.truncf %48 : vector<2x128xf32> to vector<2x128xbf16>
    %c0_34 = arith.constant 0 : index
    %c0_35 = arith.constant 0 : index
    %52 = vector.load %arg9[%c0_34, %c0_35] : memref<128x256xbf16, #tpu.memory_space<vmem>>, vector<128x256xbf16>
    %cst_36 = arith.constant dense<0.000000e+00> : vector<2x256xf32>
    %53 = tpu.matmul %51, %52, %cst_36 {dimension_numbers = #tpu.dot_dimension_numbers<[1], [0], [0], [1], [0, 0, 1, 1], [], []>} : vector<2x128xbf16>, vector<128x256xbf16>, vector<2x256xf32> -> vector<2x256xf32>
    %54 = vector.broadcast %10 : vector<1x256xf32> to vector<2x256xf32>
    %55 = arith.addf %53, %54 : vector<2x256xf32>
    %cst_37 = arith.constant dense<0.000000e+00> : vector<256xf32>
    %56 = vector.multi_reduction <add>, %55, %cst_37 [0] : vector<2x256xf32> to vector<256xf32>
    %57 = vector.shape_cast %56 : vector<256xf32> to vector<1x256xf32>
    %cst_38 = arith.constant 2.000000e+00 : f32
    %58 = vector.broadcast %cst_38 : f32 to vector<1x256xf32>
    %59 = arith.divf %57, %58 : vector<1x256xf32>
    %60 = vector.broadcast %59 : vector<1x256xf32> to vector<2x256xf32>
    %61 = arith.subf %55, %60 : vector<2x256xf32>
    %62 = arith.mulf %61, %61 : vector<2x256xf32>
    %cst_39 = arith.constant dense<0.000000e+00> : vector<256xf32>
    %63 = vector.multi_reduction <add>, %62, %cst_39 [0] : vector<2x256xf32> to vector<256xf32>
    %64 = vector.shape_cast %63 : vector<256xf32> to vector<1x256xf32>
    %cst_40 = arith.constant 2.000000e+00 : f32
    %65 = vector.broadcast %cst_40 : f32 to vector<1x256xf32>
    %66 = arith.divf %64, %65 : vector<1x256xf32>
    %67 = vector.broadcast %59 : vector<1x256xf32> to vector<2x256xf32>
    %68 = arith.subf %55, %67 : vector<2x256xf32>
    %cst_41 = arith.constant 8.000000e-01 : f32
    %69 = vector.broadcast %cst_41 : f32 to vector<1x256xf32>
    %70 = arith.addf %66, %69 : vector<1x256xf32>
    %71 = math.rsqrt %70 : vector<1x256xf32>
    %72 = vector.broadcast %71 : vector<1x256xf32> to vector<2x256xf32>
    %73 = arith.mulf %68, %72 : vector<2x256xf32>
    %74 = vector.broadcast %11 : vector<1x256xf32> to vector<2x256xf32>
    %75 = arith.mulf %73, %74 : vector<2x256xf32>
    %76 = vector.broadcast %12 : vector<1x256xf32> to vector<2x256xf32>
    %77 = arith.addf %75, %76 : vector<2x256xf32>
    %cst_42 = arith.constant 2.000000e-01 : f32
    %78 = vector.broadcast %cst_42 : f32 to vector<2x256xf32>
    %79 = arith.mulf %78, %77 : vector<2x256xf32>
    %80 = arith.maximumf %77, %79 : vector<2x256xf32>
    %c1_i32_43 = arith.constant 1 : i32
    %81 = tpu.memref_slice %arg13[%c1_i32_43] : memref<4x!tpu.dma_semaphore, #tpu.memory_space<semaphore_mem>> -> memref<1x!tpu.dma_semaphore, #tpu.memory_space<semaphore_mem>>
    %82 = tpu.memref_squeeze %81 : memref<1x!tpu.dma_semaphore, #tpu.memory_space<semaphore_mem>> -> memref<!tpu.dma_semaphore, #tpu.memory_space<semaphore_mem>>
    tpu.wait_dma2 semaphore(%82 : memref<!tpu.dma_semaphore, #tpu.memory_space<semaphore_mem>>) src(%arg5 : memref<256x512xbf16, #tpu.memory_space<any>>) dst(%arg10 : memref<256x512xbf16, #tpu.memory_space<vmem>>)
    %83 = arith.truncf %80 : vector<2x256xf32> to vector<2x256xbf16>
    %c0_44 = arith.constant 0 : index
    %c0_45 = arith.constant 0 : index
    %84 = vector.load %arg10[%c0_44, %c0_45] : memref<256x512xbf16, #tpu.memory_space<vmem>>, vector<256x512xbf16>
    %cst_46 = arith.constant dense<0.000000e+00> : vector<2x512xf32>
    %85 = tpu.matmul %83, %84, %cst_46 {dimension_numbers = #tpu.dot_dimension_numbers<[1], [0], [0], [1], [0, 0, 1, 1], [], []>} : vector<2x256xbf16>, vector<256x512xbf16>, vector<2x512xf32> -> vector<2x512xf32>
    %86 = vector.broadcast %13 : vector<1x512xf32> to vector<2x512xf32>
    %87 = arith.addf %85, %86 : vector<2x512xf32>
    %cst_47 = arith.constant dense<0.000000e+00> : vector<512xf32>
    %88 = vector.multi_reduction <add>, %87, %cst_47 [0] : vector<2x512xf32> to vector<512xf32>
    %89 = vector.shape_cast %88 : vector<512xf32> to vector<1x512xf32>
    %cst_48 = arith.constant 2.000000e+00 : f32
    %90 = vector.broadcast %cst_48 : f32 to vector<1x512xf32>
    %91 = arith.divf %89, %90 : vector<1x512xf32>
    %92 = vector.broadcast %91 : vector<1x512xf32> to vector<2x512xf32>
    %93 = arith.subf %87, %92 : vector<2x512xf32>
    %94 = arith.mulf %93, %93 : vector<2x512xf32>
    %cst_49 = arith.constant dense<0.000000e+00> : vector<512xf32>
    %95 = vector.multi_reduction <add>, %94, %cst_49 [0] : vector<2x512xf32> to vector<512xf32>
    %96 = vector.shape_cast %95 : vector<512xf32> to vector<1x512xf32>
    %cst_50 = arith.constant 2.000000e+00 : f32
    %97 = vector.broadcast %cst_50 : f32 to vector<1x512xf32>
    %98 = arith.divf %96, %97 : vector<1x512xf32>
    %99 = vector.broadcast %91 : vector<1x512xf32> to vector<2x512xf32>
    %100 = arith.subf %87, %99 : vector<2x512xf32>
    %cst_51 = arith.constant 8.000000e-01 : f32
    %101 = vector.broadcast %cst_51 : f32 to vector<1x512xf32>
    %102 = arith.addf %98, %101 : vector<1x512xf32>
    %103 = math.rsqrt %102 : vector<1x512xf32>
    %104 = vector.broadcast %103 : vector<1x512xf32> to vector<2x512xf32>
    %105 = arith.mulf %100, %104 : vector<2x512xf32>
    %106 = vector.broadcast %14 : vector<1x512xf32> to vector<2x512xf32>
    %107 = arith.mulf %105, %106 : vector<2x512xf32>
    %108 = vector.broadcast %15 : vector<1x512xf32> to vector<2x512xf32>
    %109 = arith.addf %107, %108 : vector<2x512xf32>
    %cst_52 = arith.constant 2.000000e-01 : f32
    %110 = vector.broadcast %cst_52 : f32 to vector<2x512xf32>
    %111 = arith.mulf %110, %109 : vector<2x512xf32>
    %112 = arith.maximumf %109, %111 : vector<2x512xf32>
    %c2_i32_53 = arith.constant 2 : i32
    %113 = tpu.memref_slice %arg13[%c2_i32_53] : memref<4x!tpu.dma_semaphore, #tpu.memory_space<semaphore_mem>> -> memref<1x!tpu.dma_semaphore, #tpu.memory_space<semaphore_mem>>
    %114 = tpu.memref_squeeze %113 : memref<1x!tpu.dma_semaphore, #tpu.memory_space<semaphore_mem>> -> memref<!tpu.dma_semaphore, #tpu.memory_space<semaphore_mem>>
    tpu.wait_dma2 semaphore(%114 : memref<!tpu.dma_semaphore, #tpu.memory_space<semaphore_mem>>) src(%arg6 : memref<512x1024xi8, #tpu.memory_space<any>>) dst(%arg11 : memref<512x1024xi8, #tpu.memory_space<vmem>>)
    %115 = arith.truncf %112 : vector<2x512xf32> to vector<2x512xbf16>
    %c0_54 = arith.constant 0 : index
    %c0_55 = arith.constant 0 : index
    %116 = vector.load %arg11[%c0_54, %c0_55] : memref<512x1024xi8, #tpu.memory_space<vmem>>, vector<512x1024xi8>
    %117 = arith.sitofp %116 : vector<512x1024xi8> to vector<512x1024xbf16>
    %cst_56 = arith.constant dense<0.000000e+00> : vector<2x1024xf32>
    %118 = tpu.matmul %115, %117, %cst_56 {dimension_numbers = #tpu.dot_dimension_numbers<[1], [0], [0], [1], [0, 0, 1, 1], [], []>} : vector<2x512xbf16>, vector<512x1024xbf16>, vector<2x1024xf32> -> vector<2x1024xf32>
    %119 = vector.broadcast %20 : vector<1x1024xf32> to vector<2x1024xf32>
    %120 = arith.mulf %118, %119 : vector<2x1024xf32>
    %121 = vector.broadcast %16 : vector<1x1024xf32> to vector<2x1024xf32>
    %122 = arith.addf %120, %121 : vector<2x1024xf32>
    %cst_57 = arith.constant dense<0.000000e+00> : vector<1024xf32>
    %123 = vector.multi_reduction <add>, %122, %cst_57 [0] : vector<2x1024xf32> to vector<1024xf32>
    %124 = vector.shape_cast %123 : vector<1024xf32> to vector<1x1024xf32>
    %cst_58 = arith.constant 2.000000e+00 : f32
    %125 = vector.broadcast %cst_58 : f32 to vector<1x1024xf32>
    %126 = arith.divf %124, %125 : vector<1x1024xf32>
    %127 = vector.broadcast %126 : vector<1x1024xf32> to vector<2x1024xf32>
    %128 = arith.subf %122, %127 : vector<2x1024xf32>
    %129 = arith.mulf %128, %128 : vector<2x1024xf32>
    %cst_59 = arith.constant dense<0.000000e+00> : vector<1024xf32>
    %130 = vector.multi_reduction <add>, %129, %cst_59 [0] : vector<2x1024xf32> to vector<1024xf32>
    %131 = vector.shape_cast %130 : vector<1024xf32> to vector<1x1024xf32>
    %cst_60 = arith.constant 2.000000e+00 : f32
    %132 = vector.broadcast %cst_60 : f32 to vector<1x1024xf32>
    %133 = arith.divf %131, %132 : vector<1x1024xf32>
    %134 = vector.broadcast %126 : vector<1x1024xf32> to vector<2x1024xf32>
    %135 = arith.subf %122, %134 : vector<2x1024xf32>
    %cst_61 = arith.constant 8.000000e-01 : f32
    %136 = vector.broadcast %cst_61 : f32 to vector<1x1024xf32>
    %137 = arith.addf %133, %136 : vector<1x1024xf32>
    %138 = math.rsqrt %137 : vector<1x1024xf32>
    %139 = vector.broadcast %138 : vector<1x1024xf32> to vector<2x1024xf32>
    %140 = arith.mulf %135, %139 : vector<2x1024xf32>
    %141 = vector.broadcast %17 : vector<1x1024xf32> to vector<2x1024xf32>
    %142 = arith.mulf %140, %141 : vector<2x1024xf32>
    %143 = vector.broadcast %18 : vector<1x1024xf32> to vector<2x1024xf32>
    %144 = arith.addf %142, %143 : vector<2x1024xf32>
    %cst_62 = arith.constant 2.000000e-01 : f32
    %145 = vector.broadcast %cst_62 : f32 to vector<2x1024xf32>
    %146 = arith.mulf %145, %144 : vector<2x1024xf32>
    %147 = arith.maximumf %144, %146 : vector<2x1024xf32>
    %c3_i32_63 = arith.constant 3 : i32
    %148 = tpu.memref_slice %arg13[%c3_i32_63] : memref<4x!tpu.dma_semaphore, #tpu.memory_space<semaphore_mem>> -> memref<1x!tpu.dma_semaphore, #tpu.memory_space<semaphore_mem>>
    %149 = tpu.memref_squeeze %148 : memref<1x!tpu.dma_semaphore, #tpu.memory_space<semaphore_mem>> -> memref<!tpu.dma_semaphore, #tpu.memory_space<semaphore_mem>>
    tpu.wait_dma2 semaphore(%149 : memref<!tpu.dma_semaphore, #tpu.memory_space<semaphore_mem>>) src(%arg7 : memref<1024x256xi8, #tpu.memory_space<any>>) dst(%arg12 : memref<1024x256xi8, #tpu.memory_space<vmem>>)
    %150 = arith.truncf %147 : vector<2x1024xf32> to vector<2x1024xbf16>
    %c0_64 = arith.constant 0 : index
    %c0_65 = arith.constant 0 : index
    %151 = vector.load %arg12[%c0_64, %c0_65] : memref<1024x256xi8, #tpu.memory_space<vmem>>, vector<1024x256xi8>
    %152 = arith.sitofp %151 : vector<1024x256xi8> to vector<1024x256xbf16>
    %cst_66 = arith.constant dense<0.000000e+00> : vector<2x256xf32>
    %153 = tpu.matmul %150, %152, %cst_66 {dimension_numbers = #tpu.dot_dimension_numbers<[1], [0], [0], [1], [0, 0, 1, 1], [], []>} : vector<2x1024xbf16>, vector<1024x256xbf16>, vector<2x256xf32> -> vector<2x256xf32>
    %154 = vector.broadcast %21 : vector<1x256xf32> to vector<2x256xf32>
    %155 = arith.mulf %153, %154 : vector<2x256xf32>
    %156 = vector.broadcast %19 : vector<1x256xf32> to vector<2x256xf32>
    %157 = arith.addf %155, %156 : vector<2x256xf32>
    %158 = math.tanh %157 : vector<2x256xf32>
    %c0_67 = arith.constant 0 : index
    %c0_68 = arith.constant 0 : index
    %159 = vector.load %arg8[%c0_67, %c0_68] : memref<2x256xf32, #tpu.memory_space<vmem>>, vector<2x256xf32>
    tpu.vector_store %arg8[%c0_67, %c0_68], %158 {strides = array<i32>} : memref<2x256xf32, #tpu.memory_space<vmem>>, vector<2x256xf32>,
    return
  }
}

</mosaic_0001>

<llo_original>
// kernel: generator_forward.1
$region0: #{generator_forward.1}
  #allocation0 [shape = 'u32[]', space=smem, size = 0x4, offset = 0x4, fixed_abs, tag = 'smem constant byte address 0x4 - core index']
  #allocation1 [shape = 'u32[144,128]{1,0:T(1,128)}', space=vmem, size = 0x12000, scoped, tag = 'internal scratch']
  #allocation2 [shape = 'bf16[128,256]{1,0:T(8,128)(2,1)}', space=vmem, size = 0x10000, scoped, tag = 'scratch operand']
  #allocation3 [shape = 'bf16[256,512]{1,0:T(8,128)(2,1)}', space=vmem, size = 0x40000, scoped, tag = 'scratch operand']
  #allocation4 [shape = 's8[512,1024]{1,0:T(32,128)(4,1)}', space=vmem, size = 0x80000, scoped, tag = 'scratch operand']
  #allocation5 [shape = 's8[1024,256]{1,0:T(32,128)(4,1)}', space=vmem, size = 0x40000, scoped, tag = 'scratch operand']
  #allocation6 [shape = 's32[4]{0}', space=sflag, size = 0x10, scoped, tag = 'scratch operand']
  #allocation9 [shape = 's32[]', space=sflag, size = 0x4, offset = 0, fixed_abs, tag = 'sflag constant byte address 0x0 - dummy sync flag']
  #allocation10 [shape = 's32[]', space=sflag, size = 0x4, offset = 0, fixed_abs, tag = 'sflag constant byte address 0x0 - dummy sync flag']
  #allocation11 [shape = 's32[]', space=sflag, size = 0x4, offset = 0, fixed_abs, tag = 'sflag constant byte address 0x0 - dummy sync flag']
  #allocation12 [shape = 's32[]', space=sflag, size = 0x4, offset = 0, fixed_abs, tag = 'sflag constant byte address 0x0 - dummy sync flag']
  #allocation13 [shape = 'u32[]', space=smem, size = 0x4, offset = 0x44, fixed_abs, tag = 'smem constant byte address 0x44 - assertion arg 0']
  #allocation14 [shape = 'u32[]', space=smem, size = 0x4, offset = 0x48, fixed_abs, tag = 'smem constant byte address 0x48 - assertion arg 1']
  #allocation15 [shape = 's32[]', space=sflag, size = 0x4, offset = 0, fixed_abs, tag = 'sflag constant byte address 0x0 - dummy sync flag']
  #allocation16 [shape = 's32[]', space=sflag, size = 0x4, offset = 0, fixed_abs, tag = 'sflag constant byte address 0x0 - dummy sync flag']
  %s0 = inlined_call_operand.vmem [shape: f32[2,256,64], index: 0, kind: input, shape index: {}]
  %s1 = inlined_call_operand.vmem [shape: f32[2,32], index: 1, kind: input, shape index: {}]
  %s2 = inlined_call_operand.hbm [shape: bf16[672,128], index: 2, kind: input, shape index: {}]
  %s3 = inlined_call_operand.vmem [shape: f32[1,7168], index: 3, kind: input, shape index: {}]
  %s4 = inlined_call_operand.vmem [shape: bf16[128,256], index: 4, kind: input, shape index: {}]
  %s5 = inlined_call_operand.vmem [shape: bf16[256,512], index: 5, kind: input, shape index: {}]
  %s6 = inlined_call_operand.hbm [shape: s8[512,1024], index: 6, kind: input, shape index: {}]
  %s7 = inlined_call_operand.hbm [shape: s8[1024,256], index: 7, kind: input, shape index: {}]
  %s8 = inlined_call_operand.vmem [shape: f32[2,256], index: 8, kind: output, shape index: {}]
  %s9 = sld [smem:[#allocation0]]
  $region106: #{generator_forward.1} parent=0
    _
  %s11 = ssub.s32 1, %s9
  %s12 = scalar_select 0, %s11, %s9
  $region1: #{generator_forward.1} parent=0
    #allocation7 [shape = 'u8[172032]{0}', space=vmem, size = 0x2a000, scoped, tag = 'input window, operand 2, single buffered']
    #allocation8 [shape = 's32[1]{0}', space=sflag, size = 0x4, scoped, tag = 'scoped memory for generator_forward.1']
    %13 = vsyncpa [#allocation8], 0
    // Predicated region
    $region2: #{generator_forward.1} parent=1 // pred_check
      _
    $region3: #{generator_forward.1} parent=1 // pred_check_branch
      %15 = sbr.rel (0) target = $region5
    $region4: #{generator_forward.1} parent=1 // pred_region
      _
    $region5: #{generator_forward.1} parent=1 // pred_fallthru
      _
    // Predicated region
    $region6: #{generator_forward.1} parent=1 // pred_check
      _
    $region7: #{generator_forward.1} parent=1 // pred_check_branch
      %17 = sbr.rel (0) target = $region9
    $region8: #{generator_forward.1} parent=1 // pred_region
      _
    $region9: #{generator_forward.1} parent=1 // pred_fallthru
      _
    // Predicated region
    $region10: #{generator_forward.1} parent=1 // pred_check
      _
    $region11: #{generator_forward.1} parent=1 // pred_check_branch
      %19 = sbr.rel (0) target = $region13
    $region12: #{generator_forward.1} parent=1 // pred_region
      %s21 = ssub.s32 5376, 5376
      %22 = vsyncadd [#allocation8], %s21
      %s23 = sshll.u32 [#allocation7], 4
      %s24 = int_to_ptr.vmem [resolvable:$true] %s23
      %29 = dma.hbm_to_vmem [thread:$0]  %s2, 5376, %s24, [#allocation8], 64, 64, 4
    $region13: #{generator_forward.1} parent=1 // pred_fallthru
      _
    // Predicated region
    $region14: #{generator_forward.1} parent=1 // pred_check
      _
    $region15: #{generator_forward.1} parent=1 // pred_check_branch
      %31 = sbr.rel (0) target = $region17
    $region16: #{generator_forward.1} parent=1 // pred_region
      _
    $region17: #{generator_forward.1} parent=1 // pred_fallthru
      _
    // Predicated region
    $region18: #{generator_forward.1} parent=1 // pred_check
      _
    $region19: #{generator_forward.1} parent=1 // pred_check_branch
      %33 = sbr.rel (0) target = $region21
    $region20: #{generator_forward.1} parent=1 // pred_region
      %34 = dma.done [#allocation8], 5376
    $region21: #{generator_forward.1} parent=1 // pred_fallthru
      _
    %p37 = scmp.lt.u32.totalorder 128, 8
    %p38 = pneg %p37
    // Predicated region
    $region22: #{generator_forward.1} parent=1 // pred_check
      _
    $region23: #{generator_forward.1} parent=1 // pred_check_branch
      %40 = sbr.rel (%p37) target = $region25
    $region24: #{generator_forward.1} parent=1 // pred_region
      %s56 = sand.u32 128, 7
      %p57 = scmp.eq.s32.totalorder %s56, 0
      // Predicated region
      $region37: #{generator_forward.1} parent=24 // pred_check
        %p58 = pneg %p57
      $region38: #{generator_forward.1} parent=24 // pred_check_branch
        %60 = sbr.rel (%p58) target = $region40
      $region39: #{generator_forward.1} parent=24 // pred_region
        loop: start=0, step=1, limit=1
        $region41: #{generator_forward.1} parent=39 // loop_pre_header
          _
        $region42: #{generator_forward.1} parent=39 // loop_header
          %s62 = sphi 0, %s66
          %p63 = scmp.ge.s32.totalorder %s62, 1
          %s67 = sphi %s4, %s4
          %s68 = sphi [#allocation2], [#allocation2]
        $region43: #{generator_forward.1} parent=39 // loop_header_branch
          %65 = sbr.rel (%p63) target = $region47
        $region44: #{generator_forward.1} parent=39 // loop_body
          %v69 = vld [vmem:[%s67] sm:$0xff]
          %70 = vst [vmem:[%s68] sm:$0xff] %v69
          %v71 = vld [vmem:[%s67 + $0x8] sm:$0xff]
          %72 = vst [vmem:[%s68 + $0x8] sm:$0xff] %v71
          %v73 = vld [vmem:[%s67 + $0x10] sm:$0xff]
          %74 = vst [vmem:[%s68 + $0x10] sm:$0xff] %v73
          %v75 = vld [vmem:[%s67 + $0x18] sm:$0xff]
          %76 = vst [vmem:[%s68 + $0x18] sm:$0xff] %v75
          %v77 = vld [vmem:[%s67 + $0x20] sm:$0xff]
          %78 = vst [vmem:[%s68 + $0x20] sm:$0xff] %v77
          %v79 = vld [vmem:[%s67 + $0x28] sm:$0xff]
          %80 = vst [vmem:[%s68 + $0x28] sm:$0xff] %v79
          %v81 = vld [vmem:[%s67 + $0x30] sm:$0xff]
          %82 = vst [vmem:[%s68 + $0x30] sm:$0xff] %v81
          %v83 = vld [vmem:[%s67 + $0x38] sm:$0xff]
          %84 = vst [vmem:[%s68 + $0x38] sm:$0xff] %v83
          %v85 = vld [vmem:[%s67 + $0x40] sm:$0xff]
          %86 = vst [vmem:[%s68 + $0x40] sm:$0xff] %v85
          %v87 = vld [vmem:[%s67 + $0x48] sm:$0xff]
          %88 = vst [vmem:[%s68 + $0x48] sm:$0xff] %v87
          %v89 = vld [vmem:[%s67 + $0x50] sm:$0xff]
          %90 = vst [vmem:[%s68 + $0x50] sm:$0xff] %v89
          %v91 = vld [vmem:[%s67 + $0x58] sm:$0xff]
          %92 = vst [vmem:[%s68 + $0x58] sm:$0xff] %v91
          %v93 = vld [vmem:[%s67 + $0x60] sm:$0xff]
          %94 = vst [vmem:[%s68 + $0x60] sm:$0xff] %v93
          %v95 = vld [vmem:[%s67 + $0x68] sm:$0xff]
          %96 = vst [vmem:[%s68 + $0x68] sm:$0xff] %v95
          %v97 = vld [vmem:[%s67 + $0x70] sm:$0xff]
          %98 = vst [vmem:[%s68 + $0x70] sm:$0xff] %v97
          %v99 = vld [vmem:[%s67 + $0x78] sm:$0xff]
          %100 = vst [vmem:[%s68 + $0x78] sm:$0xff] %v99
        $region45: #{generator_forward.1} parent=39 // loop_footer
          %s66 = sadd.s32 1, %s62
        $region46: #{generator_forward.1} parent=39 // loop_footer_branch
          %61 = sbr.rel target = $region42
        $region47: #{generator_forward.1} parent=39 // loop_exit
          _
      $region40: #{generator_forward.1} parent=24 // pred_fallthru
        _
      %p101 = pneg %p57
      // Predicated region
      $region48: #{generator_forward.1} parent=24 // pred_check
        _
      $region49: #{generator_forward.1} parent=24 // pred_check_branch
        %103 = sbr.rel (%p57) target = $region51
      $region50: #{generator_forward.1} parent=24 // pred_region
        %s104 = sand.u32 128, 7
      $region51: #{generator_forward.1} parent=24 // pred_fallthru
        _
    $region25: #{generator_forward.1} parent=1 // pred_fallthru
      _
    // Predicated region
    $region26: #{generator_forward.1} parent=1 // pred_check
      %p41 = pneg %p37
    $region27: #{generator_forward.1} parent=1 // pred_check_branch
      %43 = sbr.rel (%p41) target = $region29
    $region28: #{generator_forward.1} parent=1 // pred_region
      %s44 = sshll.u32 1, 128
      %s45 = ssub.s32 %s44, 1
      loop: start=0, step=1, limit=1
      $region30: #{generator_forward.1} parent=28 // loop_pre_header
        _
      $region31: #{generator_forward.1} parent=28 // loop_header
        %s47 = sphi 0, %s51
        %p48 = scmp.ge.s32.totalorder %s47, 1
        %s52 = sphi %s4, %s4
        %s53 = sphi [#allocation2], [#allocation2]
      $region32: #{generator_forward.1} parent=28 // loop_header_branch
        %50 = sbr.rel (%p48) target = $region36
      $region33: #{generator_forward.1} parent=28 // loop_body
        %v54 = vld [vmem:[%s52] sm:%s45]
        %55 = vst [vmem:[%s53] sm:%s45] %v54
      $region34: #{generator_forward.1} parent=28 // loop_footer
        %s51 = sadd.s32 1, %s47
      $region35: #{generator_forward.1} parent=28 // loop_footer_branch
        %46 = sbr.rel target = $region31
      $region36: #{generator_forward.1} parent=28 // loop_exit
        _
    $region29: #{generator_forward.1} parent=1 // pred_fallthru
      _
    // Predicated region
    $region52: #{generator_forward.1} parent=1 // pred_check
      _
    $region53: #{generator_forward.1} parent=1 // pred_check_branch
      %107 = sbr.rel (0) target = $region55
    $region54: #{generator_forward.1} parent=1 // pred_region
      %108 = vsyncadd [#allocation6], 2048
    $region55: #{generator_forward.1} parent=1 // pred_fallthru
      _
    %s109 = scalar_lea.sflag [#allocation6], 1
    %p111 = scmp.lt.u32.totalorder 512, 8
    %p112 = pneg %p111
    // Predicated region
    $region56: #{generator_forward.1} parent=1 // pred_check
      _
    $region57: #{generator_forward.1} parent=1 // pred_check_branch
      %114 = sbr.rel (%p111) target = $region59
    $region58: #{generator_forward.1} parent=1 // pred_region
      %s130 = sand.u32 512, 7
      %p131 = scmp.eq.s32.totalorder %s130, 0
      // Predicated region
      $region71: #{generator_forward.1} parent=58 // pred_check
        %p132 = pneg %p131
      $region72: #{generator_forward.1} parent=58 // pred_check_branch
        %134 = sbr.rel (%p132) target = $region74
      $region73: #{generator_forward.1} parent=58 // pred_region
        loop: start=0, step=1, limit=1
        $region75: #{generator_forward.1} parent=73 // loop_pre_header
          _
        $region76: #{generator_forward.1} parent=73 // loop_header
          %s136 = sphi 0, %s140
          %p137 = scmp.ge.s32.totalorder %s136, 1
          %s141 = sphi %s5, %s5
          %s142 = sphi [#allocation3], [#allocation3]
        $region77: #{generator_forward.1} parent=73 // loop_header_branch
          %139 = sbr.rel (%p137) target = $region81
        $region78: #{generator_forward.1} parent=73 // loop_body
          %v143 = vld [vmem:[%s141] sm:$0xff]
          %144 = vst [vmem:[%s142] sm:$0xff] %v143
          %v145 = vld [vmem:[%s141 + $0x8] sm:$0xff]
          %146 = vst [vmem:[%s142 + $0x8] sm:$0xff] %v145
          %v147 = vld [vmem:[%s141 + $0x10] sm:$0xff]
          %148 = vst [vmem:[%s142 + $0x10] sm:$0xff] %v147
          %v149 = vld [vmem:[%s141 + $0x18] sm:$0xff]
          %150 = vst [vmem:[%s142 + $0x18] sm:$0xff] %v149
          %v151 = vld [vmem:[%s141 + $0x20] sm:$0xff]
          %152 = vst [vmem:[%s142 + $0x20] sm:$0xff] %v151
          %v153 = vld [vmem:[%s141 + $0x28] sm:$0xff]
          %154 = vst [vmem:[%s142 + $0x28] sm:$0xff] %v153
          %v155 = vld [vmem:[%s141 + $0x30] sm:$0xff]
          %156 = vst [vmem:[%s142 + $0x30] sm:$0xff] %v155
          %v157 = vld [vmem:[%s141 + $0x38] sm:$0xff]
          %158 = vst [vmem:[%s142 + $0x38] sm:$0xff] %v157
          %v159 = vld [vmem:[%s141 + $0x40] sm:$0xff]
          %160 = vst [vmem:[%s142 + $0x40] sm:$0xff] %v159
          %v161 = vld [vmem:[%s141 + $0x48] sm:$0xff]
          %162 = vst [vmem:[%s142 + $0x48] sm:$0xff] %v161
          %v163 = vld [vmem:[%s141 + $0x50] sm:$0xff]
          %164 = vst [vmem:[%s142 + $0x50] sm:$0xff] %v163
          %v165 = vld [vmem:[%s141 + $0x58] sm:$0xff]
          %166 = vst [vmem:[%s142 + $0x58] sm:$0xff] %v165
          %v167 = vld [vmem:[%s141 + $0x60] sm:$0xff]
          %168 = vst [vmem:[%s142 + $0x60] sm:$0xff] %v167
          %v169 = vld [vmem:[%s141 + $0x68] sm:$0xff]
          %170 = vst [vmem:[%s142 + $0x68] sm:$0xff] %v169
          %v171 = vld [vmem:[%s141 + $0x70] sm:$0xff]
          %172 = vst [vmem:[%s142 + $0x70] sm:$0xff] %v171
          %v173 = vld [vmem:[%s141 + $0x78] sm:$0xff]
          %174 = vst [vmem:[%s142 + $0x78] sm:$0xff] %v173
          %v175 = vld [vmem:[%s141 + $0x80] sm:$0xff]
          %176 = vst [vmem:[%s142 + $0x80] sm:$0xff] %v175
          %v177 = vld [vmem:[%s141 + $0x88] sm:$0xff]
          %178 = vst [vmem:[%s142 + $0x88] sm:$0xff] %v177
          %v179 = vld [vmem:[%s141 + $0x90] sm:$0xff]
          %180 = vst [vmem:[%s142 + $0x90] sm:$0xff] %v179
          %v181 = vld [vmem:[%s141 + $0x98] sm:$0xff]
          %182 = vst [vmem:[%s142 + $0x98] sm:$0xff] %v181
          %v183 = vld [vmem:[%s141 + $0xa0] sm:$0xff]
          %184 = vst [vmem:[%s142 + $0xa0] sm:$0xff] %v183
          %v185 = vld [vmem:[%s141 + $0xa8] sm:$0xff]
          %186 = vst [vmem:[%s142 + $0xa8] sm:$0xff] %v185
          %v187 = vld [vmem:[%s141 + $0xb0] sm:$0xff]
          %188 = vst [vmem:[%s142 + $0xb0] sm:$0xff] %v187
          %v189 = vld [vmem:[%s141 + $0xb8] sm:$0xff]
          %190 = vst [vmem:[%s142 + $0xb8] sm:$0xff] %v189
          %v191 = vld [vmem:[%s141 + $0xc0] sm:$0xff]
          %192 = vst [vmem:[%s142 + $0xc0] sm:$0xff] %v191
          %v193 = vld [vmem:[%s141 + $0xc8] sm:$0xff]
          %194 = vst [vmem:[%s142 + $0xc8] sm:$0xff] %v193
          %v195 = vld [vmem:[%s141 + $0xd0] sm:$0xff]
          %196 = vst [vmem:[%s142 + $0xd0] sm:$0xff] %v195
          %v197 = vld [vmem:[%s141 + $0xd8] sm:$0xff]
          %198 = vst [vmem:[%s142 + $0xd8] sm:$0xff] %v197
          %v199 = vld [vmem:[%s141 + $0xe0] sm:$0xff]
          %200 = vst [vmem:[%s142 + $0xe0] sm:$0xff] %v199
          %v201 = vld [vmem:[%s141 + $0xe8] sm:$0xff]
          %202 = vst [vmem:[%s142 + $0xe8] sm:$0xff] %v201
          %v203 = vld [vmem:[%s141 + $0xf0] sm:$0xff]
          %204 = vst [vmem:[%s142 + $0xf0] sm:$0xff] %v203
          %v205 = vld [vmem:[%s141 + $0xf8] sm:$0xff]
          %206 = vst [vmem:[%s142 + $0xf8] sm:$0xff] %v205
          %v207 = vld [vmem:[%s141 + $0x100] sm:$0xff]
          %208 = vst [vmem:[%s142 + $0x100] sm:$0xff] %v207
          %v209 = vld [vmem:[%s141 + $0x108] sm:$0xff]
          %210 = vst [vmem:[%s142 + $0x108] sm:$0xff] %v209
          %v211 = vld [vmem:[%s141 + $0x110] sm:$0xff]
          %212 = vst [vmem:[%s142 + $0x110] sm:$0xff] %v211
          %v213 = vld [vmem:[%s141 + $0x118] sm:$0xff]
          %214 = vst [vmem:[%s142 + $0x118] sm:$0xff] %v213
          %v215 = vld [vmem:[%s141 + $0x120] sm:$0xff]
          %216 = vst [vmem:[%s142 + $0x120] sm:$0xff] %v215
          %v217 = vld [vmem:[%s141 + $0x128] sm:$0xff]
          %218 = vst [vmem:[%s142 + $0x128] sm:$0xff] %v217
          %v219 = vld [vmem:[%s141 + $0x130] sm:$0xff]
          %220 = vst [vmem:[%s142 + $0x130] sm:$0xff] %v219
          %v221 = vld [vmem:[%s141 + $0x138] sm:$0xff]
          %222 = vst [vmem:[%s142 + $0x138] sm:$0xff] %v221
          %v223 = vld [vmem:[%s141 + $0x140] sm:$0xff]
          %224 = vst [vmem:[%s142 + $0x140] sm:$0xff] %v223
          %v225 = vld [vmem:[%s141 + $0x148] sm:$0xff]
          %226 = vst [vmem:[%s142 + $0x148] sm:$0xff] %v225
          %v227 = vld [vmem:[%s141 + $0x150] sm:$0xff]
          %228 = vst [vmem:[%s142 + $0x150] sm:$0xff] %v227
          %v229 = vld [vmem:[%s141 + $0x158] sm:$0xff]
          %230 = vst [vmem:[%s142 + $0x158] sm:$0xff] %v229
          %v231 = vld [vmem:[%s141 + $0x160] sm:$0xff]
          %232 = vst [vmem:[%s142 + $0x160] sm:$0xff] %v231
          %v233 = vld [vmem:[%s141 + $0x168] sm:$0xff]
          %234 = vst [vmem:[%s142 + $0x168] sm:$0xff] %v233
          %v235 = vld [vmem:[%s141 + $0x170] sm:$0xff]
          %236 = vst [vmem:[%s142 + $0x170] sm:$0xff] %v235
          %v237 = vld [vmem:[%s141 + $0x178] sm:$0xff]
          %238 = vst [vmem:[%s142 + $0x178] sm:$0xff] %v237
          %v239 = vld [vmem:[%s141 + $0x180] sm:$0xff]
          %240 = vst [vmem:[%s142 + $0x180] sm:$0xff] %v239
          %v241 = vld [vmem:[%s141 + $0x188] sm:$0xff]
          %242 = vst [vmem:[%s142 + $0x188] sm:$0xff] %v241
          %v243 = vld [vmem:[%s141 + $0x190] sm:$0xff]
          %244 = vst [vmem:[%s142 + $0x190] sm:$0xff] %v243
          %v245 = vld [vmem:[%s141 + $0x198] sm:$0xff]
          %246 = vst [vmem:[%s142 + $0x198] sm:$0xff] %v245
          %v247 = vld [vmem:[%s141 + $0x1a0] sm:$0xff]
          %248 = vst [vmem:[%s142 + $0x1a0] sm:$0xff] %v247
          %v249 = vld [vmem:[%s141 + $0x1a8] sm:$0xff]
          %250 = vst [vmem:[%s142 + $0x1a8] sm:$0xff] %v249
          %v251 = vld [vmem:[%s141 + $0x1b0] sm:$0xff]
          %252 = vst [vmem:[%s142 + $0x1b0] sm:$0xff] %v251
          %v253 = vld [vmem:[%s141 + $0x1b8] sm:$0xff]
          %254 = vst [vmem:[%s142 + $0x1b8] sm:$0xff] %v253
          %v255 = vld [vmem:[%s141 + $0x1c0] sm:$0xff]
          %256 = vst [vmem:[%s142 + $0x1c0] sm:$0xff] %v255
          %v257 = vld [vmem:[%s141 + $0x1c8] sm:$0xff]
          %258 = vst [vmem:[%s142 + $0x1c8] sm:$0xff] %v257
          %v259 = vld [vmem:[%s141 + $0x1d0] sm:$0xff]
          %260 = vst [vmem:[%s142 + $0x1d0] sm:$0xff] %v259
          %v261 = vld [vmem:[%s141 + $0x1d8] sm:$0xff]
          %262 = vst [vmem:[%s142 + $0x1d8] sm:$0xff] %v261
          %v263 = vld [vmem:[%s141 + $0x1e0] sm:$0xff]
          %264 = vst [vmem:[%s142 + $0x1e0] sm:$0xff] %v263
          %v265 = vld [vmem:[%s141 + $0x1e8] sm:$0xff]
          %266 = vst [vmem:[%s142 + $0x1e8] sm:$0xff] %v265
          %v267 = vld [vmem:[%s141 + $0x1f0] sm:$0xff]
          %268 = vst [vmem:[%s142 + $0x1f0] sm:$0xff] %v267
          %v269 = vld [vmem:[%s141 + $0x1f8] sm:$0xff]
          %270 = vst [vmem:[%s142 + $0x1f8] sm:$0xff] %v269
        $region79: #{generator_forward.1} parent=73 // loop_footer
          %s140 = sadd.s32 1, %s136
        $region80: #{generator_forward.1} parent=73 // loop_footer_branch
          %135 = sbr.rel target = $region76
        $region81: #{generator_forward.1} parent=73 // loop_exit
          _
      $region74: #{generator_forward.1} parent=58 // pred_fallthru
        _
      %p271 = pneg %p131
      // Predicated region
      $region82: #{generator_forward.1} parent=58 // pred_check
        _
      $region83: #{generator_forward.1} parent=58 // pred_check_branch
        %273 = sbr.rel (%p131) target = $region85
      $region84: #{generator_forward.1} parent=58 // pred_region
        %s274 = sand.u32 512, 7
      $region85: #{generator_forward.1} parent=58 // pred_fallthru
        _
    $region59: #{generator_forward.1} parent=1 // pred_fallthru
      _
    // Predicated region
    $region60: #{generator_forward.1} parent=1 // pred_check
      %p115 = pneg %p111
    $region61: #{generator_forward.1} parent=1 // pred_check_branch
      %117 = sbr.rel (%p115) target = $region63
    $region62: #{generator_forward.1} parent=1 // pred_region
      %s118 = sshll.u32 1, 512
      %s119 = ssub.s32 %s118, 1
      loop: start=0, step=1, limit=1
      $region64: #{generator_forward.1} parent=62 // loop_pre_header
        _
      $region65: #{generator_forward.1} parent=62 // loop_header
        %s121 = sphi 0, %s125
        %p122 = scmp.ge.s32.totalorder %s121, 1
        %s126 = sphi %s5, %s5
        %s127 = sphi [#allocation3], [#allocation3]
      $region66: #{generator_forward.1} parent=62 // loop_header_branch
        %124 = sbr.rel (%p122) target = $region70
      $region67: #{generator_forward.1} parent=62 // loop_body
        %v128 = vld [vmem:[%s126] sm:%s119]
        %129 = vst [vmem:[%s127] sm:%s119] %v128
      $region68: #{generator_forward.1} parent=62 // loop_footer
        %s125 = sadd.s32 1, %s121
      $region69: #{generator_forward.1} parent=62 // loop_footer_branch
        %120 = sbr.rel target = $region65
      $region70: #{generator_forward.1} parent=62 // loop_exit
        _
    $region63: #{generator_forward.1} parent=1 // pred_fallthru
      _
    // Predicated region
    $region86: #{generator_forward.1} parent=1 // pred_check
      _
    $region87: #{generator_forward.1} parent=1 // pred_check_branch
      %277 = sbr.rel (0) target = $region89
    $region88: #{generator_forward.1} parent=1 // pred_region
      %278 = vsyncadd %s109, 8192
    $region89: #{generator_forward.1} parent=1 // pred_fallthru
      _
    %s279 = scalar_lea.sflag [#allocation6], 2
    // Predicated region
    $region90: #{generator_forward.1} parent=1 // pred_check
      _
    $region91: #{generator_forward.1} parent=1 // pred_check_branch
      %281 = sbr.rel target = $region93
    $region92: #{generator_forward.1} parent=1 // pred_region
      %282 = sst [smem:[#allocation13]] [#allocation12]
      %283 = sst [smem:[#allocation14]] [#allocation11]
    $region93: #{generator_forward.1} parent=1 // pred_fallthru
      _
    %285 = shalt.err (0)
    %s287 = sshll.u32 [#allocation4], 4
    %s288 = int_to_ptr.vmem [resolvable:$true] %s287
    %290 = dma.hbm_to_vmem [thread:$0]  %s6, 16384, %s288, %s279
    %s291 = scalar_lea.sflag [#allocation6], 3
    // Predicated region
    $region94: #{generator_forward.1} parent=1 // pred_check
      _
    $region95: #{generator_forward.1} parent=1 // pred_check_branch
      %293 = sbr.rel target = $region97
    $region96: #{generator_forward.1} parent=1 // pred_region
      %294 = sst [smem:[#allocation13]] [#allocation16]
      %295 = sst [smem:[#allocation14]] [#allocation15]
    $region97: #{generator_forward.1} parent=1 // pred_fallthru
      _
    %297 = shalt.err (0)
    %s299 = sshll.u32 [#allocation5], 4
    %s300 = int_to_ptr.vmem [resolvable:$true] %s299
    %302 = dma.hbm_to_vmem [thread:$0]  %s7, 8192, %s300, %s291
    %v303 = vld [vmem:[%s3] sm:$0x1]
    %v304 = vld [vmem:[%s3 + $0x1] sm:$0x1]
    %v305 = vld [vmem:[%s3 + $0x2] sm:$0x3]
    %v306 = vld [vmem:[%s3 + $0x4] sm:$0x3]
    %v307 = vld [vmem:[%s3 + $0x6] sm:$0x3]
    %v308 = vld [vmem:[%s3 + $0x8] sm:$0xf]
    %v309 = vld [vmem:[%s3 + $0xc] sm:$0xf]
    %v310 = vld [vmem:[%s3 + $0x10] sm:$0xf]
    %v311 = vld [vmem:[%s3 + $0x14] sm:$0xff]
    %v312 = vld [vmem:[%s3 + $0x1c] sm:$0xff]
    %v313 = vld [vmem:[%s3 + $0x24] sm:$0xff]
    %v314 = vld [vmem:[%s3 + $0x2c] sm:$0x3]
    %v315 = vld [vmem:[%s3 + $0x2e] sm:$0xff]
    %v316 = vld [vmem:[%s3 + $0x36] sm:$0x3]
    %v317 = vld [vmem:[%s0] sm:$0xff]
    %v318 = vld [vmem:[%s0 + $0x8] sm:$0xff]
    %v319 = vld [vmem:[%s0 + $0x10] sm:$0xff]
    %v320 = vld [vmem:[%s0 + $0x18] sm:$0xff]
    %v321 = vld [vmem:[%s0 + $0x20] sm:$0xff]
    %v322 = vld [vmem:[%s0 + $0x28] sm:$0xff]
    %v323 = vld [vmem:[%s0 + $0x30] sm:$0xff]
    %v324 = vld [vmem:[%s0 + $0x38] sm:$0xff]
    %v325 = vld [vmem:[%s0 + $0x40] sm:$0xff]
    %v326 = vld [vmem:[%s0 + $0x48] sm:$0xff]
    %v327 = vld [vmem:[%s0 + $0x50] sm:$0xff]
    %v328 = vld [vmem:[%s0 + $0x58] sm:$0xff]
    %v329 = vld [vmem:[%s0 + $0x60] sm:$0xff]
    %v330 = vld [vmem:[%s0 + $0x68] sm:$0xff]
    %v331 = vld [vmem:[%s0 + $0x70] sm:$0xff]
    %v332 = vld [vmem:[%s0 + $0x78] sm:$0xff]
    %v333 = vld [vmem:[%s0 + $0x80] sm:$0xff]
    %v334 = vld [vmem:[%s0 + $0x88] sm:$0xff]
    %v335 = vld [vmem:[%s0 + $0x90] sm:$0xff]
    %v336 = vld [vmem:[%s0 + $0x98] sm:$0xff]
    %v337 = vld [vmem:[%s0 + $0xa0] sm:$0xff]
    %v338 = vld [vmem:[%s0 + $0xa8] sm:$0xff]
    %v339 = vld [vmem:[%s0 + $0xb0] sm:$0xff]
    %v340 = vld [vmem:[%s0 + $0xb8] sm:$0xff]
    %v341 = vld [vmem:[%s0 + $0xc0] sm:$0xff]
    %v342 = vld [vmem:[%s0 + $0xc8] sm:$0xff]
    %v343 = vld [vmem:[%s0 + $0xd0] sm:$0xff]
    %v344 = vld [vmem:[%s0 + $0xd8] sm:$0xff]
    %v345 = vld [vmem:[%s0 + $0xe0] sm:$0xff]
    %v346 = vld [vmem:[%s0 + $0xe8] sm:$0xff]
    %v347 = vld [vmem:[%s0 + $0xf0] sm:$0xff]
    %v348 = vld [vmem:[%s0 + $0xf8] sm:$0xff]
    %v349 = vld [vmem:[%s0 + $0x100] sm:$0xff]
    %v350 = vld [vmem:[%s0 + $0x108] sm:$0xff]
    %v351 = vld [vmem:[%s0 + $0x110] sm:$0xff]
    %v352 = vld [vmem:[%s0 + $0x118] sm:$0xff]
    %v353 = vld [vmem:[%s0 + $0x120] sm:$0xff]
    %v354 = vld [vmem:[%s0 + $0x128] sm:$0xff]
    %v355 = vld [vmem:[%s0 + $0x130] sm:$0xff]
    %v356 = vld [vmem:[%s0 + $0x138] sm:$0xff]
    %v357 = vld [vmem:[%s0 + $0x140] sm:$0xff]
    %v358 = vld [vmem:[%s0 + $0x148] sm:$0xff]
    %v359 = vld [vmem:[%s0 + $0x150] sm:$0xff]
    %v360 = vld [vmem:[%s0 + $0x158] sm:$0xff]
    %v361 = vld [vmem:[%s0 + $0x160] sm:$0xff]
    %v362 = vld [vmem:[%s0 + $0x168] sm:$0xff]
    %v363 = vld [vmem:[%s0 + $0x170] sm:$0xff]
    %v364 = vld [vmem:[%s0 + $0x178] sm:$0xff]
    %v365 = vld [vmem:[%s0 + $0x180] sm:$0xff]
    %v366 = vld [vmem:[%s0 + $0x188] sm:$0xff]
    %v367 = vld [vmem:[%s0 + $0x190] sm:$0xff]
    %v368 = vld [vmem:[%s0 + $0x198] sm:$0xff]
    %v369 = vld [vmem:[%s0 + $0x1a0] sm:$0xff]
    %v370 = vld [vmem:[%s0 + $0x1a8] sm:$0xff]
    %v371 = vld [vmem:[%s0 + $0x1b0] sm:$0xff]
    %v372 = vld [vmem:[%s0 + $0x1b8] sm:$0xff]
    %v373 = vld [vmem:[%s0 + $0x1c0] sm:$0xff]
    %v374 = vld [vmem:[%s0 + $0x1c8] sm:$0xff]
    %v375 = vld [vmem:[%s0 + $0x1d0] sm:$0xff]
    %v376 = vld [vmem:[%s0 + $0x1d8] sm:$0xff]
    %v377 = vld [vmem:[%s0 + $0x1e0] sm:$0xff]
    %v378 = vld [vmem:[%s0 + $0x1e8] sm:$0xff]
    %v379 = vld [vmem:[%s0 + $0x1f0] sm:$0xff]
    %v380 = vld [vmem:[%s0 + $0x1f8] sm:$0xff]
    %vm381 = vcmask 523264
    %v382 = vsel %vm381, %v317, 0.0
    %383 = vadd.xlane.f32.xlu0 %v382
    %v384 = vpop.xlane.xlu0 %383
    %v385 = vsel %vm381, %v318, 0.0
    %386 = vadd.xlane.f32.xlu0 %v385
    %v387 = vpop.xlane.xlu0 %386
    %v388 = vsel %vm381, %v319, 0.0
    %389 = vadd.xlane.f32.xlu0 %v388
    %v390 = vpop.xlane.xlu0 %389
    %v391 = vsel %vm381, %v320, 0.0
    %392 = vadd.xlane.f32.xlu0 %v391
    %v393 = vpop.xlane.xlu0 %392
    %v394 = vsel %vm381, %v321, 0.0
    %395 = vadd.xlane.f32.xlu0 %v394
    %v396 = vpop.xlane.xlu0 %395
    %v397 = vsel %vm381, %v322, 0.0
    %398 = vadd.xlane.f32.xlu0 %v397
    %v399 = vpop.xlane.xlu0 %398
    %v400 = vsel %vm381, %v323, 0.0
    %401 = vadd.xlane.f32.xlu0 %v400
    %v402 = vpop.xlane.xlu0 %401
    %v403 = vsel %vm381, %v324, 0.0
    %404 = vadd.xlane.f32.xlu0 %v403
    %v405 = vpop.xlane.xlu0 %404
    %v406 = vsel %vm381, %v325, 0.0
    %407 = vadd.xlane.f32.xlu0 %v406
    %v408 = vpop.xlane.xlu0 %407
    %v409 = vsel %vm381, %v326, 0.0
    %410 = vadd.xlane.f32.xlu0 %v409
    %v411 = vpop.xlane.xlu0 %410
    %v412 = vsel %vm381, %v327, 0.0
    %413 = vadd.xlane.f32.xlu0 %v412
    %v414 = vpop.xlane.xlu0 %413
    %v415 = vsel %vm381, %v328, 0.0
    %416 = vadd.xlane.f32.xlu0 %v415
    %v417 = vpop.xlane.xlu0 %416
    %v418 = vsel %vm381, %v329, 0.0
    %419 = vadd.xlane.f32.xlu0 %v418
    %v420 = vpop.xlane.xlu0 %419
    %v421 = vsel %vm381, %v330, 0.0
    %422 = vadd.xlane.f32.xlu0 %v421
    %v423 = vpop.xlane.xlu0 %422
    %v424 = vsel %vm381, %v331, 0.0
    %425 = vadd.xlane.f32.xlu0 %v424
    %v426 = vpop.xlane.xlu0 %425
    %v427 = vsel %vm381, %v332, 0.0
    %428 = vadd.xlane.f32.xlu0 %v427
    %v429 = vpop.xlane.xlu0 %428
    %v430 = vsel %vm381, %v333, 0.0
    %431 = vadd.xlane.f32.xlu0 %v430
    %v432 = vpop.xlane.xlu0 %431
    %v433 = vsel %vm381, %v334, 0.0
    %434 = vadd.xlane.f32.xlu0 %v433
    %v435 = vpop.xlane.xlu0 %434
    %v436 = vsel %vm381, %v335, 0.0
    %437 = vadd.xlane.f32.xlu0 %v436
    %v438 = vpop.xlane.xlu0 %437
    %v439 = vsel %vm381, %v336, 0.0
    %440 = vadd.xlane.f32.xlu0 %v439
    %v441 = vpop.xlane.xlu0 %440
    %v442 = vsel %vm381, %v337, 0.0
    %443 = vadd.xlane.f32.xlu0 %v442
    %v444 = vpop.xlane.xlu0 %443
    %v445 = vsel %vm381, %v338, 0.0
    %446 = vadd.xlane.f32.xlu0 %v445
    %v447 = vpop.xlane.xlu0 %446
    %v448 = vsel %vm381, %v339, 0.0
    %449 = vadd.xlane.f32.xlu0 %v448
    %v450 = vpop.xlane.xlu0 %449
    %v451 = vsel %vm381, %v340, 0.0
    %452 = vadd.xlane.f32.xlu0 %v451
    %v453 = vpop.xlane.xlu0 %452
    %v454 = vsel %vm381, %v341, 0.0
    %455 = vadd.xlane.f32.xlu0 %v454
    %v456 = vpop.xlane.xlu0 %455
    %v457 = vsel %vm381, %v342, 0.0
    %458 = vadd.xlane.f32.xlu0 %v457
    %v459 = vpop.xlane.xlu0 %458
    %v460 = vsel %vm381, %v343, 0.0
    %461 = vadd.xlane.f32.xlu0 %v460
    %v462 = vpop.xlane.xlu0 %461
    %v463 = vsel %vm381, %v344, 0.0
    %464 = vadd.xlane.f32.xlu0 %v463
    %v465 = vpop.xlane.xlu0 %464
    %v466 = vsel %vm381, %v345, 0.0
    %467 = vadd.xlane.f32.xlu0 %v466
    %v468 = vpop.xlane.xlu0 %467
    %v469 = vsel %vm381, %v346, 0.0
    %470 = vadd.xlane.f32.xlu0 %v469
    %v471 = vpop.xlane.xlu0 %470
    %v472 = vsel %vm381, %v347, 0.0
    %473 = vadd.xlane.f32.xlu0 %v472
    %v474 = vpop.xlane.xlu0 %473
    %v475 = vsel %vm381, %v348, 0.0
    %476 = vadd.xlane.f32.xlu0 %v475
    %v477 = vpop.xlane.xlu0 %476
    %v478 = vsel %vm381, %v349, 0.0
    %479 = vadd.xlane.f32.xlu0 %v478
    %v480 = vpop.xlane.xlu0 %479
    %v481 = vsel %vm381, %v350, 0.0
    %482 = vadd.xlane.f32.xlu0 %v481
    %v483 = vpop.xlane.xlu0 %482
    %v484 = vsel %vm381, %v351, 0.0
    %485 = vadd.xlane.f32.xlu0 %v484
    %v486 = vpop.xlane.xlu0 %485
    %v487 = vsel %vm381, %v352, 0.0
    %488 = vadd.xlane.f32.xlu0 %v487
    %v489 = vpop.xlane.xlu0 %488
    %v490 = vsel %vm381, %v353, 0.0
    %491 = vadd.xlane.f32.xlu0 %v490
    %v492 = vpop.xlane.xlu0 %491
    %v493 = vsel %vm381, %v354, 0.0
    %494 = vadd.xlane.f32.xlu0 %v493
    %v495 = vpop.xlane.xlu0 %494
    %v496 = vsel %vm381, %v355, 0.0
    %497 = vadd.xlane.f32.xlu0 %v496
    %v498 = vpop.xlane.xlu0 %497
    %v499 = vsel %vm381, %v356, 0.0
    %500 = vadd.xlane.f32.xlu0 %v499
    %v501 = vpop.xlane.xlu0 %500
    %v502 = vsel %vm381, %v357, 0.0
    %503 = vadd.xlane.f32.xlu0 %v502
    %v504 = vpop.xlane.xlu0 %503
    %v505 = vsel %vm381, %v358, 0.0
    %506 = vadd.xlane.f32.xlu0 %v505
    %v507 = vpop.xlane.xlu0 %506
    %v508 = vsel %vm381, %v359, 0.0
    %509 = vadd.xlane.f32.xlu0 %v508
    %v510 = vpop.xlane.xlu0 %509
    %v511 = vsel %vm381, %v360, 0.0
    %512 = vadd.xlane.f32.xlu0 %v511
    %v513 = vpop.xlane.xlu0 %512
    %v514 = vsel %vm381, %v361, 0.0
    %515 = vadd.xlane.f32.xlu0 %v514
    %v516 = vpop.xlane.xlu0 %515
    %v517 = vsel %vm381, %v362, 0.0
    %518 = vadd.xlane.f32.xlu0 %v517
    %v519 = vpop.xlane.xlu0 %518
    %v520 = vsel %vm381, %v363, 0.0
    %521 = vadd.xlane.f32.xlu0 %v520
    %v522 = vpop.xlane.xlu0 %521
    %v523 = vsel %vm381, %v364, 0.0
    %524 = vadd.xlane.f32.xlu0 %v523
    %v525 = vpop.xlane.xlu0 %524
    %v526 = vsel %vm381, %v365, 0.0
    %527 = vadd.xlane.f32.xlu0 %v526
    %v528 = vpop.xlane.xlu0 %527
    %v529 = vsel %vm381, %v366, 0.0
    %530 = vadd.xlane.f32.xlu0 %v529
    %v531 = vpop.xlane.xlu0 %530
    %v532 = vsel %vm381, %v367, 0.0
    %533 = vadd.xlane.f32.xlu0 %v532
    %v534 = vpop.xlane.xlu0 %533
    %v535 = vsel %vm381, %v368, 0.0
    %536 = vadd.xlane.f32.xlu0 %v535
    %v537 = vpop.xlane.xlu0 %536
    %v538 = vsel %vm381, %v369, 0.0
    %539 = vadd.xlane.f32.xlu0 %v538
    %v540 = vpop.xlane.xlu0 %539
    %v541 = vsel %vm381, %v370, 0.0
    %542 = vadd.xlane.f32.xlu0 %v541
    %v543 = vpop.xlane.xlu0 %542
    %v544 = vsel %vm381, %v371, 0.0
    %545 = vadd.xlane.f32.xlu0 %v544
    %v546 = vpop.xlane.xlu0 %545
    %v547 = vsel %vm381, %v372, 0.0
    %548 = vadd.xlane.f32.xlu0 %v547
    %v549 = vpop.xlane.xlu0 %548
    %v550 = vsel %vm381, %v373, 0.0
    %551 = vadd.xlane.f32.xlu0 %v550
    %v552 = vpop.xlane.xlu0 %551
    %v553 = vsel %vm381, %v374, 0.0
    %554 = vadd.xlane.f32.xlu0 %v553
    %v555 = vpop.xlane.xlu0 %554
    %v556 = vsel %vm381, %v375, 0.0
    %557 = vadd.xlane.f32.xlu0 %v556
    %v558 = vpop.xlane.xlu0 %557
    %v559 = vsel %vm381, %v376, 0.0
    %560 = vadd.xlane.f32.xlu0 %v559
    %v561 = vpop.xlane.xlu0 %560
    %v562 = vsel %vm381, %v377, 0.0
    %563 = vadd.xlane.f32.xlu0 %v562
    %v564 = vpop.xlane.xlu0 %563
    %v565 = vsel %vm381, %v378, 0.0
    %566 = vadd.xlane.f32.xlu0 %v565
    %v567 = vpop.xlane.xlu0 %566
    %v568 = vsel %vm381, %v379, 0.0
    %569 = vadd.xlane.f32.xlu0 %v568
    %v570 = vpop.xlane.xlu0 %569
    %v571 = vsel %vm381, %v380, 0.0
    %572 = vadd.xlane.f32.xlu0 %v571
    %v573 = vpop.xlane.xlu0 %572
    %v574 = vrcp.pop 64.0
    %v575 = vmul.f32 %v384, %v574
    %v576 = vmul.f32 %v387, %v574
    %v577 = vmul.f32 %v390, %v574
    %v578 = vmul.f32 %v393, %v574
    %v579 = vmul.f32 %v396, %v574
    %v580 = vmul.f32 %v399, %v574
    %v581 = vmul.f32 %v402, %v574
    %v582 = vmul.f32 %v405, %v574
    %v583 = vmul.f32 %v408, %v574
    %v584 = vmul.f32 %v411, %v574
    %v585 = vmul.f32 %v414, %v574
    %v586 = vmul.f32 %v417, %v574
    %v587 = vmul.f32 %v420, %v574
    %v588 = vmul.f32 %v423, %v574
    %v589 = vmul.f32 %v426, %v574
    %v590 = vmul.f32 %v429, %v574
    %v591 = vmul.f32 %v432, %v574
    %v592 = vmul.f32 %v435, %v574
    %v593 = vmul.f32 %v438, %v574
    %v594 = vmul.f32 %v441, %v574
    %v595 = vmul.f32 %v444, %v574
    %v596 = vmul.f32 %v447, %v574
    %v597 = vmul.f32 %v450, %v574
    %v598 = vmul.f32 %v453, %v574
    %v599 = vmul.f32 %v456, %v574
    %v600 = vmul.f32 %v459, %v574
    %v601 = vmul.f32 %v462, %v574
    %v602 = vmul.f32 %v465, %v574
    %v603 = vmul.f32 %v468, %v574
    %v604 = vmul.f32 %v471, %v574
    %v605 = vmul.f32 %v474, %v574
    %v606 = vmul.f32 %v477, %v574
    %v607 = vmul.f32 %v480, %v574
    %v608 = vmul.f32 %v483, %v574
    %v609 = vmul.f32 %v486, %v574
    %v610 = vmul.f32 %v489, %v574
    %v611 = vmul.f32 %v492, %v574
    %v612 = vmul.f32 %v495, %v574
    %v613 = vmul.f32 %v498, %v574
    %v614 = vmul.f32 %v501, %v574
    %v615 = vmul.f32 %v504, %v574
    %v616 = vmul.f32 %v507, %v574
    %v617 = vmul.f32 %v510, %v574
    %v618 = vmul.f32 %v513, %v574
    %v619 = vmul.f32 %v516, %v574
    %v620 = vmul.f32 %v519, %v574
    %v621 = vmul.f32 %v522, %v574
    %v622 = vmul.f32 %v525, %v574
    %v623 = vmul.f32 %v528, %v574
    %v624 = vmul.f32 %v531, %v574
    %v625 = vmul.f32 %v534, %v574
    %v626 = vmul.f32 %v537, %v574
    %v627 = vmul.f32 %v540, %v574
    %v628 = vmul.f32 %v543, %v574
    %v629 = vmul.f32 %v546, %v574
    %v630 = vmul.f32 %v549, %v574
    %v631 = vmul.f32 %v552, %v574
    %v632 = vmul.f32 %v555, %v574
    %v633 = vmul.f32 %v558, %v574
    %v634 = vmul.f32 %v561, %v574
    %v635 = vmul.f32 %v564, %v574
    %v636 = vmul.f32 %v567, %v574
    %v637 = vmul.f32 %v570, %v574
    %v638 = vmul.f32 %v573, %v574
    %v639 = vpack.c.bf16 %v576, %v575
    %v640 = vpack.c.bf16 %v578, %v577
    %v641 = vpack.c.bf16 %v580, %v579
    %v642 = vpack.c.bf16 %v582, %v581
    %v643 = vpack.c.bf16 %v584, %v583
    %v644 = vpack.c.bf16 %v586, %v585
    %v645 = vpack.c.bf16 %v588, %v587
    %v646 = vpack.c.bf16 %v590, %v589
    %v647 = vpack.c.bf16 %v592, %v591
    %v648 = vpack.c.bf16 %v594, %v593
    %v649 = vpack.c.bf16 %v596, %v595
    %v650 = vpack.c.bf16 %v598, %v597
    %v651 = vpack.c.bf16 %v600, %v599
    %v652 = vpack.c.bf16 %v602, %v601
    %v653 = vpack.c.bf16 %v604, %v603
    %v654 = vpack.c.bf16 %v606, %v605
    %v655 = vpack.c.bf16 %v608, %v607
    %v656 = vpack.c.bf16 %v610, %v609
    %v657 = vpack.c.bf16 %v612, %v611
    %v658 = vpack.c.bf16 %v614, %v613
    %v659 = vpack.c.bf16 %v616, %v615
    %v660 = vpack.c.bf16 %v618, %v617
    %v661 = vpack.c.bf16 %v620, %v619
    %v662 = vpack.c.bf16 %v622, %v621
    %v663 = vpack.c.bf16 %v624, %v623
    %v664 = vpack.c.bf16 %v626, %v625
    %v665 = vpack.c.bf16 %v628, %v627
    %v666 = vpack.c.bf16 %v630, %v629
    %v667 = vpack.c.bf16 %v632, %v631
    %v668 = vpack.c.bf16 %v634, %v633
    %v669 = vpack.c.bf16 %v636, %v635
    %v670 = vpack.c.bf16 %v638, %v637
    %v671 = vsel %vm381, %v317, -inf
    %672 = vmax.xlane.f32.xlu0 %v671
    %v673 = vpop.xlane.xlu0 %672
    %v674 = vsel %vm381, %v318, -inf
    %675 = vmax.xlane.f32.xlu0 %v674
    %v676 = vpop.xlane.xlu0 %675
    %v677 = vsel %vm381, %v319, -inf
    %678 = vmax.xlane.f32.xlu0 %v677
    %v679 = vpop.xlane.xlu0 %678
    %v680 = vsel %vm381, %v320, -inf
    %681 = vmax.xlane.f32.xlu0 %v680
    %v682 = vpop.xlane.xlu0 %681
    %v683 = vsel %vm381, %v321, -inf
    %684 = vmax.xlane.f32.xlu0 %v683
    %v685 = vpop.xlane.xlu0 %684
    %v686 = vsel %vm381, %v322, -inf
    %687 = vmax.xlane.f32.xlu0 %v686
    %v688 = vpop.xlane.xlu0 %687
    %v689 = vsel %vm381, %v323, -inf
    %690 = vmax.xlane.f32.xlu0 %v689
    %v691 = vpop.xlane.xlu0 %690
    %v692 = vsel %vm381, %v324, -inf
    %693 = vmax.xlane.f32.xlu0 %v692
    %v694 = vpop.xlane.xlu0 %693
    %v695 = vsel %vm381, %v325, -inf
    %696 = vmax.xlane.f32.xlu0 %v695
    %v697 = vpop.xlane.xlu0 %696
    %v698 = vsel %vm381, %v326, -inf
    %699 = vmax.xlane.f32.xlu0 %v698
    %v700 = vpop.xlane.xlu0 %699
    %v701 = vsel %vm381, %v327, -inf
    %702 = vmax.xlane.f32.xlu0 %v701
    %v703 = vpop.xlane.xlu0 %702
    %v704 = vsel %vm381, %v328, -inf
    %705 = vmax.xlane.f32.xlu0 %v704
    %v706 = vpop.xlane.xlu0 %705
    %v707 = vsel %vm381, %v329, -inf
    %708 = vmax.xlane.f32.xlu0 %v707
    %v709 = vpop.xlane.xlu0 %708
    %v710 = vsel %vm381, %v330, -inf
    %711 = vmax.xlane.f32.xlu0 %v710
    %v712 = vpop.xlane.xlu0 %711
    %v713 = vsel %vm381, %v331, -inf
    %714 = vmax.xlane.f32.xlu0 %v713
    %v715 = vpop.xlane.xlu0 %714
    %v716 = vsel %vm381, %v332, -inf
    %717 = vmax.xlane.f32.xlu0 %v716
    %v718 = vpop.xlane.xlu0 %717
    %v719 = vsel %vm381, %v333, -inf
    %720 = vmax.xlane.f32.xlu0 %v719
    %v721 = vpop.xlane.xlu0 %720
    %v722 = vsel %vm381, %v334, -inf
    %723 = vmax.xlane.f32.xlu0 %v722
    %v724 = vpop.xlane.xlu0 %723
    %v725 = vsel %vm381, %v335, -inf
    %726 = vmax.xlane.f32.xlu0 %v725
    %v727 = vpop.xlane.xlu0 %726
    %v728 = vsel %vm381, %v336, -inf
    %729 = vmax.xlane.f32.xlu0 %v728
    %v730 = vpop.xlane.xlu0 %729
    %v731 = vsel %vm381, %v337, -inf
    %732 = vmax.xlane.f32.xlu0 %v731
    %v733 = vpop.xlane.xlu0 %732
    %v734 = vsel %vm381, %v338, -inf
    %735 = vmax.xlane.f32.xlu0 %v734
    %v736 = vpop.xlane.xlu0 %735
    %v737 = vsel %vm381, %v339, -inf
    %738 = vmax.xlane.f32.xlu0 %v737
    %v739 = vpop.xlane.xlu0 %738
    %v740 = vsel %vm381, %v340, -inf
    %741 = vmax.xlane.f32.xlu0 %v740
    %v742 = vpop.xlane.xlu0 %741
    %v743 = vsel %vm381, %v341, -inf
    %744 = vmax.xlane.f32.xlu0 %v743
    %v745 = vpop.xlane.xlu0 %744
    %v746 = vsel %vm381, %v342, -inf
    %747 = vmax.xlane.f32.xlu0 %v746
    %v748 = vpop.xlane.xlu0 %747
    %v749 = vsel %vm381, %v343, -inf
    %750 = vmax.xlane.f32.xlu0 %v749
    %v751 = vpop.xlane.xlu0 %750
    %v752 = vsel %vm381, %v344, -inf
    %753 = vmax.xlane.f32.xlu0 %v752
    %v754 = vpop.xlane.xlu0 %753
    %v755 = vsel %vm381, %v345, -inf
    %756 = vmax.xlane.f32.xlu0 %v755
    %v757 = vpop.xlane.xlu0 %756
    %v758 = vsel %vm381, %v346, -inf
    %759 = vmax.xlane.f32.xlu0 %v758
    %v760 = vpop.xlane.xlu0 %759
    %v761 = vsel %vm381, %v347, -inf
    %762 = vmax.xlane.f32.xlu0 %v761
    %v763 = vpop.xlane.xlu0 %762
    %v764 = vsel %vm381, %v348, -inf
    %765 = vmax.xlane.f32.xlu0 %v764
    %v766 = vpop.xlane.xlu0 %765
    %v767 = vsel %vm381, %v349, -inf
    %768 = vmax.xlane.f32.xlu0 %v767
    %v769 = vpop.xlane.xlu0 %768
    %v770 = vsel %vm381, %v350, -inf
    %771 = vmax.xlane.f32.xlu0 %v770
    %v772 = vpop.xlane.xlu0 %771
    %v773 = vsel %vm381, %v351, -inf
    %774 = vmax.xlane.f32.xlu0 %v773
    %v775 = vpop.xlane.xlu0 %774
    %v776 = vsel %vm381, %v352, -inf
    %777 = vmax.xlane.f32.xlu0 %v776
    %v778 = vpop.xlane.xlu0 %777
    %v779 = vsel %vm381, %v353, -inf
    %780 = vmax.xlane.f32.xlu0 %v779
    %v781 = vpop.xlane.xlu0 %780
    %v782 = vsel %vm381, %v354, -inf
    %783 = vmax.xlane.f32.xlu0 %v782
    %v784 = vpop.xlane.xlu0 %783
    %v785 = vsel %vm381, %v355, -inf
    %786 = vmax.xlane.f32.xlu0 %v785
    %v787 = vpop.xlane.xlu0 %786
    %v788 = vsel %vm381, %v356, -inf
    %789 = vmax.xlane.f32.xlu0 %v788
    %v790 = vpop.xlane.xlu0 %789
    %v791 = vsel %vm381, %v357, -inf
    %792 = vmax.xlane.f32.xlu0 %v791
    %v793 = vpop.xlane.xlu0 %792
    %v794 = vsel %vm381, %v358, -inf
    %795 = vmax.xlane.f32.xlu0 %v794
    %v796 = vpop.xlane.xlu0 %795
    %v797 = vsel %vm381, %v359, -inf
    %798 = vmax.xlane.f32.xlu0 %v797
    %v799 = vpop.xlane.xlu0 %798
    %v800 = vsel %vm381, %v360, -inf
    %801 = vmax.xlane.f32.xlu0 %v800
    %v802 = vpop.xlane.xlu0 %801
    %v803 = vsel %vm381, %v361, -inf
    %804 = vmax.xlane.f32.xlu0 %v803
    %v805 = vpop.xlane.xlu0 %804
    %v806 = vsel %vm381, %v362, -inf
    %807 = vmax.xlane.f32.xlu0 %v806
    %v808 = vpop.xlane.xlu0 %807
    %v809 = vsel %vm381, %v363, -inf
    %810 = vmax.xlane.f32.xlu0 %v809
    %v811 = vpop.xlane.xlu0 %810
    %v812 = vsel %vm381, %v364, -inf
    %813 = vmax.xlane.f32.xlu0 %v812
    %v814 = vpop.xlane.xlu0 %813
    %v815 = vsel %vm381, %v365, -inf
    %816 = vmax.xlane.f32.xlu0 %v815
    %v817 = vpop.xlane.xlu0 %816
    %v818 = vsel %vm381, %v366, -inf
    %819 = vmax.xlane.f32.xlu0 %v818
    %v820 = vpop.xlane.xlu0 %819
    %v821 = vsel %vm381, %v367, -inf
    %822 = vmax.xlane.f32.xlu0 %v821
    %v823 = vpop.xlane.xlu0 %822
    %v824 = vsel %vm381, %v368, -inf
    %825 = vmax.xlane.f32.xlu0 %v824
    %v826 = vpop.xlane.xlu0 %825
    %v827 = vsel %vm381, %v369, -inf
    %828 = vmax.xlane.f32.xlu0 %v827
    %v829 = vpop.xlane.xlu0 %828
    %v830 = vsel %vm381, %v370, -inf
    %831 = vmax.xlane.f32.xlu0 %v830
    %v832 = vpop.xlane.xlu0 %831
    %v833 = vsel %vm381, %v371, -inf
    %834 = vmax.xlane.f32.xlu0 %v833
    %v835 = vpop.xlane.xlu0 %834
    %v836 = vsel %vm381, %v372, -inf
    %837 = vmax.xlane.f32.xlu0 %v836
    %v838 = vpop.xlane.xlu0 %837
    %v839 = vsel %vm381, %v373, -inf
    %840 = vmax.xlane.f32.xlu0 %v839
    %v841 = vpop.xlane.xlu0 %840
    %v842 = vsel %vm381, %v374, -inf
    %843 = vmax.xlane.f32.xlu0 %v842
    %v844 = vpop.xlane.xlu0 %843
    %v845 = vsel %vm381, %v375, -inf
    %846 = vmax.xlane.f32.xlu0 %v845
    %v847 = vpop.xlane.xlu0 %846
    %v848 = vsel %vm381, %v376, -inf
    %849 = vmax.xlane.f32.xlu0 %v848
    %v850 = vpop.xlane.xlu0 %849
    %v851 = vsel %vm381, %v377, -inf
    %852 = vmax.xlane.f32.xlu0 %v851
    %v853 = vpop.xlane.xlu0 %852
    %v854 = vsel %vm381, %v378, -inf
    %855 = vmax.xlane.f32.xlu0 %v854
    %v856 = vpop.xlane.xlu0 %855
    %v857 = vsel %vm381, %v379, -inf
    %858 = vmax.xlane.f32.xlu0 %v857
    %v859 = vpop.xlane.xlu0 %858
    %v860 = vsel %vm381, %v380, -inf
    %861 = vmax.xlane.f32.xlu0 %v860
    %v862 = vpop.xlane.xlu0 %861
    %v863 = vpack.c.bf16 %v676, %v673
    %v864 = vpack.c.bf16 %v682, %v679
    %v865 = vpack.c.bf16 %v688, %v685
    %v866 = vpack.c.bf16 %v694, %v691
    %v867 = vpack.c.bf16 %v700, %v697
    %v868 = vpack.c.bf16 %v706, %v703
    %v869 = vpack.c.bf16 %v712, %v709
    %v870 = vpack.c.bf16 %v718, %v715
    %v871 = vpack.c.bf16 %v724, %v721
    %v872 = vpack.c.bf16 %v730, %v727
    %v873 = vpack.c.bf16 %v736, %v733
    %v874 = vpack.c.bf16 %v742, %v739
    %v875 = vpack.c.bf16 %v748, %v745
    %v876 = vpack.c.bf16 %v754, %v751
    %v877 = vpack.c.bf16 %v760, %v757
    %v878 = vpack.c.bf16 %v766, %v763
    %v879 = vpack.c.bf16 %v772, %v769
    %v880 = vpack.c.bf16 %v778, %v775
    %v881 = vpack.c.bf16 %v784, %v781
    %v882 = vpack.c.bf16 %v790, %v787
    %v883 = vpack.c.bf16 %v796, %v793
    %v884 = vpack.c.bf16 %v802, %v799
    %v885 = vpack.c.bf16 %v808, %v805
    %v886 = vpack.c.bf16 %v814, %v811
    %v887 = vpack.c.bf16 %v820, %v817
    %v888 = vpack.c.bf16 %v826, %v823
    %v889 = vpack.c.bf16 %v832, %v829
    %v890 = vpack.c.bf16 %v838, %v835
    %v891 = vpack.c.bf16 %v844, %v841
    %v892 = vpack.c.bf16 %v850, %v847
    %v893 = vpack.c.bf16 %v856, %v853
    %v894 = vpack.c.bf16 %v862, %v859
    %v895 = vld [vmem:[#allocation7] sm:$0xf]
    %v896 = vld [vmem:[#allocation7 + $0x4] sm:$0xf]
    %v897 = vld [vmem:[#allocation7 + $0x8] sm:$0xf]
    %v898 = vld [vmem:[#allocation7 + $0xc] sm:$0xf]
    %v899 = vld [vmem:[#allocation7 + $0x10] sm:$0xf]
    %v900 = vld [vmem:[#allocation7 + $0x14] sm:$0xf]
    %v901 = vld [vmem:[#allocation7 + $0x18] sm:$0xf]
    %v902 = vld [vmem:[#allocation7 + $0x1c] sm:$0xf]
    %v903 = vld [vmem:[#allocation7 + $0x20] sm:$0xf]
    %v904 = vld [vmem:[#allocation7 + $0x24] sm:$0xf]
    %v905 = vld [vmem:[#allocation7 + $0x28] sm:$0xf]
    %v906 = vld [vmem:[#allocation7 + $0x2c] sm:$0xf]
    %v907 = vld [vmem:[#allocation7 + $0x30] sm:$0xf]
    %v908 = vld [vmem:[#allocation7 + $0x34] sm:$0xf]
    %v909 = vld [vmem:[#allocation7 + $0x38] sm:$0xf]
    %v910 = vld [vmem:[#allocation7 + $0x3c] sm:$0xf]
    %v911 = vld [vmem:[#allocation7 + $0x40] sm:$0xf]
    %v912 = vld [vmem:[#allocation7 + $0x44] sm:$0xf]
    %v913 = vld [vmem:[#allocation7 + $0x48] sm:$0xf]
    %v914 = vld [vmem:[#allocation7 + $0x4c] sm:$0xf]
    %v915 = vld [vmem:[#allocation7 + $0x50] sm:$0xf]
    %v916 = vld [vmem:[#allocation7 + $0x54] sm:$0xf]
    %v917 = vld [vmem:[#allocation7 + $0x58] sm:$0xf]
    %v918 = vld [vmem:[#allocation7 + $0x5c] sm:$0xf]
    %v919 = vld [vmem:[#allocation7 + $0x60] sm:$0xf]
    %v920 = vld [vmem:[#allocation7 + $0x64] sm:$0xf]
    %v921 = vld [vmem:[#allocation7 + $0x68] sm:$0xf]
    %v922 = vld [vmem:[#allocation7 + $0x6c] sm:$0xf]
    %v923 = vld [vmem:[#allocation7 + $0x70] sm:$0xf]
    %v924 = vld [vmem:[#allocation7 + $0x74] sm:$0xf]
    %v925 = vld [vmem:[#allocation7 + $0x78] sm:$0xf]
    %v926 = vld [vmem:[#allocation7 + $0x7c] sm:$0xf]
    %v927 = vld [vmem:[#allocation7 + $0x80] sm:$0xf]
    %v928 = vld [vmem:[#allocation7 + $0x84] sm:$0xf]
    %v929 = vld [vmem:[#allocation7 + $0x88] sm:$0xf]
    %v930 = vld [vmem:[#allocation7 + $0x8c] sm:$0xf]
    %v931 = vld [vmem:[#allocation7 + $0x90] sm:$0xf]
    %v932 = vld [vmem:[#allocation7 + $0x94] sm:$0xf]
    %v933 = vld [vmem:[#allocation7 + $0x98] sm:$0xf]
    %v934 = vld [vmem:[#allocation7 + $0x9c] sm:$0xf]
    %v935 = vld [vmem:[#allocation7 + $0xa0] sm:$0xf]
    %v936 = vld [vmem:[#allocation7 + $0xa4] sm:$0xf]
    %v937 = vld [vmem:[#allocation7 + $0xa8] sm:$0xf]
    %v938 = vld [vmem:[#allocation7 + $0xac] sm:$0xf]
    %v939 = vld [vmem:[#allocation7 + $0xb0] sm:$0xf]
    %v940 = vld [vmem:[#allocation7 + $0xb4] sm:$0xf]
    %v941 = vld [vmem:[#allocation7 + $0xb8] sm:$0xf]
    %v942 = vld [vmem:[#allocation7 + $0xbc] sm:$0xf]
    %v943 = vld [vmem:[#allocation7 + $0xc0] sm:$0xf]
    %v944 = vld [vmem:[#allocation7 + $0xc4] sm:$0xf]
    %v945 = vld [vmem:[#allocation7 + $0xc8] sm:$0xf]
    %v946 = vld [vmem:[#allocation7 + $0xcc] sm:$0xf]
    %v947 = vld [vmem:[#allocation7 + $0xd0] sm:$0xf]
    %v948 = vld [vmem:[#allocation7 + $0xd4] sm:$0xf]
    %v949 = vld [vmem:[#allocation7 + $0xd8] sm:$0xf]
    %v950 = vld [vmem:[#allocation7 + $0xdc] sm:$0xf]
    %v951 = vld [vmem:[#allocation7 + $0xe0] sm:$0xf]
    %v952 = vld [vmem:[#allocation7 + $0xe4] sm:$0xf]
    %v953 = vld [vmem:[#allocation7 + $0xe8] sm:$0xf]
    %v954 = vld [vmem:[#allocation7 + $0xec] sm:$0xf]
    %v955 = vld [vmem:[#allocation7 + $0xf0] sm:$0xf]
    %v956 = vld [vmem:[#allocation7 + $0xf4] sm:$0xf]
    %v957 = vld [vmem:[#allocation7 + $0xf8] sm:$0xf]
    %v958 = vld [vmem:[#allocation7 + $0xfc] sm:$0xf]
    %v991 = vunpack.c.l.b16 %v863
    %v992 = vunpack.c.h.b16 %v863
    %v993 = vunpack.c.l.b16 %v864
    %v994 = vunpack.c.h.b16 %v864
    %v995 = vunpack.c.l.b16 %v865
    %v996 = vunpack.c.h.b16 %v865
    %v997 = vunpack.c.l.b16 %v866
    %v998 = vunpack.c.h.b16 %v866
    %v999 = vunpack.c.l.b16 %v867
    %v1000 = vunpack.c.h.b16 %v867
    %v1001 = vunpack.c.l.b16 %v868
    %v1002 = vunpack.c.h.b16 %v868
    %v1003 = vunpack.c.l.b16 %v869
    %v1004 = vunpack.c.h.b16 %v869
    %v1005 = vunpack.c.l.b16 %v870
    %v1006 = vunpack.c.h.b16 %v870
    %v1007 = vunpack.c.l.b16 %v871
    %v1008 = vunpack.c.h.b16 %v871
    %v1009 = vunpack.c.l.b16 %v872
    %v1010 = vunpack.c.h.b16 %v872
    %v1011 = vunpack.c.l.b16 %v873
    %v1012 = vunpack.c.h.b16 %v873
    %v1013 = vunpack.c.l.b16 %v874
    %v1014 = vunpack.c.h.b16 %v874
    %v1015 = vunpack.c.l.b16 %v875
    %v1016 = vunpack.c.h.b16 %v875
    %v1017 = vunpack.c.l.b16 %v876
    %v1018 = vunpack.c.h.b16 %v876
    %v1019 = vunpack.c.l.b16 %v877
    %v1020 = vunpack.c.h.b16 %v877
    %v1021 = vunpack.c.l.b16 %v878
    %v1022 = vunpack.c.h.b16 %v878
    %v1023 = vunpack.c.l.b16 %v879
    %v1024 = vunpack.c.h.b16 %v879
    %v1025 = vunpack.c.l.b16 %v880
    %v1026 = vunpack.c.h.b16 %v880
    %v1027 = vunpack.c.l.b16 %v881
    %v1028 = vunpack.c.h.b16 %v881
    %v1029 = vunpack.c.l.b16 %v882
    %v1030 = vunpack.c.h.b16 %v882
    %v1031 = vunpack.c.l.b16 %v883
    %v1032 = vunpack.c.h.b16 %v883
    %v1033 = vunpack.c.l.b16 %v884
    %v1034 = vunpack.c.h.b16 %v884
    %v1035 = vunpack.c.l.b16 %v885
    %v1036 = vunpack.c.h.b16 %v885
    %v1037 = vunpack.c.l.b16 %v886
    %v1038 = vunpack.c.h.b16 %v886
    %v1039 = vunpack.c.l.b16 %v887
    %v1040 = vunpack.c.h.b16 %v887
    %v1041 = vunpack.c.l.b16 %v888
    %v1042 = vunpack.c.h.b16 %v888
    %v1043 = vunpack.c.l.b16 %v889
    %v1044 = vunpack.c.h.b16 %v889
    %v1045 = vunpack.c.l.b16 %v890
    %v1046 = vunpack.c.h.b16 %v890
    %v1047 = vunpack.c.l.b16 %v891
    %v1048 = vunpack.c.h.b16 %v891
    %v1049 = vunpack.c.l.b16 %v892
    %v1050 = vunpack.c.h.b16 %v892
    %v1051 = vunpack.c.l.b16 %v893
    %v1052 = vunpack.c.h.b16 %v893
    %v1053 = vunpack.c.l.b16 %v894
    %v1054 = vunpack.c.h.b16 %v894
    %v1055 = vlaneseq
    %v1056 = vand.u32 %v1055, 127
    %v1057 = vlaneseq
    %v1058 = vshrl.u32 %v1057, 7
    %v1059 = vsub.s32 %v1056, %v1058
    %v1060 = vrot.slane %v991, %v1059
    %v1061 = vadd.s32 %v1056, 4294967288
    %v1062 = vlaneseq
    %v1063 = vshrl.u32 %v1062, 7
    %v1064 = vsub.s32 %v1061, %v1063
    %v1065 = vrot.slane %v992, %v1064
    %vm1066 = vcmask 130112
    %v1067 = vsel %vm1066, %v1065, %v1060
    %v1068 = vadd.s32 %v1056, 4294967280
    %v1069 = vlaneseq
    %v1070 = vshrl.u32 %v1069, 7
    %v1071 = vsub.s32 %v1068, %v1070
    %v1072 = vrot.slane %v993, %v1071
    %vm1073 = vcmask 195712
    %v1074 = vsel %vm1073, %v1072, %v1067
    %v1075 = vadd.s32 %v1056, 4294967272
    %v1076 = vlaneseq
    %v1077 = vshrl.u32 %v1076, 7
    %v1078 = vsub.s32 %v1075, %v1077
    %v1079 = vrot.slane %v994, %v1078
    %vm1080 = vcmask 261312
    %v1081 = vsel %vm1080, %v1079, %v1074
    %v1082 = vadd.s32 %v1056, 4294967264
    %v1083 = vlaneseq
    %v1084 = vshrl.u32 %v1083, 7
    %v1085 = vsub.s32 %v1082, %v1084
    %v1086 = vrot.slane %v995, %v1085
    %vm1087 = vcmask 326912
    %v1088 = vsel %vm1087, %v1086, %v1081
    %v1089 = vadd.s32 %v1056, 4294967256
    %v1090 = vlaneseq
    %v1091 = vshrl.u32 %v1090, 7
    %v1092 = vsub.s32 %v1089, %v1091
    %v1093 = vrot.slane %v996, %v1092
    %vm1094 = vcmask 392512
    %v1095 = vsel %vm1094, %v1093, %v1088
    %v1096 = vadd.s32 %v1056, 4294967248
    %v1097 = vlaneseq
    %v1098 = vshrl.u32 %v1097, 7
    %v1099 = vsub.s32 %v1096, %v1098
    %v1100 = vrot.slane %v997, %v1099
    %vm1101 = vcmask 458112
    %v1102 = vsel %vm1101, %v1100, %v1095
    %v1103 = vadd.s32 %v1056, 4294967240
    %v1104 = vlaneseq
    %v1105 = vshrl.u32 %v1104, 7
    %v1106 = vsub.s32 %v1103, %v1105
    %v1107 = vrot.slane %v998, %v1106
    %vm1108 = vcmask 523712
    %v1109 = vsel %vm1108, %v1107, %v1102
    %v1110 = vadd.s32 %v1056, 4294967232
    %v1111 = vlaneseq
    %v1112 = vshrl.u32 %v1111, 7
    %v1113 = vsub.s32 %v1110, %v1112
    %v1114 = vrot.slane %v999, %v1113
    %vm1115 = vcmask 589312
    %v1116 = vsel %vm1115, %v1114, %v1109
    %v1117 = vadd.s32 %v1056, 4294967224
    %v1118 = vlaneseq
    %v1119 = vshrl.u32 %v1118, 7
    %v1120 = vsub.s32 %v1117, %v1119
    %v1121 = vrot.slane %v1000, %v1120
    %vm1122 = vcmask 654912
    %v1123 = vsel %vm1122, %v1121, %v1116
    %v1124 = vadd.s32 %v1056, 4294967216
    %v1125 = vlaneseq
    %v1126 = vshrl.u32 %v1125, 7
    %v1127 = vsub.s32 %v1124, %v1126
    %v1128 = vrot.slane %v1001, %v1127
    %vm1129 = vcmask 720512
    %v1130 = vsel %vm1129, %v1128, %v1123
    %v1131 = vadd.s32 %v1056, 4294967208
    %v1132 = vlaneseq
    %v1133 = vshrl.u32 %v1132, 7
    %v1134 = vsub.s32 %v1131, %v1133
    %v1135 = vrot.slane %v1002, %v1134
    %vm1136 = vcmask 786112
    %v1137 = vsel %vm1136, %v1135, %v1130
    %v1138 = vadd.s32 %v1056, 4294967200
    %v1139 = vlaneseq
    %v1140 = vshrl.u32 %v1139, 7
    %v1141 = vsub.s32 %v1138, %v1140
    %v1142 = vrot.slane %v1003, %v1141
    %vm1143 = vcmask 851712
    %v1144 = vsel %vm1143, %v1142, %v1137
    %v1145 = vadd.s32 %v1056, 4294967192
    %v1146 = vlaneseq
    %v1147 = vshrl.u32 %v1146, 7
    %v1148 = vsub.s32 %v1145, %v1147
    %v1149 = vrot.slane %v1004, %v1148
    %vm1150 = vcmask 917312
    %v1151 = vsel %vm1150, %v1149, %v1144
    %v1152 = vadd.s32 %v1056, 4294967184
    %v1153 = vlaneseq
    %v1154 = vshrl.u32 %v1153, 7
    %v1155 = vsub.s32 %v1152, %v1154
    %v1156 = vrot.slane %v1005, %v1155
    %vm1157 = vcmask 982912
    %v1158 = vsel %vm1157, %v1156, %v1151
    %v1159 = vadd.s32 %v1056, 4294967176
    %v1160 = vlaneseq
    %v1161 = vshrl.u32 %v1160, 7
    %v1162 = vsub.s32 %v1159, %v1161
    %v1163 = vrot.slane %v1006, %v1162
    %vm1164 = vcmask 1048512
    %v1165 = vsel %vm1164, %v1163, %v1158
    %v1166 = vlaneseq
    %v1167 = vshrl.u32 %v1166, 7
    %v1168 = vsub.s32 %v1056, %v1167
    %v1169 = vrot.slane %v1007, %v1168
    %v1170 = vlaneseq
    %v1171 = vshrl.u32 %v1170, 7
    %v1172 = vsub.s32 %v1061, %v1171
    %v1173 = vrot.slane %v1008, %v1172
    %v1174 = vsel %vm1066, %v1173, %v1169
    %v1175 = vlaneseq
    %v1176 = vshrl.u32 %v1175, 7
    %v1177 = vsub.s32 %v1068, %v1176
    %v1178 = vrot.slane %v1009, %v1177
    %v1179 = vsel %vm1073, %v1178, %v1174
    %v1180 = vlaneseq
    %v1181 = vshrl.u32 %v1180, 7
    %v1182 = vsub.s32 %v1075, %v1181
    %v1183 = vrot.slane %v1010, %v1182
    %v1184 = vsel %vm1080, %v1183, %v1179
    %v1185 = vlaneseq
    %v1186 = vshrl.u32 %v1185, 7
    %v1187 = vsub.s32 %v1082, %v1186
    %v1188 = vrot.slane %v1011, %v1187
    %v1189 = vsel %vm1087, %v1188, %v1184
    %v1190 = vlaneseq
    %v1191 = vshrl.u32 %v1190, 7
    %v1192 = vsub.s32 %v1089, %v1191
    %v1193 = vrot.slane %v1012, %v1192
    %v1194 = vsel %vm1094, %v1193, %v1189
    %v1195 = vlaneseq
    %v1196 = vshrl.u32 %v1195, 7
    %v1197 = vsub.s32 %v1096, %v1196
    %v1198 = vrot.slane %v1013, %v1197
    %v1199 = vsel %vm1101, %v1198, %v1194
    %v1200 = vlaneseq
    %v1201 = vshrl.u32 %v1200, 7
    %v1202 = vsub.s32 %v1103, %v1201
    %v1203 = vrot.slane %v1014, %v1202
    %v1204 = vsel %vm1108, %v1203, %v1199
    %v1205 = vlaneseq
    %v1206 = vshrl.u32 %v1205, 7
    %v1207 = vsub.s32 %v1110, %v1206
    %v1208 = vrot.slane %v1015, %v1207
    %v1209 = vsel %vm1115, %v1208, %v1204
    %v1210 = vlaneseq
    %v1211 = vshrl.u32 %v1210, 7
    %v1212 = vsub.s32 %v1117, %v1211
    %v1213 = vrot.slane %v1016, %v1212
    %v1214 = vsel %vm1122, %v1213, %v1209
    %v1215 = vlaneseq
    %v1216 = vshrl.u32 %v1215, 7
    %v1217 = vsub.s32 %v1124, %v1216
    %v1218 = vrot.slane %v1017, %v1217
    %v1219 = vsel %vm1129, %v1218, %v1214
    %v1220 = vlaneseq
    %v1221 = vshrl.u32 %v1220, 7
    %v1222 = vsub.s32 %v1131, %v1221
    %v1223 = vrot.slane %v1018, %v1222
    %v1224 = vsel %vm1136, %v1223, %v1219
    %v1225 = vlaneseq
    %v1226 = vshrl.u32 %v1225, 7
    %v1227 = vsub.s32 %v1138, %v1226
    %v1228 = vrot.slane %v1019, %v1227
    %v1229 = vsel %vm1143, %v1228, %v1224
    %v1230 = vlaneseq
    %v1231 = vshrl.u32 %v1230, 7
    %v1232 = vsub.s32 %v1145, %v1231
    %v1233 = vrot.slane %v1020, %v1232
    %v1234 = vsel %vm1150, %v1233, %v1229
    %v1235 = vlaneseq
    %v1236 = vshrl.u32 %v1235, 7
    %v1237 = vsub.s32 %v1152, %v1236
    %v1238 = vrot.slane %v1021, %v1237
    %v1239 = vsel %vm1157, %v1238, %v1234
    %v1240 = vlaneseq
    %v1241 = vshrl.u32 %v1240, 7
    %v1242 = vsub.s32 %v1159, %v1241
    %v1243 = vrot.slane %v1022, %v1242
    %v1244 = vsel %vm1164, %v1243, %v1239
    %v1245 = vlaneseq
    %v1246 = vshrl.u32 %v1245, 7
    %v1247 = vsub.s32 %v1056, %v1246
    %v1248 = vrot.slane %v1023, %v1247
    %v1249 = vlaneseq
    %v1250 = vshrl.u32 %v1249, 7
    %v1251 = vsub.s32 %v1061, %v1250
    %v1252 = vrot.slane %v1024, %v1251
    %v1253 = vsel %vm1066, %v1252, %v1248
    %v1254 = vlaneseq
    %v1255 = vshrl.u32 %v1254, 7
    %v1256 = vsub.s32 %v1068, %v1255
    %v1257 = vrot.slane %v1025, %v1256
    %v1258 = vsel %vm1073, %v1257, %v1253
    %v1259 = vlaneseq
    %v1260 = vshrl.u32 %v1259, 7
    %v1261 = vsub.s32 %v1075, %v1260
    %v1262 = vrot.slane %v1026, %v1261
    %v1263 = vsel %vm1080, %v1262, %v1258
    %v1264 = vlaneseq
    %v1265 = vshrl.u32 %v1264, 7
    %v1266 = vsub.s32 %v1082, %v1265
    %v1267 = vrot.slane %v1027, %v1266
    %v1268 = vsel %vm1087, %v1267, %v1263
    %v1269 = vlaneseq
    %v1270 = vshrl.u32 %v1269, 7
    %v1271 = vsub.s32 %v1089, %v1270
    %v1272 = vrot.slane %v1028, %v1271
    %v1273 = vsel %vm1094, %v1272, %v1268
    %v1274 = vlaneseq
    %v1275 = vshrl.u32 %v1274, 7
    %v1276 = vsub.s32 %v1096, %v1275
    %v1277 = vrot.slane %v1029, %v1276
    %v1278 = vsel %vm1101, %v1277, %v1273
    %v1279 = vlaneseq
    %v1280 = vshrl.u32 %v1279, 7
    %v1281 = vsub.s32 %v1103, %v1280
    %v1282 = vrot.slane %v1030, %v1281
    %v1283 = vsel %vm1108, %v1282, %v1278
    %v1284 = vlaneseq
    %v1285 = vshrl.u32 %v1284, 7
    %v1286 = vsub.s32 %v1110, %v1285
    %v1287 = vrot.slane %v1031, %v1286
    %v1288 = vsel %vm1115, %v1287, %v1283
    %v1289 = vlaneseq
    %v1290 = vshrl.u32 %v1289, 7
    %v1291 = vsub.s32 %v1117, %v1290
    %v1292 = vrot.slane %v1032, %v1291
    %v1293 = vsel %vm1122, %v1292, %v1288
    %v1294 = vlaneseq
    %v1295 = vshrl.u32 %v1294, 7
    %v1296 = vsub.s32 %v1124, %v1295
    %v1297 = vrot.slane %v1033, %v1296
    %v1298 = vsel %vm1129, %v1297, %v1293
    %v1299 = vlaneseq
    %v1300 = vshrl.u32 %v1299, 7
    %v1301 = vsub.s32 %v1131, %v1300
    %v1302 = vrot.slane %v1034, %v1301
    %v1303 = vsel %vm1136, %v1302, %v1298
    %v1304 = vlaneseq
    %v1305 = vshrl.u32 %v1304, 7
    %v1306 = vsub.s32 %v1138, %v1305
    %v1307 = vrot.slane %v1035, %v1306
    %v1308 = vsel %vm1143, %v1307, %v1303
    %v1309 = vlaneseq
    %v1310 = vshrl.u32 %v1309, 7
    %v1311 = vsub.s32 %v1145, %v1310
    %v1312 = vrot.slane %v1036, %v1311
    %v1313 = vsel %vm1150, %v1312, %v1308
    %v1314 = vlaneseq
    %v1315 = vshrl.u32 %v1314, 7
    %v1316 = vsub.s32 %v1152, %v1315
    %v1317 = vrot.slane %v1037, %v1316
    %v1318 = vsel %vm1157, %v1317, %v1313
    %v1319 = vlaneseq
    %v1320 = vshrl.u32 %v1319, 7
    %v1321 = vsub.s32 %v1159, %v1320
    %v1322 = vrot.slane %v1038, %v1321
    %v1323 = vsel %vm1164, %v1322, %v1318
    %v1324 = vlaneseq
    %v1325 = vshrl.u32 %v1324, 7
    %v1326 = vsub.s32 %v1056, %v1325
    %v1327 = vrot.slane %v1039, %v1326
    %v1328 = vlaneseq
    %v1329 = vshrl.u32 %v1328, 7
    %v1330 = vsub.s32 %v1061, %v1329
    %v1331 = vrot.slane %v1040, %v1330
    %v1332 = vsel %vm1066, %v1331, %v1327
    %v1333 = vlaneseq
    %v1334 = vshrl.u32 %v1333, 7
    %v1335 = vsub.s32 %v1068, %v1334
    %v1336 = vrot.slane %v1041, %v1335
    %v1337 = vsel %vm1073, %v1336, %v1332
    %v1338 = vlaneseq
    %v1339 = vshrl.u32 %v1338, 7
    %v1340 = vsub.s32 %v1075, %v1339
    %v1341 = vrot.slane %v1042, %v1340
    %v1342 = vsel %vm1080, %v1341, %v1337
    %v1343 = vlaneseq
    %v1344 = vshrl.u32 %v1343, 7
    %v1345 = vsub.s32 %v1082, %v1344
    %v1346 = vrot.slane %v1043, %v1345
    %v1347 = vsel %vm1087, %v1346, %v1342
    %v1348 = vlaneseq
    %v1349 = vshrl.u32 %v1348, 7
    %v1350 = vsub.s32 %v1089, %v1349
    %v1351 = vrot.slane %v1044, %v1350
    %v1352 = vsel %vm1094, %v1351, %v1347
    %v1353 = vlaneseq
    %v1354 = vshrl.u32 %v1353, 7
    %v1355 = vsub.s32 %v1096, %v1354
    %v1356 = vrot.slane %v1045, %v1355
    %v1357 = vsel %vm1101, %v1356, %v1352
    %v1358 = vlaneseq
    %v1359 = vshrl.u32 %v1358, 7
    %v1360 = vsub.s32 %v1103, %v1359
    %v1361 = vrot.slane %v1046, %v1360
    %v1362 = vsel %vm1108, %v1361, %v1357
    %v1363 = vlaneseq
    %v1364 = vshrl.u32 %v1363, 7
    %v1365 = vsub.s32 %v1110, %v1364
    %v1366 = vrot.slane %v1047, %v1365
    %v1367 = vsel %vm1115, %v1366, %v1362
    %v1368 = vlaneseq
    %v1369 = vshrl.u32 %v1368, 7
    %v1370 = vsub.s32 %v1117, %v1369
    %v1371 = vrot.slane %v1048, %v1370
    %v1372 = vsel %vm1122, %v1371, %v1367
    %v1373 = vlaneseq
    %v1374 = vshrl.u32 %v1373, 7
    %v1375 = vsub.s32 %v1124, %v1374
    %v1376 = vrot.slane %v1049, %v1375
    %v1377 = vsel %vm1129, %v1376, %v1372
    %v1378 = vlaneseq
    %v1379 = vshrl.u32 %v1378, 7
    %v1380 = vsub.s32 %v1131, %v1379
    %v1381 = vrot.slane %v1050, %v1380
    %v1382 = vsel %vm1136, %v1381, %v1377
    %v1383 = vlaneseq
    %v1384 = vshrl.u32 %v1383, 7
    %v1385 = vsub.s32 %v1138, %v1384
    %v1386 = vrot.slane %v1051, %v1385
    %v1387 = vsel %vm1143, %v1386, %v1382
    %v1388 = vlaneseq
    %v1389 = vshrl.u32 %v1388, 7
    %v1390 = vsub.s32 %v1145, %v1389
    %v1391 = vrot.slane %v1052, %v1390
    %v1392 = vsel %vm1150, %v1391, %v1387
    %v1393 = vlaneseq
    %v1394 = vshrl.u32 %v1393, 7
    %v1395 = vsub.s32 %v1152, %v1394
    %v1396 = vrot.slane %v1053, %v1395
    %v1397 = vsel %vm1157, %v1396, %v1392
    %v1398 = vlaneseq
    %v1399 = vshrl.u32 %v1398, 7
    %v1400 = vsub.s32 %v1159, %v1399
    %v1401 = vrot.slane %v1054, %v1400
    %v1402 = vsel %vm1164, %v1401, %v1397
    %vm1403 = vcmask 1041409
    %v1404 = vsel %vm1403, %v1323, %v1165
    %v1405 = vsel %vm1403, %v1402, %v1244
    %v1406 = vpack.c.b16 %v1404, %v1404
    %v1407 = vpack.c.b16 %v1405, %v1405
    %v1442 = vunpack.c.l.b16 %v927
    %v1443 = vunpack.c.l.b16 %v928
    %v1444 = vunpack.c.l.b16 %v929
    %v1445 = vunpack.c.l.b16 %v930
    %v1446 = vunpack.c.l.b16 %v931
    %v1447 = vunpack.c.l.b16 %v932
    %v1448 = vunpack.c.l.b16 %v933
    %v1449 = vunpack.c.l.b16 %v934
    %v1450 = vunpack.c.l.b16 %v935
    %v1451 = vunpack.c.l.b16 %v936
    %v1452 = vunpack.c.l.b16 %v937
    %v1453 = vunpack.c.l.b16 %v938
    %v1454 = vunpack.c.l.b16 %v939
    %v1455 = vunpack.c.l.b16 %v940
    %v1456 = vunpack.c.l.b16 %v941
    %v1457 = vunpack.c.l.b16 %v942
    %v1458 = vunpack.c.l.b16 %v943
    %v1459 = vunpack.c.l.b16 %v944
    %v1460 = vunpack.c.l.b16 %v945
    %v1461 = vunpack.c.l.b16 %v946
    %v1462 = vunpack.c.l.b16 %v947
    %v1463 = vunpack.c.l.b16 %v948
    %v1464 = vunpack.c.l.b16 %v949
    %v1465 = vunpack.c.l.b16 %v950
    %v1466 = vunpack.c.l.b16 %v951
    %v1467 = vunpack.c.l.b16 %v952
    %v1468 = vunpack.c.l.b16 %v953
    %v1469 = vunpack.c.l.b16 %v954
    %v1470 = vunpack.c.l.b16 %v955
    %v1471 = vunpack.c.l.b16 %v956
    %v1472 = vunpack.c.l.b16 %v957
    %v1473 = vunpack.c.l.b16 %v958
    %v1474 = vpack.c.b16 %v1443, %v1442
    %v1475 = vpack.c.b16 %v1445, %v1444
    %v1476 = vpack.c.b16 %v1447, %v1446
    %v1477 = vpack.c.b16 %v1449, %v1448
    %v1478 = vpack.c.b16 %v1451, %v1450
    %v1479 = vpack.c.b16 %v1453, %v1452
    %v1480 = vpack.c.b16 %v1455, %v1454
    %v1481 = vpack.c.b16 %v1457, %v1456
    %v1482 = vpack.c.b16 %v1459, %v1458
    %v1483 = vpack.c.b16 %v1461, %v1460
    %v1484 = vpack.c.b16 %v1463, %v1462
    %v1485 = vpack.c.b16 %v1465, %v1464
    %v1486 = vpack.c.b16 %v1467, %v1466
    %v1487 = vpack.c.b16 %v1469, %v1468
    %v1488 = vpack.c.b16 %v1471, %v1470
    %v1489 = vpack.c.b16 %v1473, %v1472
    %1506 = vmatprep.subr.bf16.mxu0 0
    %1507 = vmatpush1.bf16.msra.mxu0 %v1481
    %1508 = vmatprep.subr.bf16.mxu0 0
    %1509 = vmatpush1.bf16.msra.mxu0 %v1480
    %1510 = vmatprep.subr.bf16.mxu0 0
    %1511 = vmatpush1.bf16.msra.mxu0 %v1479
    %1512 = vmatprep.subr.bf16.mxu0 0
    %1513 = vmatpush1.bf16.msra.mxu0 %v1478
    %1514 = vmatprep.subr.bf16.mxu0 0
    %1515 = vmatpush1.bf16.msra.mxu0 %v1477
    %1516 = vmatprep.subr.bf16.mxu0 0
    %1517 = vmatpush1.bf16.msra.mxu0 %v1476
    %1518 = vmatprep.subr.bf16.mxu0 0
    %1519 = vmatpush1.bf16.msra.mxu0 %v1475
    %1520 = vmatprep.subr.bf16.mxu0 0
    %1521 = vmatpush1.bf16.msra.mxu0 %v1474
    %1522 = vmatprep.subr.bf16.mxu0 0
    %1523 = vmatpush2.bf16.msra.mxu0 %v1489
    %1524 = vmatprep.subr.bf16.mxu0 0
    %1525 = vmatpush2.bf16.msra.mxu0 %v1488
    %1526 = vmatprep.subr.bf16.mxu0 0
    %1527 = vmatpush2.bf16.msra.mxu0 %v1487
    %1528 = vmatprep.subr.bf16.mxu0 0
    %1529 = vmatpush2.bf16.msra.mxu0 %v1486
    %1530 = vmatprep.subr.bf16.mxu0 0
    %1531 = vmatpush2.bf16.msra.mxu0 %v1485
    %1532 = vmatprep.subr.bf16.mxu0 0
    %1533 = vmatpush2.bf16.msra.mxu0 %v1484
    %1534 = vmatprep.subr.bf16.mxu0 0
    %1535 = vmatpush2.bf16.msra.mxu0 %v1483
    %1536 = vmatprep.subr.bf16.mxu0 0
    %1537 = vmatpush2.bf16.msra.mxu0 %v1482
    %1538 = vmatprep.mubr.bf16.mxu0 %v1407
    %1539 = vmatmul.mubr.bf16.gmra.mxu0 %v1406
    %v1540 = vpop.f32.mrf.mxu0
    %v1541 = vadd.f32 0.0, %v1540
    %v1542 = vpop.f32.mrf.mxu0
    %v1543 = vpop.f32.mrf.mxu0
    %v1544 = vpop.f32.mrf.mxu0
    %1545 = vdwg.mxu0
    %v1578 = vunpack.c.l.b16 %v639
    %v1579 = vunpack.c.h.b16 %v639
    %v1580 = vunpack.c.l.b16 %v640
    %v1581 = vunpack.c.h.b16 %v640
    %v1582 = vunpack.c.l.b16 %v641
    %v1583 = vunpack.c.h.b16 %v641
    %v1584 = vunpack.c.l.b16 %v642
    %v1585 = vunpack.c.h.b16 %v642
    %v1586 = vunpack.c.l.b16 %v643
    %v1587 = vunpack.c.h.b16 %v643
    %v1588 = vunpack.c.l.b16 %v644
    %v1589 = vunpack.c.h.b16 %v644
    %v1590 = vunpack.c.l.b16 %v645
    %v1591 = vunpack.c.h.b16 %v645
    %v1592 = vunpack.c.l.b16 %v646
    %v1593 = vunpack.c.h.b16 %v646
    %v1594 = vunpack.c.l.b16 %v647
    %v1595 = vunpack.c.h.b16 %v647
    %v1596 = vunpack.c.l.b16 %v648
    %v1597 = vunpack.c.h.b16 %v648
    %v1598 = vunpack.c.l.b16 %v649
    %v1599 = vunpack.c.h.b16 %v649
    %v1600 = vunpack.c.l.b16 %v650
    %v1601 = vunpack.c.h.b16 %v650
    %v1602 = vunpack.c.l.b16 %v651
    %v1603 = vunpack.c.h.b16 %v651
    %v1604 = vunpack.c.l.b16 %v652
    %v1605 = vunpack.c.h.b16 %v652
    %v1606 = vunpack.c.l.b16 %v653
    %v1607 = vunpack.c.h.b16 %v653
    %v1608 = vunpack.c.l.b16 %v654
    %v1609 = vunpack.c.h.b16 %v654
    %v1610 = vunpack.c.l.b16 %v655
    %v1611 = vunpack.c.h.b16 %v655
    %v1612 = vunpack.c.l.b16 %v656
    %v1613 = vunpack.c.h.b16 %v656
    %v1614 = vunpack.c.l.b16 %v657
    %v1615 = vunpack.c.h.b16 %v657
    %v1616 = vunpack.c.l.b16 %v658
    %v1617 = vunpack.c.h.b16 %v658
    %v1618 = vunpack.c.l.b16 %v659
    %v1619 = vunpack.c.h.b16 %v659
    %v1620 = vunpack.c.l.b16 %v660
    %v1621 = vunpack.c.h.b16 %v660
    %v1622 = vunpack.c.l.b16 %v661
    %v1623 = vunpack.c.h.b16 %v661
    %v1624 = vunpack.c.l.b16 %v662
    %v1625 = vunpack.c.h.b16 %v662
    %v1626 = vunpack.c.l.b16 %v663
    %v1627 = vunpack.c.h.b16 %v663
    %v1628 = vunpack.c.l.b16 %v664
    %v1629 = vunpack.c.h.b16 %v664
    %v1630 = vunpack.c.l.b16 %v665
    %v1631 = vunpack.c.h.b16 %v665
    %v1632 = vunpack.c.l.b16 %v666
    %v1633 = vunpack.c.h.b16 %v666
    %v1634 = vunpack.c.l.b16 %v667
    %v1635 = vunpack.c.h.b16 %v667
    %v1636 = vunpack.c.l.b16 %v668
    %v1637 = vunpack.c.h.b16 %v668
    %v1638 = vunpack.c.l.b16 %v669
    %v1639 = vunpack.c.h.b16 %v669
    %v1640 = vunpack.c.l.b16 %v670
    %v1641 = vunpack.c.h.b16 %v670
    %v1642 = vlaneseq
    %v1643 = vshrl.u32 %v1642, 7
    %v1644 = vsub.s32 %v1056, %v1643
    %v1645 = vrot.slane %v1578, %v1644
    %v1646 = vlaneseq
    %v1647 = vshrl.u32 %v1646, 7
    %v1648 = vsub.s32 %v1061, %v1647
    %v1649 = vrot.slane %v1579, %v1648
    %v1650 = vsel %vm1066, %v1649, %v1645
    %v1651 = vlaneseq
    %v1652 = vshrl.u32 %v1651, 7
    %v1653 = vsub.s32 %v1068, %v1652
    %v1654 = vrot.slane %v1580, %v1653
    %v1655 = vsel %vm1073, %v1654, %v1650
    %v1656 = vlaneseq
    %v1657 = vshrl.u32 %v1656, 7
    %v1658 = vsub.s32 %v1075, %v1657
    %v1659 = vrot.slane %v1581, %v1658
    %v1660 = vsel %vm1080, %v1659, %v1655
    %v1661 = vlaneseq
    %v1662 = vshrl.u32 %v1661, 7
    %v1663 = vsub.s32 %v1082, %v1662
    %v1664 = vrot.slane %v1582, %v1663
    %v1665 = vsel %vm1087, %v1664, %v1660
    %v1666 = vlaneseq
    %v1667 = vshrl.u32 %v1666, 7
    %v1668 = vsub.s32 %v1089, %v1667
    %v1669 = vrot.slane %v1583, %v1668
    %v1670 = vsel %vm1094, %v1669, %v1665
    %v1671 = vlaneseq
    %v1672 = vshrl.u32 %v1671, 7
    %v1673 = vsub.s32 %v1096, %v1672
    %v1674 = vrot.slane %v1584, %v1673
    %v1675 = vsel %vm1101, %v1674, %v1670
    %v1676 = vlaneseq
    %v1677 = vshrl.u32 %v1676, 7
    %v1678 = vsub.s32 %v1103, %v1677
    %v1679 = vrot.slane %v1585, %v1678
    %v1680 = vsel %vm1108, %v1679, %v1675
    %v1681 = vlaneseq
    %v1682 = vshrl.u32 %v1681, 7
    %v1683 = vsub.s32 %v1110, %v1682
    %v1684 = vrot.slane %v1586, %v1683
    %v1685 = vsel %vm1115, %v1684, %v1680
    %v1686 = vlaneseq
    %v1687 = vshrl.u32 %v1686, 7
    %v1688 = vsub.s32 %v1117, %v1687
    %v1689 = vrot.slane %v1587, %v1688
    %v1690 = vsel %vm1122, %v1689, %v1685
    %v1691 = vlaneseq
    %v1692 = vshrl.u32 %v1691, 7
    %v1693 = vsub.s32 %v1124, %v1692
    %v1694 = vrot.slane %v1588, %v1693
    %v1695 = vsel %vm1129, %v1694, %v1690
    %v1696 = vlaneseq
    %v1697 = vshrl.u32 %v1696, 7
    %v1698 = vsub.s32 %v1131, %v1697
    %v1699 = vrot.slane %v1589, %v1698
    %v1700 = vsel %vm1136, %v1699, %v1695
    %v1701 = vlaneseq
    %v1702 = vshrl.u32 %v1701, 7
    %v1703 = vsub.s32 %v1138, %v1702
    %v1704 = vrot.slane %v1590, %v1703
    %v1705 = vsel %vm1143, %v1704, %v1700
    %v1706 = vlaneseq
    %v1707 = vshrl.u32 %v1706, 7
    %v1708 = vsub.s32 %v1145, %v1707
    %v1709 = vrot.slane %v1591, %v1708
    %v1710 = vsel %vm1150, %v1709, %v1705
    %v1711 = vlaneseq
    %v1712 = vshrl.u32 %v1711, 7
    %v1713 = vsub.s32 %v1152, %v1712
    %v1714 = vrot.slane %v1592, %v1713
    %v1715 = vsel %vm1157, %v1714, %v1710
    %v1716 = vlaneseq
    %v1717 = vshrl.u32 %v1716, 7
    %v1718 = vsub.s32 %v1159, %v1717
    %v1719 = vrot.slane %v1593, %v1718
    %v1720 = vsel %vm1164, %v1719, %v1715
    %v1721 = vlaneseq
    %v1722 = vshrl.u32 %v1721, 7
    %v1723 = vsub.s32 %v1056, %v1722
    %v1724 = vrot.slane %v1594, %v1723
    %v1725 = vlaneseq
    %v1726 = vshrl.u32 %v1725, 7
    %v1727 = vsub.s32 %v1061, %v1726
    %v1728 = vrot.slane %v1595, %v1727
    %v1729 = vsel %vm1066, %v1728, %v1724
    %v1730 = vlaneseq
    %v1731 = vshrl.u32 %v1730, 7
    %v1732 = vsub.s32 %v1068, %v1731
    %v1733 = vrot.slane %v1596, %v1732
    %v1734 = vsel %vm1073, %v1733, %v1729
    %v1735 = vlaneseq
    %v1736 = vshrl.u32 %v1735, 7
    %v1737 = vsub.s32 %v1075, %v1736
    %v1738 = vrot.slane %v1597, %v1737
    %v1739 = vsel %vm1080, %v1738, %v1734
    %v1740 = vlaneseq
    %v1741 = vshrl.u32 %v1740, 7
    %v1742 = vsub.s32 %v1082, %v1741
    %v1743 = vrot.slane %v1598, %v1742
    %v1744 = vsel %vm1087, %v1743, %v1739
    %v1745 = vlaneseq
    %v1746 = vshrl.u32 %v1745, 7
    %v1747 = vsub.s32 %v1089, %v1746
    %v1748 = vrot.slane %v1599, %v1747
    %v1749 = vsel %vm1094, %v1748, %v1744
    %v1750 = vlaneseq
    %v1751 = vshrl.u32 %v1750, 7
    %v1752 = vsub.s32 %v1096, %v1751
    %v1753 = vrot.slane %v1600, %v1752
    %v1754 = vsel %vm1101, %v1753, %v1749
    %v1755 = vlaneseq
    %v1756 = vshrl.u32 %v1755, 7
    %v1757 = vsub.s32 %v1103, %v1756
    %v1758 = vrot.slane %v1601, %v1757
    %v1759 = vsel %vm1108, %v1758, %v1754
    %v1760 = vlaneseq
    %v1761 = vshrl.u32 %v1760, 7
    %v1762 = vsub.s32 %v1110, %v1761
    %v1763 = vrot.slane %v1602, %v1762
    %v1764 = vsel %vm1115, %v1763, %v1759
    %v1765 = vlaneseq
    %v1766 = vshrl.u32 %v1765, 7
    %v1767 = vsub.s32 %v1117, %v1766
    %v1768 = vrot.slane %v1603, %v1767
    %v1769 = vsel %vm1122, %v1768, %v1764
    %v1770 = vlaneseq
    %v1771 = vshrl.u32 %v1770, 7
    %v1772 = vsub.s32 %v1124, %v1771
    %v1773 = vrot.slane %v1604, %v1772
    %v1774 = vsel %vm1129, %v1773, %v1769
    %v1775 = vlaneseq
    %v1776 = vshrl.u32 %v1775, 7
    %v1777 = vsub.s32 %v1131, %v1776
    %v1778 = vrot.slane %v1605, %v1777
    %v1779 = vsel %vm1136, %v1778, %v1774
    %v1780 = vlaneseq
    %v1781 = vshrl.u32 %v1780, 7
    %v1782 = vsub.s32 %v1138, %v1781
    %v1783 = vrot.slane %v1606, %v1782
    %v1784 = vsel %vm1143, %v1783, %v1779
    %v1785 = vlaneseq
    %v1786 = vshrl.u32 %v1785, 7
    %v1787 = vsub.s32 %v1145, %v1786
    %v1788 = vrot.slane %v1607, %v1787
    %v1789 = vsel %vm1150, %v1788, %v1784
    %v1790 = vlaneseq
    %v1791 = vshrl.u32 %v1790, 7
    %v1792 = vsub.s32 %v1152, %v1791
    %v1793 = vrot.slane %v1608, %v1792
    %v1794 = vsel %vm1157, %v1793, %v1789
    %v1795 = vlaneseq
    %v1796 = vshrl.u32 %v1795, 7
    %v1797 = vsub.s32 %v1159, %v1796
    %v1798 = vrot.slane %v1609, %v1797
    %v1799 = vsel %vm1164, %v1798, %v1794
    %v1800 = vlaneseq
    %v1801 = vshrl.u32 %v1800, 7
    %v1802 = vsub.s32 %v1056, %v1801
    %v1803 = vrot.slane %v1610, %v1802
    %v1804 = vlaneseq
    %v1805 = vshrl.u32 %v1804, 7
    %v1806 = vsub.s32 %v1061, %v1805
    %v1807 = vrot.slane %v1611, %v1806
    %v1808 = vsel %vm1066, %v1807, %v1803
    %v1809 = vlaneseq
    %v1810 = vshrl.u32 %v1809, 7
    %v1811 = vsub.s32 %v1068, %v1810
    %v1812 = vrot.slane %v1612, %v1811
    %v1813 = vsel %vm1073, %v1812, %v1808
    %v1814 = vlaneseq
    %v1815 = vshrl.u32 %v1814, 7
    %v1816 = vsub.s32 %v1075, %v1815
    %v1817 = vrot.slane %v1613, %v1816
    %v1818 = vsel %vm1080, %v1817, %v1813
    %v1819 = vlaneseq
    %v1820 = vshrl.u32 %v1819, 7
    %v1821 = vsub.s32 %v1082, %v1820
    %v1822 = vrot.slane %v1614, %v1821
    %v1823 = vsel %vm1087, %v1822, %v1818
    %v1824 = vlaneseq
    %v1825 = vshrl.u32 %v1824, 7
    %v1826 = vsub.s32 %v1089, %v1825
    %v1827 = vrot.slane %v1615, %v1826
    %v1828 = vsel %vm1094, %v1827, %v1823
    %v1829 = vlaneseq
    %v1830 = vshrl.u32 %v1829, 7
    %v1831 = vsub.s32 %v1096, %v1830
    %v1832 = vrot.slane %v1616, %v1831
    %v1833 = vsel %vm1101, %v1832, %v1828
    %v1834 = vlaneseq
    %v1835 = vshrl.u32 %v1834, 7
    %v1836 = vsub.s32 %v1103, %v1835
    %v1837 = vrot.slane %v1617, %v1836
    %v1838 = vsel %vm1108, %v1837, %v1833
    %v1839 = vlaneseq
    %v1840 = vshrl.u32 %v1839, 7
    %v1841 = vsub.s32 %v1110, %v1840
    %v1842 = vrot.slane %v1618, %v1841
    %v1843 = vsel %vm1115, %v1842, %v1838
    %v1844 = vlaneseq
    %v1845 = vshrl.u32 %v1844, 7
    %v1846 = vsub.s32 %v1117, %v1845
    %v1847 = vrot.slane %v1619, %v1846
    %v1848 = vsel %vm1122, %v1847, %v1843
    %v1849 = vlaneseq
    %v1850 = vshrl.u32 %v1849, 7
    %v1851 = vsub.s32 %v1124, %v1850
    %v1852 = vrot.slane %v1620, %v1851
    %v1853 = vsel %vm1129, %v1852, %v1848
    %v1854 = vlaneseq
    %v1855 = vshrl.u32 %v1854, 7
    %v1856 = vsub.s32 %v1131, %v1855
    %v1857 = vrot.slane %v1621, %v1856
    %v1858 = vsel %vm1136, %v1857, %v1853
    %v1859 = vlaneseq
    %v1860 = vshrl.u32 %v1859, 7
    %v1861 = vsub.s32 %v1138, %v1860
    %v1862 = vrot.slane %v1622, %v1861
    %v1863 = vsel %vm1143, %v1862, %v1858
    %v1864 = vlaneseq
    %v1865 = vshrl.u32 %v1864, 7
    %v1866 = vsub.s32 %v1145, %v1865
    %v1867 = vrot.slane %v1623, %v1866
    %v1868 = vsel %vm1150, %v1867, %v1863
    %v1869 = vlaneseq
    %v1870 = vshrl.u32 %v1869, 7
    %v1871 = vsub.s32 %v1152, %v1870
    %v1872 = vrot.slane %v1624, %v1871
    %v1873 = vsel %vm1157, %v1872, %v1868
    %v1874 = vlaneseq
    %v1875 = vshrl.u32 %v1874, 7
    %v1876 = vsub.s32 %v1159, %v1875
    %v1877 = vrot.slane %v1625, %v1876
    %v1878 = vsel %vm1164, %v1877, %v1873
    %v1879 = vlaneseq
    %v1880 = vshrl.u32 %v1879, 7
    %v1881 = vsub.s32 %v1056, %v1880
    %v1882 = vrot.slane %v1626, %v1881
    %v1883 = vlaneseq
    %v1884 = vshrl.u32 %v1883, 7
    %v1885 = vsub.s32 %v1061, %v1884
    %v1886 = vrot.slane %v1627, %v1885
    %v1887 = vsel %vm1066, %v1886, %v1882
    %v1888 = vlaneseq
    %v1889 = vshrl.u32 %v1888, 7
    %v1890 = vsub.s32 %v1068, %v1889
    %v1891 = vrot.slane %v1628, %v1890
    %v1892 = vsel %vm1073, %v1891, %v1887
    %v1893 = vlaneseq
    %v1894 = vshrl.u32 %v1893, 7
    %v1895 = vsub.s32 %v1075, %v1894
    %v1896 = vrot.slane %v1629, %v1895
    %v1897 = vsel %vm1080, %v1896, %v1892
    %v1898 = vlaneseq
    %v1899 = vshrl.u32 %v1898, 7
    %v1900 = vsub.s32 %v1082, %v1899
    %v1901 = vrot.slane %v1630, %v1900
    %v1902 = vsel %vm1087, %v1901, %v1897
    %v1903 = vlaneseq
    %v1904 = vshrl.u32 %v1903, 7
    %v1905 = vsub.s32 %v1089, %v1904
    %v1906 = vrot.slane %v1631, %v1905
    %v1907 = vsel %vm1094, %v1906, %v1902
    %v1908 = vlaneseq
    %v1909 = vshrl.u32 %v1908, 7
    %v1910 = vsub.s32 %v1096, %v1909
    %v1911 = vrot.slane %v1632, %v1910
    %v1912 = vsel %vm1101, %v1911, %v1907
    %v1913 = vlaneseq
    %v1914 = vshrl.u32 %v1913, 7
    %v1915 = vsub.s32 %v1103, %v1914
    %v1916 = vrot.slane %v1633, %v1915
    %v1917 = vsel %vm1108, %v1916, %v1912
    %v1918 = vlaneseq
    %v1919 = vshrl.u32 %v1918, 7
    %v1920 = vsub.s32 %v1110, %v1919
    %v1921 = vrot.slane %v1634, %v1920
    %v1922 = vsel %vm1115, %v1921, %v1917
    %v1923 = vlaneseq
    %v1924 = vshrl.u32 %v1923, 7
    %v1925 = vsub.s32 %v1117, %v1924
    %v1926 = vrot.slane %v1635, %v1925
    %v1927 = vsel %vm1122, %v1926, %v1922
    %v1928 = vlaneseq
    %v1929 = vshrl.u32 %v1928, 7
    %v1930 = vsub.s32 %v1124, %v1929
    %v1931 = vrot.slane %v1636, %v1930
    %v1932 = vsel %vm1129, %v1931, %v1927
    %v1933 = vlaneseq
    %v1934 = vshrl.u32 %v1933, 7
    %v1935 = vsub.s32 %v1131, %v1934
    %v1936 = vrot.slane %v1637, %v1935
    %v1937 = vsel %vm1136, %v1936, %v1932
    %v1938 = vlaneseq
    %v1939 = vshrl.u32 %v1938, 7
    %v1940 = vsub.s32 %v1138, %v1939
    %v1941 = vrot.slane %v1638, %v1940
    %v1942 = vsel %vm1143, %v1941, %v1937
    %v1943 = vlaneseq
    %v1944 = vshrl.u32 %v1943, 7
    %v1945 = vsub.s32 %v1145, %v1944
    %v1946 = vrot.slane %v1639, %v1945
    %v1947 = vsel %vm1150, %v1946, %v1942
    %v1948 = vlaneseq
    %v1949 = vshrl.u32 %v1948, 7
    %v1950 = vsub.s32 %v1152, %v1949
    %v1951 = vrot.slane %v1640, %v1950
    %v1952 = vsel %vm1157, %v1951, %v1947
    %v1953 = vlaneseq
    %v1954 = vshrl.u32 %v1953, 7
    %v1955 = vsub.s32 %v1159, %v1954
    %v1956 = vrot.slane %v1641, %v1955
    %v1957 = vsel %vm1164, %v1956, %v1952
    %v1958 = vsel %vm1403, %v1878, %v1720
    %v1959 = vsel %vm1403, %v1957, %v1799
    %v1960 = vpack.c.b16 %v1958, %v1958
    %v1961 = vpack.c.b16 %v1959, %v1959
    %v1996 = vunpack.c.l.b16 %v895
    %v1997 = vunpack.c.l.b16 %v896
    %v1998 = vunpack.c.l.b16 %v897
    %v1999 = vunpack.c.l.b16 %v898
    %v2000 = vunpack.c.l.b16 %v899
    %v2001 = vunpack.c.l.b16 %v900
    %v2002 = vunpack.c.l.b16 %v901
    %v2003 = vunpack.c.l.b16 %v902
    %v2004 = vunpack.c.l.b16 %v903
    %v2005 = vunpack.c.l.b16 %v904
    %v2006 = vunpack.c.l.b16 %v905
    %v2007 = vunpack.c.l.b16 %v906
    %v2008 = vunpack.c.l.b16 %v907
    %v2009 = vunpack.c.l.b16 %v908
    %v2010 = vunpack.c.l.b16 %v909
    %v2011 = vunpack.c.l.b16 %v910
    %v2012 = vunpack.c.l.b16 %v911
    %v2013 = vunpack.c.l.b16 %v912
    %v2014 = vunpack.c.l.b16 %v913
    %v2015 = vunpack.c.l.b16 %v914
    %v2016 = vunpack.c.l.b16 %v915
    %v2017 = vunpack.c.l.b16 %v916
    %v2018 = vunpack.c.l.b16 %v917
    %v2019 = vunpack.c.l.b16 %v918
    %v2020 = vunpack.c.l.b16 %v919
    %v2021 = vunpack.c.l.b16 %v920
    %v2022 = vunpack.c.l.b16 %v921
    %v2023 = vunpack.c.l.b16 %v922
    %v2024 = vunpack.c.l.b16 %v923
    %v2025 = vunpack.c.l.b16 %v924
    %v2026 = vunpack.c.l.b16 %v925
    %v2027 = vunpack.c.l.b16 %v926
    %v2028 = vpack.c.b16 %v1997, %v1996
    %v2029 = vpack.c.b16 %v1999, %v1998
    %v2030 = vpack.c.b16 %v2001, %v2000
    %v2031 = vpack.c.b16 %v2003, %v2002
    %v2032 = vpack.c.b16 %v2005, %v2004
    %v2033 = vpack.c.b16 %v2007, %v2006
    %v2034 = vpack.c.b16 %v2009, %v2008
    %v2035 = vpack.c.b16 %v2011, %v2010
    %v2036 = vpack.c.b16 %v2013, %v2012
    %v2037 = vpack.c.b16 %v2015, %v2014
    %v2038 = vpack.c.b16 %v2017, %v2016
    %v2039 = vpack.c.b16 %v2019, %v2018
    %v2040 = vpack.c.b16 %v2021, %v2020
    %v2041 = vpack.c.b16 %v2023, %v2022
    %v2042 = vpack.c.b16 %v2025, %v2024
    %v2043 = vpack.c.b16 %v2027, %v2026
    %2060 = vmatprep.subr.bf16.mxu0 0
    %2061 = vmatpush1.bf16.msra.mxu0 %v2035
    %2062 = vmatprep.subr.bf16.mxu0 0
    %2063 = vmatpush1.bf16.msra.mxu0 %v2034
    %2064 = vmatprep.subr.bf16.mxu0 0
    %2065 = vmatpush1.bf16.msra.mxu0 %v2033
    %2066 = vmatprep.subr.bf16.mxu0 0
    %2067 = vmatpush1.bf16.msra.mxu0 %v2032
    %2068 = vmatprep.subr.bf16.mxu0 0
    %2069 = vmatpush1.bf16.msra.mxu0 %v2031
    %2070 = vmatprep.subr.bf16.mxu0 0
    %2071 = vmatpush1.bf16.msra.mxu0 %v2030
    %2072 = vmatprep.subr.bf16.mxu0 0
    %2073 = vmatpush1.bf16.msra.mxu0 %v2029
    %2074 = vmatprep.subr.bf16.mxu0 0
    %2075 = vmatpush1.bf16.msra.mxu0 %v2028
    %2076 = vmatprep.subr.bf16.mxu0 0
    %2077 = vmatpush2.bf16.msra.mxu0 %v2043
    %2078 = vmatprep.subr.bf16.mxu0 0
    %2079 = vmatpush2.bf16.msra.mxu0 %v2042
    %2080 = vmatprep.subr.bf16.mxu0 0
    %2081 = vmatpush2.bf16.msra.mxu0 %v2041
    %2082 = vmatprep.subr.bf16.mxu0 0
    %2083 = vmatpush2.bf16.msra.mxu0 %v2040
    %2084 = vmatprep.subr.bf16.mxu0 0
    %2085 = vmatpush2.bf16.msra.mxu0 %v2039
    %2086 = vmatprep.subr.bf16.mxu0 0
    %2087 = vmatpush2.bf16.msra.mxu0 %v2038
    %2088 = vmatprep.subr.bf16.mxu0 0
    %2089 = vmatpush2.bf16.msra.mxu0 %v2037
    %2090 = vmatprep.subr.bf16.mxu0 0
    %2091 = vmatpush2.bf16.msra.mxu0 %v2036
    %2092 = vmatprep.mubr.bf16.mxu0 %v1961
    %2093 = vmatmul.mubr.bf16.gmra.mxu0 %v1960
    %v2094 = vpop.f32.mrf.mxu0
    %v2095 = vadd.f32 %v1541, %v2094
    %v2096 = vpop.f32.mrf.mxu0
    %v2097 = vpop.f32.mrf.mxu0
    %v2098 = vpop.f32.mrf.mxu0
    %2099 = vdwg.mxu0
    %v2101 = vlaneseq
    %v2102 = vshrl.u32 %v2101, 7
    %v2103 = vsub.s32 0, %v2102
    %v2104 = vrot.slane %v303, %v2103
    %v2106 = vadd.f32 %v2095, %v2104
    %v2107 = vpack.c.bf16 %v2106, %v2106
    %v2108 = vld [vmem:[#allocation7 + $0x100] sm:$0xf]
    %v2109 = vld [vmem:[#allocation7 + $0x104] sm:$0xf]
    %v2110 = vld [vmem:[#allocation7 + $0x108] sm:$0xf]
    %v2111 = vld [vmem:[#allocation7 + $0x10c] sm:$0xf]
    %v2112 = vld [vmem:[#allocation7 + $0x110] sm:$0xf]
    %v2113 = vld [vmem:[#allocation7 + $0x114] sm:$0xf]
    %v2114 = vld [vmem:[#allocation7 + $0x118] sm:$0xf]
    %v2115 = vld [vmem:[#allocation7 + $0x11c] sm:$0xf]
    %v2116 = vld [vmem:[#allocation7 + $0x120] sm:$0xf]
    %v2117 = vld [vmem:[#allocation7 + $0x124] sm:$0xf]
    %v2118 = vld [vmem:[#allocation7 + $0x128] sm:$0xf]
    %v2119 = vld [vmem:[#allocation7 + $0x12c] sm:$0xf]
    %v2120 = vld [vmem:[#allocation7 + $0x130] sm:$0xf]
    %v2121 = vld [vmem:[#allocation7 + $0x134] sm:$0xf]
    %v2122 = vld [vmem:[#allocation7 + $0x138] sm:$0xf]
    %v2123 = vld [vmem:[#allocation7 + $0x13c] sm:$0xf]
    %v2124 = vld [vmem:[%s1] sm:$0x3]
    %v2125 = vpack.c.bf16 %v2124, %v2124
    %v2126 = vld [vmem:[#allocation7 + $0x140] sm:$0xf]
    %v2127 = vld [vmem:[#allocation7 + $0x144] sm:$0xf]
    %v2128 = vld [vmem:[#allocation7 + $0x148] sm:$0xf]
    %v2129 = vld [vmem:[#allocation7 + $0x14c] sm:$0xf]
    %v2134 = vunpack.c.l.b16 %v2126
    %v2135 = vunpack.c.l.b16 %v2127
    %v2136 = vunpack.c.l.b16 %v2128
    %v2137 = vunpack.c.l.b16 %v2129
    %v2138 = vpack.c.b16 %v2135, %v2134
    %v2139 = vpack.c.b16 %v2137, %v2136
    %vm2142 = vcmask 261120
    %v2144 = vsel %vm2142, %v2125, 0
    %2146 = vmatprep.subr.bf16.mxu0 0
    %2147 = vmatpush1.bf16.msra.mxu0 0
    %2148 = vmatprep.subr.bf16.mxu0 0
    %2149 = vmatpush1.bf16.msra.mxu0 0
    %2150 = vmatprep.subr.bf16.mxu0 0
    %2151 = vmatpush1.bf16.msra.mxu0 0
    %2152 = vmatprep.subr.bf16.mxu0 0
    %2153 = vmatpush1.bf16.msra.mxu0 0
    %2154 = vmatprep.subr.bf16.mxu0 0
    %2155 = vmatpush1.bf16.msra.mxu0 0
    %2156 = vmatprep.subr.bf16.mxu0 0
    %2157 = vmatpush1.bf16.msra.mxu0 0
    %2158 = vmatprep.subr.bf16.mxu0 0
    %2159 = vmatpush1.bf16.msra.mxu0 %v2139
    %2160 = vmatprep.subr.bf16.mxu0 0
    %2161 = vmatpush1.bf16.msra.mxu0 %v2138
    %2162 = vmatprep.subr.bf16.mxu0 0
    %2163 = vmatpush2.bf16.msra.mxu0 0
    %2164 = vmatprep.subr.bf16.mxu0 0
    %2165 = vmatpush2.bf16.msra.mxu0 0
    %2166 = vmatprep.subr.bf16.mxu0 0
    %2167 = vmatpush2.bf16.msra.mxu0 0
    %2168 = vmatprep.subr.bf16.mxu0 0
    %2169 = vmatpush2.bf16.msra.mxu0 0
    %2170 = vmatprep.subr.bf16.mxu0 0
    %2171 = vmatpush2.bf16.msra.mxu0 0
    %2172 = vmatprep.subr.bf16.mxu0 0
    %2173 = vmatpush2.bf16.msra.mxu0 0
    %2174 = vmatprep.subr.bf16.mxu0 0
    %2175 = vmatpush2.bf16.msra.mxu0 0
    %2176 = vmatprep.subr.bf16.mxu0 0
    %2177 = vmatpush2.bf16.msra.mxu0 0
    %2178 = vmatprep.mubr.bf16.mxu0 0
    %2179 = vmatmul.mubr.bf16.gmra.mxu0 %v2144
    %v2180 = vpop.f32.mrf.mxu0
    %v2181 = vadd.f32 0.0, %v2180
    %v2182 = vpop.f32.mrf.mxu0
    %v2183 = vpop.f32.mrf.mxu0
    %v2184 = vpop.f32.mrf.mxu0
    %2185 = vdwg.mxu0
    %v2202 = vunpack.c.l.b16 %v2108
    %v2203 = vunpack.c.l.b16 %v2109
    %v2204 = vunpack.c.l.b16 %v2110
    %v2205 = vunpack.c.l.b16 %v2111
    %v2206 = vunpack.c.l.b16 %v2112
    %v2207 = vunpack.c.l.b16 %v2113
    %v2208 = vunpack.c.l.b16 %v2114
    %v2209 = vunpack.c.l.b16 %v2115
    %v2210 = vunpack.c.l.b16 %v2116
    %v2211 = vunpack.c.l.b16 %v2117
    %v2212 = vunpack.c.l.b16 %v2118
    %v2213 = vunpack.c.l.b16 %v2119
    %v2214 = vunpack.c.l.b16 %v2120
    %v2215 = vunpack.c.l.b16 %v2121
    %v2216 = vunpack.c.l.b16 %v2122
    %v2217 = vunpack.c.l.b16 %v2123
    %v2218 = vpack.c.b16 %v2203, %v2202
    %v2219 = vpack.c.b16 %v2205, %v2204
    %v2220 = vpack.c.b16 %v2207, %v2206
    %v2221 = vpack.c.b16 %v2209, %v2208
    %v2222 = vpack.c.b16 %v2211, %v2210
    %v2223 = vpack.c.b16 %v2213, %v2212
    %v2224 = vpack.c.b16 %v2215, %v2214
    %v2225 = vpack.c.b16 %v2217, %v2216
    %2234 = vmatprep.subr.bf16.mxu0 0
    %2235 = vmatpush1.bf16.msra.mxu0 %v2225
    %2236 = vmatprep.subr.bf16.mxu0 0
    %2237 = vmatpush1.bf16.msra.mxu0 %v2224
    %2238 = vmatprep.subr.bf16.mxu0 0
    %2239 = vmatpush1.bf16.msra.mxu0 %v2223
    %2240 = vmatprep.subr.bf16.mxu0 0
    %2241 = vmatpush1.bf16.msra.mxu0 %v2222
    %2242 = vmatprep.subr.bf16.mxu0 0
    %2243 = vmatpush1.bf16.msra.mxu0 %v2221
    %2244 = vmatprep.subr.bf16.mxu0 0
    %2245 = vmatpush1.bf16.msra.mxu0 %v2220
    %2246 = vmatprep.subr.bf16.mxu0 0
    %2247 = vmatpush1.bf16.msra.mxu0 %v2219
    %2248 = vmatprep.subr.bf16.mxu0 0
    %2249 = vmatpush1.bf16.msra.mxu0 %v2218
    %2250 = vmatprep.subr.bf16.mxu0 0
    %2251 = vmatpush2.bf16.msra.mxu0 0
    %2252 = vmatprep.subr.bf16.mxu0 0
    %2253 = vmatpush2.bf16.msra.mxu0 0
    %2254 = vmatprep.subr.bf16.mxu0 0
    %2255 = vmatpush2.bf16.msra.mxu0 0
    %2256 = vmatprep.subr.bf16.mxu0 0
    %2257 = vmatpush2.bf16.msra.mxu0 0
    %2258 = vmatprep.subr.bf16.mxu0 0
    %2259 = vmatpush2.bf16.msra.mxu0 0
    %2260 = vmatprep.subr.bf16.mxu0 0
    %2261 = vmatpush2.bf16.msra.mxu0 0
    %2262 = vmatprep.subr.bf16.mxu0 0
    %2263 = vmatpush2.bf16.msra.mxu0 0
    %2264 = vmatprep.subr.bf16.mxu0 0
    %2265 = vmatpush2.bf16.msra.mxu0 0
    %2266 = vmatprep.mubr.bf16.mxu0 0
    %2267 = vmatmul.mubr.bf16.gmra.mxu0 %v2107
    %v2268 = vpop.f32.mrf.mxu0
    %v2269 = vadd.f32 %v2181, %v2268
    %v2270 = vpop.f32.mrf.mxu0
    %v2271 = vpop.f32.mrf.mxu0
    %v2272 = vpop.f32.mrf.mxu0
    %2273 = vdwg.mxu0
    %v2275 = vlaneseq
    %v2276 = vshrl.u32 %v2275, 7
    %v2277 = vsub.s32 0, %v2276
    %v2278 = vrot.slane %v304, %v2277
    %v2280 = vadd.f32 %v2269, %v2278
    %v2281 = vmul.f32 %v2280, 0.2
    %v2282 = vmax.f32 %v2280, %v2281
    %s2283 = smul.u32 4, 16
    %s2284 = smul.u32 %s2283, 2
    %s2285 = sshll.u32 %s2284, 4
    %2286 = dma.done [#allocation6], %s2285
    %v2287 = vpack.c.bf16 %v2282, %v2282
    %v2288 = vld [vmem:[#allocation2] sm:$0xff]
    %v2289 = vld [vmem:[#allocation2 + $0x8] sm:$0xff]
    %v2290 = vld [vmem:[#allocation2 + $0x10] sm:$0xff]
    %v2291 = vld [vmem:[#allocation2 + $0x18] sm:$0xff]
    %v2292 = vld [vmem:[#allocation2 + $0x20] sm:$0xff]
    %v2293 = vld [vmem:[#allocation2 + $0x28] sm:$0xff]
    %v2294 = vld [vmem:[#allocation2 + $0x30] sm:$0xff]
    %v2295 = vld [vmem:[#allocation2 + $0x38] sm:$0xff]
    %v2296 = vld [vmem:[#allocation2 + $0x40] sm:$0xff]
    %v2297 = vld [vmem:[#allocation2 + $0x48] sm:$0xff]
    %v2298 = vld [vmem:[#allocation2 + $0x50] sm:$0xff]
    %v2299 = vld [vmem:[#allocation2 + $0x58] sm:$0xff]
    %v2300 = vld [vmem:[#allocation2 + $0x60] sm:$0xff]
    %v2301 = vld [vmem:[#allocation2 + $0x68] sm:$0xff]
    %v2302 = vld [vmem:[#allocation2 + $0x70] sm:$0xff]
    %v2303 = vld [vmem:[#allocation2 + $0x78] sm:$0xff]
    %v2305 = vlaneseq
    %v2306 = vshrl.u32 %v2305, 7
    %v2307 = vsub.s32 0, %v2306
    %v2308 = vrot.slane %v305, %v2307
    %v2309 = vlaneseq
    %v2310 = vshrl.u32 %v2309, 7
    %v2311 = vsub.s32 1, %v2310
    %v2312 = vrot.slane %v305, %v2311
    %v2331 = vunpack.c.l.b16 %v2288
    %v2332 = vunpack.c.h.b16 %v2288
    %v2333 = vunpack.c.l.b16 %v2289
    %v2334 = vunpack.c.h.b16 %v2289
    %v2335 = vunpack.c.l.b16 %v2290
    %v2336 = vunpack.c.h.b16 %v2290
    %v2337 = vunpack.c.l.b16 %v2291
    %v2338 = vunpack.c.h.b16 %v2291
    %v2339 = vunpack.c.l.b16 %v2292
    %v2340 = vunpack.c.h.b16 %v2292
    %v2341 = vunpack.c.l.b16 %v2293
    %v2342 = vunpack.c.h.b16 %v2293
    %v2343 = vunpack.c.l.b16 %v2294
    %v2344 = vunpack.c.h.b16 %v2294
    %v2345 = vunpack.c.l.b16 %v2295
    %v2346 = vunpack.c.h.b16 %v2295
    %v2347 = vunpack.c.l.b16 %v2296
    %v2348 = vunpack.c.h.b16 %v2296
    %v2349 = vunpack.c.l.b16 %v2297
    %v2350 = vunpack.c.h.b16 %v2297
    %v2351 = vunpack.c.l.b16 %v2298
    %v2352 = vunpack.c.h.b16 %v2298
    %v2353 = vunpack.c.l.b16 %v2299
    %v2354 = vunpack.c.h.b16 %v2299
    %v2355 = vunpack.c.l.b16 %v2300
    %v2356 = vunpack.c.h.b16 %v2300
    %v2357 = vunpack.c.l.b16 %v2301
    %v2358 = vunpack.c.h.b16 %v2301
    %v2359 = vunpack.c.l.b16 %v2302
    %v2360 = vunpack.c.h.b16 %v2302
    %v2361 = vunpack.c.l.b16 %v2303
    %v2362 = vunpack.c.h.b16 %v2303
    %v2363 = vpack.c.b16 %v2333, %v2331
    %v2364 = vpack.c.b16 %v2334, %v2332
    %v2365 = vpack.c.b16 %v2337, %v2335
    %v2366 = vpack.c.b16 %v2338, %v2336
    %v2367 = vpack.c.b16 %v2341, %v2339
    %v2368 = vpack.c.b16 %v2342, %v2340
    %v2369 = vpack.c.b16 %v2345, %v2343
    %v2370 = vpack.c.b16 %v2346, %v2344
    %v2371 = vpack.c.b16 %v2349, %v2347
    %v2372 = vpack.c.b16 %v2350, %v2348
    %v2373 = vpack.c.b16 %v2353, %v2351
    %v2374 = vpack.c.b16 %v2354, %v2352
    %v2375 = vpack.c.b16 %v2357, %v2355
    %v2376 = vpack.c.b16 %v2358, %v2356
    %v2377 = vpack.c.b16 %v2361, %v2359
    %v2378 = vpack.c.b16 %v2362, %v2360
    %2395 = vmatprep.subr.bf16.mxu0 %v2378
    %2396 = vmatpush1.bf16.msra.mxu0 %v2377
    %2397 = vmatprep.subr.bf16.mxu0 %v2376
    %2398 = vmatpush1.bf16.msra.mxu0 %v2375
    %2399 = vmatprep.subr.bf16.mxu0 %v2374
    %2400 = vmatpush1.bf16.msra.mxu0 %v2373
    %2401 = vmatprep.subr.bf16.mxu0 %v2372
    %2402 = vmatpush1.bf16.msra.mxu0 %v2371
    %2403 = vmatprep.subr.bf16.mxu0 %v2370
    %2404 = vmatpush1.bf16.msra.mxu0 %v2369
    %2405 = vmatprep.subr.bf16.mxu0 %v2368
    %2406 = vmatpush1.bf16.msra.mxu0 %v2367
    %2407 = vmatprep.subr.bf16.mxu0 %v2366
    %2408 = vmatpush1.bf16.msra.mxu0 %v2365
    %2409 = vmatprep.subr.bf16.mxu0 %v2364
    %2410 = vmatpush1.bf16.msra.mxu0 %v2363
    %2411 = vmatprep.subr.bf16.mxu0 0
    %2412 = vmatpush2.bf16.msra.mxu0 0
    %2413 = vmatprep.subr.bf16.mxu0 0
    %2414 = vmatpush2.bf16.msra.mxu0 0
    %2415 = vmatprep.subr.bf16.mxu0 0
    %2416 = vmatpush2.bf16.msra.mxu0 0
    %2417 = vmatprep.subr.bf16.mxu0 0
    %2418 = vmatpush2.bf16.msra.mxu0 0
    %2419 = vmatprep.subr.bf16.mxu0 0
    %2420 = vmatpush2.bf16.msra.mxu0 0
    %2421 = vmatprep.subr.bf16.mxu0 0
    %2422 = vmatpush2.bf16.msra.mxu0 0
    %2423 = vmatprep.subr.bf16.mxu0 0
    %2424 = vmatpush2.bf16.msra.mxu0 0
    %2425 = vmatprep.subr.bf16.mxu0 0
    %2426 = vmatpush2.bf16.msra.mxu0 0
    %2427 = vmatprep.mubr.bf16.mxu0 0
    %2428 = vmatmul.mubr.bf16.gmra.mxu0 %v2287
    %v2429 = vpop.f32.mrf.mxu0
    %v2430 = vadd.f32 %v2308, %v2429
    %v2431 = vpop.f32.mrf.mxu0
    %v2432 = vadd.f32 %v2312, %v2431
    %v2433 = vpop.f32.mrf.mxu0
    %v2434 = vpop.f32.mrf.mxu0
    %2435 = vdwg.mxu0
    %vm2436 = vcmask 1041408
    %v2437 = vsel %vm2436, %v2430, 0.0
    %v2438 = vrot.slane %v2437, 4
    %v2439 = vadd.f32 %v2437, %v2438
    %v2440 = vrot.slane %v2439, 2
    %v2441 = vadd.f32 %v2439, %v2440
    %v2442 = vrot.slane %v2441, 1
    %v2443 = vadd.f32 %v2441, %v2442
    %v2444 = vsel %vm2436, %v2432, 0.0
    %v2445 = vrot.slane %v2444, 4
    %v2446 = vadd.f32 %v2444, %v2445
    %v2447 = vrot.slane %v2446, 2
    %v2448 = vadd.f32 %v2446, %v2447
    %v2449 = vrot.slane %v2448, 1
    %v2450 = vadd.f32 %v2448, %v2449
    %v2451 = vrcp.pop 2.0
    %v2452 = vmul.f32 %v2443, %v2451
    %v2453 = vmul.f32 %v2450, %v2451
    %v2454 = vsub.f32 %v2430, %v2452
    %v2455 = vsub.f32 %v2432, %v2453
    %v2456 = vmul.f32 %v2454, %v2454
    %v2457 = vmul.f32 %v2455, %v2455
    %v2458 = vsel %vm2436, %v2456, 0.0
    %v2459 = vrot.slane %v2458, 4
    %v2460 = vadd.f32 %v2458, %v2459
    %v2461 = vrot.slane %v2460, 2
    %v2462 = vadd.f32 %v2460, %v2461
    %v2463 = vrot.slane %v2462, 1
    %v2464 = vadd.f32 %v2462, %v2463
    %v2465 = vsel %vm2436, %v2457, 0.0
    %v2466 = vrot.slane %v2465, 4
    %v2467 = vadd.f32 %v2465, %v2466
    %v2468 = vrot.slane %v2467, 2
    %v2469 = vadd.f32 %v2467, %v2468
    %v2470 = vrot.slane %v2469, 1
    %v2471 = vadd.f32 %v2469, %v2470
    %v2472 = vmul.f32 %v2464, %v2451
    %v2473 = vmul.f32 %v2471, %v2451
    %v2474 = vadd.f32 %v2472, 0.8
    %v2475 = vadd.f32 %v2473, 0.8
    %v2476 = vrsqrt.pop %v2474
    %v2477 = vrsqrt.pop %v2475
    %v2478 = vmul.f32 %v2454, %v2476
    %v2479 = vmul.f32 %v2455, %v2477
    %v2481 = vlaneseq
    %v2482 = vshrl.u32 %v2481, 7
    %v2483 = vsub.s32 0, %v2482
    %v2484 = vrot.slane %v306, %v2483
    %v2485 = vlaneseq
    %v2486 = vshrl.u32 %v2485, 7
    %v2487 = vsub.s32 1, %v2486
    %v2488 = vrot.slane %v306, %v2487
    %v2491 = vmul.f32 %v2478, %v2484
    %v2492 = vmul.f32 %v2479, %v2488
    %v2494 = vlaneseq
    %v2495 = vshrl.u32 %v2494, 7
    %v2496 = vsub.s32 0, %v2495
    %v2497 = vrot.slane %v307, %v2496
    %v2498 = vlaneseq
    %v2499 = vshrl.u32 %v2498, 7
    %v2500 = vsub.s32 1, %v2499
    %v2501 = vrot.slane %v307, %v2500
    %v2504 = vadd.f32 %v2491, %v2497
    %v2505 = vadd.f32 %v2492, %v2501
    %v2506 = vmul.f32 %v2504, 0.2
    %v2507 = vmul.f32 %v2505, 0.2
    %v2508 = vmax.f32 %v2504, %v2506
    %v2509 = vmax.f32 %v2505, %v2507
    %s2510 = smul.u32 4, 32
    %s2511 = smul.u32 %s2510, 4
    %s2512 = sshll.u32 %s2511, 4
    %2513 = dma.done %s109, %s2512
    %v2514 = vpack.c.bf16 %v2508, %v2508
    %v2515 = vpack.c.bf16 %v2509, %v2509
    %v2516 = vld [vmem:[#allocation3] sm:$0xff]
    %v2517 = vld [vmem:[#allocation3 + $0x8] sm:$0xff]
    %v2518 = vld [vmem:[#allocation3 + $0x10] sm:$0xff]
    %v2519 = vld [vmem:[#allocation3 + $0x18] sm:$0xff]
    %v2520 = vld [vmem:[#allocation3 + $0x20] sm:$0xff]
    %v2521 = vld [vmem:[#allocation3 + $0x28] sm:$0xff]
    %v2522 = vld [vmem:[#allocation3 + $0x30] sm:$0xff]
    %v2523 = vld [vmem:[#allocation3 + $0x38] sm:$0xff]
    %v2524 = vld [vmem:[#allocation3 + $0x40] sm:$0xff]
    %v2525 = vld [vmem:[#allocation3 + $0x48] sm:$0xff]
    %v2526 = vld [vmem:[#allocation3 + $0x50] sm:$0xff]
    %v2527 = vld [vmem:[#allocation3 + $0x58] sm:$0xff]
    %v2528 = vld [vmem:[#allocation3 + $0x60] sm:$0xff]
    %v2529 = vld [vmem:[#allocation3 + $0x68] sm:$0xff]
    %v2530 = vld [vmem:[#allocation3 + $0x70] sm:$0xff]
    %v2531 = vld [vmem:[#allocation3 + $0x78] sm:$0xff]
    %v2532 = vld [vmem:[#allocation3 + $0x80] sm:$0xff]
    %v2533 = vld [vmem:[#allocation3 + $0x88] sm:$0xff]
    %v2534 = vld [vmem:[#allocation3 + $0x90] sm:$0xff]
    %v2535 = vld [vmem:[#allocation3 + $0x98] sm:$0xff]
    %v2536 = vld [vmem:[#allocation3 + $0xa0] sm:$0xff]
    %v2537 = vld [vmem:[#allocation3 + $0xa8] sm:$0xff]
    %v2538 = vld [vmem:[#allocation3 + $0xb0] sm:$0xff]
    %v2539 = vld [vmem:[#allocation3 + $0xb8] sm:$0xff]
    %v2540 = vld [vmem:[#allocation3 + $0xc0] sm:$0xff]
    %v2541 = vld [vmem:[#allocation3 + $0xc8] sm:$0xff]
    %v2542 = vld [vmem:[#allocation3 + $0xd0] sm:$0xff]
    %v2543 = vld [vmem:[#allocation3 + $0xd8] sm:$0xff]
    %v2544 = vld [vmem:[#allocation3 + $0xe0] sm:$0xff]
    %v2545 = vld [vmem:[#allocation3 + $0xe8] sm:$0xff]
    %v2546 = vld [vmem:[#allocation3 + $0xf0] sm:$0xff]
    %v2547 = vld [vmem:[#allocation3 + $0xf8] sm:$0xff]
    %v2548 = vld [vmem:[#allocation3 + $0x100] sm:$0xff]
    %v2549 = vld [vmem:[#allocation3 + $0x108] sm:$0xff]
    %v2550 = vld [vmem:[#allocation3 + $0x110] sm:$0xff]
    %v2551 = vld [vmem:[#allocation3 + $0x118] sm:$0xff]
    %v2552 = vld [vmem:[#allocation3 + $0x120] sm:$0xff]
    %v2553 = vld [vmem:[#allocation3 + $0x128] sm:$0xff]
    %v2554 = vld [vmem:[#allocation3 + $0x130] sm:$0xff]
    %v2555 = vld [vmem:[#allocation3 + $0x138] sm:$0xff]
    %v2556 = vld [vmem:[#allocation3 + $0x140] sm:$0xff]
    %v2557 = vld [vmem:[#allocation3 + $0x148] sm:$0xff]
    %v2558 = vld [vmem:[#allocation3 + $0x150] sm:$0xff]
    %v2559 = vld [vmem:[#allocation3 + $0x158] sm:$0xff]
    %v2560 = vld [vmem:[#allocation3 + $0x160] sm:$0xff]
    %v2561 = vld [vmem:[#allocation3 + $0x168] sm:$0xff]
    %v2562 = vld [vmem:[#allocation3 + $0x170] sm:$0xff]
    %v2563 = vld [vmem:[#allocation3 + $0x178] sm:$0xff]
    %v2564 = vld [vmem:[#allocation3 + $0x180] sm:$0xff]
    %v2565 = vld [vmem:[#allocation3 + $0x188] sm:$0xff]
    %v2566 = vld [vmem:[#allocation3 + $0x190] sm:$0xff]
    %v2567 = vld [vmem:[#allocation3 + $0x198] sm:$0xff]
    %v2568 = vld [vmem:[#allocation3 + $0x1a0] sm:$0xff]
    %v2569 = vld [vmem:[#allocation3 + $0x1a8] sm:$0xff]
    %v2570 = vld [vmem:[#allocation3 + $0x1b0] sm:$0xff]
    %v2571 = vld [vmem:[#allocation3 + $0x1b8] sm:$0xff]
    %v2572 = vld [vmem:[#allocation3 + $0x1c0] sm:$0xff]
    %v2573 = vld [vmem:[#allocation3 + $0x1c8] sm:$0xff]
    %v2574 = vld [vmem:[#allocation3 + $0x1d0] sm:$0xff]
    %v2575 = vld [vmem:[#allocation3 + $0x1d8] sm:$0xff]
    %v2576 = vld [vmem:[#allocation3 + $0x1e0] sm:$0xff]
    %v2577 = vld [vmem:[#allocation3 + $0x1e8] sm:$0xff]
    %v2578 = vld [vmem:[#allocation3 + $0x1f0] sm:$0xff]
    %v2579 = vld [vmem:[#allocation3 + $0x1f8] sm:$0xff]
    %v2581 = vlaneseq
    %v2582 = vshrl.u32 %v2581, 7
    %v2583 = vsub.s32 0, %v2582
    %v2584 = vrot.slane %v308, %v2583
    %v2585 = vlaneseq
    %v2586 = vshrl.u32 %v2585, 7
    %v2587 = vsub.s32 1, %v2586
    %v2588 = vrot.slane %v308, %v2587
    %v2589 = vlaneseq
    %v2590 = vshrl.u32 %v2589, 7
    %v2591 = vsub.s32 2, %v2590
    %v2592 = vrot.slane %v308, %v2591
    %v2593 = vlaneseq
    %v2594 = vshrl.u32 %v2593, 7
    %v2595 = vsub.s32 3, %v2594
    %v2596 = vrot.slane %v308, %v2595
    %v2665 = vunpack.c.l.b16 %v2516
    %v2666 = vunpack.c.h.b16 %v2516
    %v2667 = vunpack.c.l.b16 %v2517
    %v2668 = vunpack.c.h.b16 %v2517
    %v2669 = vunpack.c.l.b16 %v2518
    %v2670 = vunpack.c.h.b16 %v2518
    %v2671 = vunpack.c.l.b16 %v2519
    %v2672 = vunpack.c.h.b16 %v2519
    %v2673 = vunpack.c.l.b16 %v2520
    %v2674 = vunpack.c.h.b16 %v2520
    %v2675 = vunpack.c.l.b16 %v2521
    %v2676 = vunpack.c.h.b16 %v2521
    %v2677 = vunpack.c.l.b16 %v2522
    %v2678 = vunpack.c.h.b16 %v2522
    %v2679 = vunpack.c.l.b16 %v2523
    %v2680 = vunpack.c.h.b16 %v2523
    %v2681 = vunpack.c.l.b16 %v2524
    %v2682 = vunpack.c.h.b16 %v2524
    %v2683 = vunpack.c.l.b16 %v2525
    %v2684 = vunpack.c.h.b16 %v2525
    %v2685 = vunpack.c.l.b16 %v2526
    %v2686 = vunpack.c.h.b16 %v2526
    %v2687 = vunpack.c.l.b16 %v2527
    %v2688 = vunpack.c.h.b16 %v2527
    %v2689 = vunpack.c.l.b16 %v2528
    %v2690 = vunpack.c.h.b16 %v2528
    %v2691 = vunpack.c.l.b16 %v2529
    %v2692 = vunpack.c.h.b16 %v2529
    %v2693 = vunpack.c.l.b16 %v2530
    %v2694 = vunpack.c.h.b16 %v2530
    %v2695 = vunpack.c.l.b16 %v2531
    %v2696 = vunpack.c.h.b16 %v2531
    %v2697 = vunpack.c.l.b16 %v2532
    %v2698 = vunpack.c.h.b16 %v2532
    %v2699 = vunpack.c.l.b16 %v2533
    %v2700 = vunpack.c.h.b16 %v2533
    %v2701 = vunpack.c.l.b16 %v2534
    %v2702 = vunpack.c.h.b16 %v2534
    %v2703 = vunpack.c.l.b16 %v2535
    %v2704 = vunpack.c.h.b16 %v2535
    %v2705 = vunpack.c.l.b16 %v2536
    %v2706 = vunpack.c.h.b16 %v2536
    %v2707 = vunpack.c.l.b16 %v2537
    %v2708 = vunpack.c.h.b16 %v2537
    %v2709 = vunpack.c.l.b16 %v2538
    %v2710 = vunpack.c.h.b16 %v2538
    %v2711 = vunpack.c.l.b16 %v2539
    %v2712 = vunpack.c.h.b16 %v2539
    %v2713 = vunpack.c.l.b16 %v2540
    %v2714 = vunpack.c.h.b16 %v2540
    %v2715 = vunpack.c.l.b16 %v2541
    %v2716 = vunpack.c.h.b16 %v2541
    %v2717 = vunpack.c.l.b16 %v2542
    %v2718 = vunpack.c.h.b16 %v2542
    %v2719 = vunpack.c.l.b16 %v2543
    %v2720 = vunpack.c.h.b16 %v2543
    %v2721 = vunpack.c.l.b16 %v2544
    %v2722 = vunpack.c.h.b16 %v2544
    %v2723 = vunpack.c.l.b16 %v2545
    %v2724 = vunpack.c.h.b16 %v2545
    %v2725 = vunpack.c.l.b16 %v2546
    %v2726 = vunpack.c.h.b16 %v2546
    %v2727 = vunpack.c.l.b16 %v2547
    %v2728 = vunpack.c.h.b16 %v2547
    %v2729 = vunpack.c.l.b16 %v2548
    %v2730 = vunpack.c.h.b16 %v2548
    %v2731 = vunpack.c.l.b16 %v2549
    %v2732 = vunpack.c.h.b16 %v2549
    %v2733 = vunpack.c.l.b16 %v2550
    %v2734 = vunpack.c.h.b16 %v2550
    %v2735 = vunpack.c.l.b16 %v2551
    %v2736 = vunpack.c.h.b16 %v2551
    %v2737 = vunpack.c.l.b16 %v2552
    %v2738 = vunpack.c.h.b16 %v2552
    %v2739 = vunpack.c.l.b16 %v2553
    %v2740 = vunpack.c.h.b16 %v2553
    %v2741 = vunpack.c.l.b16 %v2554
    %v2742 = vunpack.c.h.b16 %v2554
    %v2743 = vunpack.c.l.b16 %v2555
    %v2744 = vunpack.c.h.b16 %v2555
    %v2745 = vunpack.c.l.b16 %v2556
    %v2746 = vunpack.c.h.b16 %v2556
    %v2747 = vunpack.c.l.b16 %v2557
    %v2748 = vunpack.c.h.b16 %v2557
    %v2749 = vunpack.c.l.b16 %v2558
    %v2750 = vunpack.c.h.b16 %v2558
    %v2751 = vunpack.c.l.b16 %v2559
    %v2752 = vunpack.c.h.b16 %v2559
    %v2753 = vunpack.c.l.b16 %v2560
    %v2754 = vunpack.c.h.b16 %v2560
    %v2755 = vunpack.c.l.b16 %v2561
    %v2756 = vunpack.c.h.b16 %v2561
    %v2757 = vunpack.c.l.b16 %v2562
    %v2758 = vunpack.c.h.b16 %v2562
    %v2759 = vunpack.c.l.b16 %v2563
    %v2760 = vunpack.c.h.b16 %v2563
    %v2761 = vunpack.c.l.b16 %v2564
    %v2762 = vunpack.c.h.b16 %v2564
    %v2763 = vunpack.c.l.b16 %v2565
    %v2764 = vunpack.c.h.b16 %v2565
    %v2765 = vunpack.c.l.b16 %v2566
    %v2766 = vunpack.c.h.b16 %v2566
    %v2767 = vunpack.c.l.b16 %v2567
    %v2768 = vunpack.c.h.b16 %v2567
    %v2769 = vunpack.c.l.b16 %v2568
    %v2770 = vunpack.c.h.b16 %v2568
    %v2771 = vunpack.c.l.b16 %v2569
    %v2772 = vunpack.c.h.b16 %v2569
    %v2773 = vunpack.c.l.b16 %v2570
    %v2774 = vunpack.c.h.b16 %v2570
    %v2775 = vunpack.c.l.b16 %v2571
    %v2776 = vunpack.c.h.b16 %v2571
    %v2777 = vunpack.c.l.b16 %v2572
    %v2778 = vunpack.c.h.b16 %v2572
    %v2779 = vunpack.c.l.b16 %v2573
    %v2780 = vunpack.c.h.b16 %v2573
    %v2781 = vunpack.c.l.b16 %v2574
    %v2782 = vunpack.c.h.b16 %v2574
    %v2783 = vunpack.c.l.b16 %v2575
    %v2784 = vunpack.c.h.b16 %v2575
    %v2785 = vunpack.c.l.b16 %v2576
    %v2786 = vunpack.c.h.b16 %v2576
    %v2787 = vunpack.c.l.b16 %v2577
    %v2788 = vunpack.c.h.b16 %v2577
    %v2789 = vunpack.c.l.b16 %v2578
    %v2790 = vunpack.c.h.b16 %v2578
    %v2791 = vunpack.c.l.b16 %v2579
    %v2792 = vunpack.c.h.b16 %v2579
    %v2793 = vpack.c.b16 %v2669, %v2665
    %v2794 = vpack.c.b16 %v2670, %v2666
    %v2795 = vpack.c.b16 %v2671, %v2667
    %v2796 = vpack.c.b16 %v2672, %v2668
    %v2797 = vpack.c.b16 %v2677, %v2673
    %v2798 = vpack.c.b16 %v2678, %v2674
    %v2799 = vpack.c.b16 %v2679, %v2675
    %v2800 = vpack.c.b16 %v2680, %v2676
    %v2801 = vpack.c.b16 %v2685, %v2681
    %v2802 = vpack.c.b16 %v2686, %v2682
    %v2803 = vpack.c.b16 %v2687, %v2683
    %v2804 = vpack.c.b16 %v2688, %v2684
    %v2805 = vpack.c.b16 %v2693, %v2689
    %v2806 = vpack.c.b16 %v2694, %v2690
    %v2807 = vpack.c.b16 %v2695, %v2691
    %v2808 = vpack.c.b16 %v2696, %v2692
    %v2809 = vpack.c.b16 %v2701, %v2697
    %v2810 = vpack.c.b16 %v2702, %v2698
    %v2811 = vpack.c.b16 %v2703, %v2699
    %v2812 = vpack.c.b16 %v2704, %v2700
    %v2813 = vpack.c.b16 %v2709, %v2705
    %v2814 = vpack.c.b16 %v2710, %v2706
    %v2815 = vpack.c.b16 %v2711, %v2707
    %v2816 = vpack.c.b16 %v2712, %v2708
    %v2817 = vpack.c.b16 %v2717, %v2713
    %v2818 = vpack.c.b16 %v2718, %v2714
    %v2819 = vpack.c.b16 %v2719, %v2715
    %v2820 = vpack.c.b16 %v2720, %v2716
    %v2821 = vpack.c.b16 %v2725, %v2721
    %v2822 = vpack.c.b16 %v2726, %v2722
    %v2823 = vpack.c.b16 %v2727, %v2723
    %v2824 = vpack.c.b16 %v2728, %v2724
    %v2825 = vpack.c.b16 %v2733, %v2729
    %v2826 = vpack.c.b16 %v2734, %v2730
    %v2827 = vpack.c.b16 %v2735, %v2731
    %v2828 = vpack.c.b16 %v2736, %v2732
    %v2829 = vpack.c.b16 %v2741, %v2737
    %v2830 = vpack.c.b16 %v2742, %v2738
    %v2831 = vpack.c.b16 %v2743, %v2739
    %v2832 = vpack.c.b16 %v2744, %v2740
    %v2833 = vpack.c.b16 %v2749, %v2745
    %v2834 = vpack.c.b16 %v2750, %v2746
    %v2835 = vpack.c.b16 %v2751, %v2747
    %v2836 = vpack.c.b16 %v2752, %v2748
    %v2837 = vpack.c.b16 %v2757, %v2753
    %v2838 = vpack.c.b16 %v2758, %v2754
    %v2839 = vpack.c.b16 %v2759, %v2755
    %v2840 = vpack.c.b16 %v2760, %v2756
    %v2841 = vpack.c.b16 %v2765, %v2761
    %v2842 = vpack.c.b16 %v2766, %v2762
    %v2843 = vpack.c.b16 %v2767, %v2763
    %v2844 = vpack.c.b16 %v2768, %v2764
    %v2845 = vpack.c.b16 %v2773, %v2769
    %v2846 = vpack.c.b16 %v2774, %v2770
    %v2847 = vpack.c.b16 %v2775, %v2771
    %v2848 = vpack.c.b16 %v2776, %v2772
    %v2849 = vpack.c.b16 %v2781, %v2777
    %v2850 = vpack.c.b16 %v2782, %v2778
    %v2851 = vpack.c.b16 %v2783, %v2779
    %v2852 = vpack.c.b16 %v2784, %v2780
    %v2853 = vpack.c.b16 %v2789, %v2785
    %v2854 = vpack.c.b16 %v2790, %v2786
    %v2855 = vpack.c.b16 %v2791, %v2787
    %v2856 = vpack.c.b16 %v2792, %v2788
    %2921 = vmatprep.subr.bf16.mxu0 %v2822
    %2922 = vmatpush1.bf16.msra.mxu0 %v2821
    %2923 = vmatprep.subr.bf16.mxu0 %v2818
    %2924 = vmatpush1.bf16.msra.mxu0 %v2817
    %2925 = vmatprep.subr.bf16.mxu0 %v2814
    %2926 = vmatpush1.bf16.msra.mxu0 %v2813
    %2927 = vmatprep.subr.bf16.mxu0 %v2810
    %2928 = vmatpush1.bf16.msra.mxu0 %v2809
    %2929 = vmatprep.subr.bf16.mxu0 %v2806
    %2930 = vmatpush1.bf16.msra.mxu0 %v2805
    %2931 = vmatprep.subr.bf16.mxu0 %v2802
    %2932 = vmatpush1.bf16.msra.mxu0 %v2801
    %2933 = vmatprep.subr.bf16.mxu0 %v2798
    %2934 = vmatpush1.bf16.msra.mxu0 %v2797
    %2935 = vmatprep.subr.bf16.mxu0 %v2794
    %2936 = vmatpush1.bf16.msra.mxu0 %v2793
    %2937 = vmatprep.subr.bf16.mxu0 %v2854
    %2938 = vmatpush2.bf16.msra.mxu0 %v2853
    %2939 = vmatprep.subr.bf16.mxu0 %v2850
    %2940 = vmatpush2.bf16.msra.mxu0 %v2849
    %2941 = vmatprep.subr.bf16.mxu0 %v2846
    %2942 = vmatpush2.bf16.msra.mxu0 %v2845
    %2943 = vmatprep.subr.bf16.mxu0 %v2842
    %2944 = vmatpush2.bf16.msra.mxu0 %v2841
    %2945 = vmatprep.subr.bf16.mxu0 %v2838
    %2946 = vmatpush2.bf16.msra.mxu0 %v2837
    %2947 = vmatprep.subr.bf16.mxu0 %v2834
    %2948 = vmatpush2.bf16.msra.mxu0 %v2833
    %2949 = vmatprep.subr.bf16.mxu0 %v2830
    %2950 = vmatpush2.bf16.msra.mxu0 %v2829
    %2951 = vmatprep.subr.bf16.mxu0 %v2826
    %2952 = vmatpush2.bf16.msra.mxu0 %v2825
    %2953 = vmatprep.mubr.bf16.mxu0 %v2515
    %2954 = vmatmul.mubr.bf16.gmra.mxu0 %v2514
    %v2955 = vpop.f32.mrf.mxu0
    %v2956 = vadd.f32 %v2584, %v2955
    %v2957 = vpop.f32.mrf.mxu0
    %v2958 = vadd.f32 %v2588, %v2957
    %v2959 = vpop.f32.mrf.mxu0
    %v2960 = vpop.f32.mrf.mxu0
    %2961 = vdwg.mxu0
    %2962 = vmatprep.subr.bf16.mxu0 %v2824
    %2963 = vmatpush1.bf16.msra.mxu0 %v2823
    %2964 = vmatprep.subr.bf16.mxu0 %v2820
    %2965 = vmatpush1.bf16.msra.mxu0 %v2819
    %2966 = vmatprep.subr.bf16.mxu0 %v2816
    %2967 = vmatpush1.bf16.msra.mxu0 %v2815
    %2968 = vmatprep.subr.bf16.mxu0 %v2812
    %2969 = vmatpush1.bf16.msra.mxu0 %v2811
    %2970 = vmatprep.subr.bf16.mxu0 %v2808
    %2971 = vmatpush1.bf16.msra.mxu0 %v2807
    %2972 = vmatprep.subr.bf16.mxu0 %v2804
    %2973 = vmatpush1.bf16.msra.mxu0 %v2803
    %2974 = vmatprep.subr.bf16.mxu0 %v2800
    %2975 = vmatpush1.bf16.msra.mxu0 %v2799
    %2976 = vmatprep.subr.bf16.mxu0 %v2796
    %2977 = vmatpush1.bf16.msra.mxu0 %v2795
    %2978 = vmatprep.subr.bf16.mxu0 %v2856
    %2979 = vmatpush2.bf16.msra.mxu0 %v2855
    %2980 = vmatprep.subr.bf16.mxu0 %v2852
    %2981 = vmatpush2.bf16.msra.mxu0 %v2851
    %2982 = vmatprep.subr.bf16.mxu0 %v2848
    %2983 = vmatpush2.bf16.msra.mxu0 %v2847
    %2984 = vmatprep.subr.bf16.mxu0 %v2844
    %2985 = vmatpush2.bf16.msra.mxu0 %v2843
    %2986 = vmatprep.subr.bf16.mxu0 %v2840
    %2987 = vmatpush2.bf16.msra.mxu0 %v2839
    %2988 = vmatprep.subr.bf16.mxu0 %v2836
    %2989 = vmatpush2.bf16.msra.mxu0 %v2835
    %2990 = vmatprep.subr.bf16.mxu0 %v2832
    %2991 = vmatpush2.bf16.msra.mxu0 %v2831
    %2992 = vmatprep.subr.bf16.mxu0 %v2828
    %2993 = vmatpush2.bf16.msra.mxu0 %v2827
    %2994 = vmatprep.mubr.bf16.mxu0 %v2515
    %2995 = vmatmul.mubr.bf16.gmra.mxu0 %v2514
    %v2996 = vpop.f32.mrf.mxu0
    %v2997 = vadd.f32 %v2592, %v2996
    %v2998 = vpop.f32.mrf.mxu0
    %v2999 = vadd.f32 %v2596, %v2998
    %v3000 = vpop.f32.mrf.mxu0
    %v3001 = vpop.f32.mrf.mxu0
    %3002 = vdwg.mxu0
    %v3003 = vsel %vm2436, %v2956, 0.0
    %v3004 = vrot.slane %v3003, 4
    %v3005 = vadd.f32 %v3003, %v3004
    %v3006 = vrot.slane %v3005, 2
    %v3007 = vadd.f32 %v3005, %v3006
    %v3008 = vrot.slane %v3007, 1
    %v3009 = vadd.f32 %v3007, %v3008
    %v3010 = vsel %vm2436, %v2958, 0.0
    %v3011 = vrot.slane %v3010, 4
    %v3012 = vadd.f32 %v3010, %v3011
    %v3013 = vrot.slane %v3012, 2
    %v3014 = vadd.f32 %v3012, %v3013
    %v3015 = vrot.slane %v3014, 1
    %v3016 = vadd.f32 %v3014, %v3015
    %v3017 = vsel %vm2436, %v2997, 0.0
    %v3018 = vrot.slane %v3017, 4
    %v3019 = vadd.f32 %v3017, %v3018
    %v3020 = vrot.slane %v3019, 2
    %v3021 = vadd.f32 %v3019, %v3020
    %v3022 = vrot.slane %v3021, 1
    %v3023 = vadd.f32 %v3021, %v3022
    %v3024 = vsel %vm2436, %v2999, 0.0
    %v3025 = vrot.slane %v3024, 4
    %v3026 = vadd.f32 %v3024, %v3025
    %v3027 = vrot.slane %v3026, 2
    %v3028 = vadd.f32 %v3026, %v3027
    %v3029 = vrot.slane %v3028, 1
    %v3030 = vadd.f32 %v3028, %v3029
    %v3031 = vmul.f32 %v3009, %v2451
    %v3032 = vmul.f32 %v3016, %v2451
    %v3033 = vmul.f32 %v3023, %v2451
    %v3034 = vmul.f32 %v3030, %v2451
    %v3035 = vsub.f32 %v2956, %v3031
    %v3036 = vsub.f32 %v2958, %v3032
    %v3037 = vsub.f32 %v2997, %v3033
    %v3038 = vsub.f32 %v2999, %v3034
    %v3039 = vmul.f32 %v3035, %v3035
    %v3040 = vmul.f32 %v3036, %v3036
    %v3041 = vmul.f32 %v3037, %v3037
    %v3042 = vmul.f32 %v3038, %v3038
    %v3043 = vsel %vm2436, %v3039, 0.0
    %v3044 = vrot.slane %v3043, 4
    %v3045 = vadd.f32 %v3043, %v3044
    %v3046 = vrot.slane %v3045, 2
    %v3047 = vadd.f32 %v3045, %v3046
    %v3048 = vrot.slane %v3047, 1
    %v3049 = vadd.f32 %v3047, %v3048
    %v3050 = vsel %vm2436, %v3040, 0.0
    %v3051 = vrot.slane %v3050, 4
    %v3052 = vadd.f32 %v3050, %v3051
    %v3053 = vrot.slane %v3052, 2
    %v3054 = vadd.f32 %v3052, %v3053
    %v3055 = vrot.slane %v3054, 1
    %v3056 = vadd.f32 %v3054, %v3055
    %v3057 = vsel %vm2436, %v3041, 0.0
    %v3058 = vrot.slane %v3057, 4
    %v3059 = vadd.f32 %v3057, %v3058
    %v3060 = vrot.slane %v3059, 2
    %v3061 = vadd.f32 %v3059, %v3060
    %v3062 = vrot.slane %v3061, 1
    %v3063 = vadd.f32 %v3061, %v3062
    %v3064 = vsel %vm2436, %v3042, 0.0
    %v3065 = vrot.slane %v3064, 4
    %v3066 = vadd.f32 %v3064, %v3065
    %v3067 = vrot.slane %v3066, 2
    %v3068 = vadd.f32 %v3066, %v3067
    %v3069 = vrot.slane %v3068, 1
    %v3070 = vadd.f32 %v3068, %v3069
    %v3071 = vmul.f32 %v3049, %v2451
    %v3072 = vmul.f32 %v3056, %v2451
    %v3073 = vmul.f32 %v3063, %v2451
    %v3074 = vmul.f32 %v3070, %v2451
    %v3075 = vadd.f32 %v3071, 0.8
    %v3076 = vadd.f32 %v3072, 0.8
    %v3077 = vadd.f32 %v3073, 0.8
    %v3078 = vadd.f32 %v3074, 0.8
    %v3079 = vrsqrt.pop %v3075
    %v3080 = vrsqrt.pop %v3076
    %v3081 = vrsqrt.pop %v3077
    %v3082 = vrsqrt.pop %v3078
    %v3083 = vmul.f32 %v3035, %v3079
    %v3084 = vmul.f32 %v3036, %v3080
    %v3085 = vmul.f32 %v3037, %v3081
    %v3086 = vmul.f32 %v3038, %v3082
    %v3088 = vlaneseq
    %v3089 = vshrl.u32 %v3088, 7
    %v3090 = vsub.s32 0, %v3089
    %v3091 = vrot.slane %v309, %v3090
    %v3092 = vlaneseq
    %v3093 = vshrl.u32 %v3092, 7
    %v3094 = vsub.s32 1, %v3093
    %v3095 = vrot.slane %v309, %v3094
    %v3096 = vlaneseq
    %v3097 = vshrl.u32 %v3096, 7
    %v3098 = vsub.s32 2, %v3097
    %v3099 = vrot.slane %v309, %v3098
    %v3100 = vlaneseq
    %v3101 = vshrl.u32 %v3100, 7
    %v3102 = vsub.s32 3, %v3101
    %v3103 = vrot.slane %v309, %v3102
    %v3108 = vmul.f32 %v3083, %v3091
    %v3109 = vmul.f32 %v3084, %v3095
    %v3110 = vmul.f32 %v3085, %v3099
    %v3111 = vmul.f32 %v3086, %v3103
    %v3113 = vlaneseq
    %v3114 = vshrl.u32 %v3113, 7
    %v3115 = vsub.s32 0, %v3114
    %v3116 = vrot.slane %v310, %v3115
    %v3117 = vlaneseq
    %v3118 = vshrl.u32 %v3117, 7
    %v3119 = vsub.s32 1, %v3118
    %v3120 = vrot.slane %v310, %v3119
    %v3121 = vlaneseq
    %v3122 = vshrl.u32 %v3121, 7
    %v3123 = vsub.s32 2, %v3122
    %v3124 = vrot.slane %v310, %v3123
    %v3125 = vlaneseq
    %v3126 = vshrl.u32 %v3125, 7
    %v3127 = vsub.s32 3, %v3126
    %v3128 = vrot.slane %v310, %v3127
    %v3133 = vadd.f32 %v3108, %v3116
    %v3134 = vadd.f32 %v3109, %v3120
    %v3135 = vadd.f32 %v3110, %v3124
    %v3136 = vadd.f32 %v3111, %v3128
    %v3137 = vmul.f32 %v3133, 0.2
    %v3138 = vmul.f32 %v3134, 0.2
    %v3139 = vmul.f32 %v3135, 0.2
    %v3140 = vmul.f32 %v3136, 0.2
    %v3141 = vmax.f32 %v3133, %v3137
    %v3142 = vmax.f32 %v3134, %v3138
    %v3143 = vmax.f32 %v3135, %v3139
    %v3144 = vmax.f32 %v3136, %v3140
    %s3145 = smul.u32 2, 64
    %s3146 = smul.u32 %s3145, 8
    %s3147 = sshll.u32 %s3146, 4
    %3148 = dma.done %s279, %s3147
    %v3149 = vpack.c.bf16 %v3141, %v3141
    %v3150 = vpack.c.bf16 %v3142, %v3142
    %v3151 = vpack.c.bf16 %v3143, %v3143
    %v3152 = vpack.c.bf16 %v3144, %v3144
    %v3153 = vld [vmem:[#allocation4] sm:$0xff]
    %v3154 = vld [vmem:[#allocation4 + $0x8] sm:$0xff]
    %v3155 = vld [vmem:[#allocation4 + $0x10] sm:$0xff]
    %v3156 = vld [vmem:[#allocation4 + $0x18] sm:$0xff]
    %v3157 = vld [vmem:[#allocation4 + $0x20] sm:$0xff]
    %v3158 = vld [vmem:[#allocation4 + $0x28] sm:$0xff]
    %v3159 = vld [vmem:[#allocation4 + $0x30] sm:$0xff]
    %v3160 = vld [vmem:[#allocation4 + $0x38] sm:$0xff]
    %v3161 = vld [vmem:[#allocation4 + $0x40] sm:$0xff]
    %v3162 = vld [vmem:[#allocation4 + $0x48] sm:$0xff]
    %v3163 = vld [vmem:[#allocation4 + $0x50] sm:$0xff]
    %v3164 = vld [vmem:[#allocation4 + $0x58] sm:$0xff]
    %v3165 = vld [vmem:[#allocation4 + $0x60] sm:$0xff]
    %v3166 = vld [vmem:[#allocation4 + $0x68] sm:$0xff]
    %v3167 = vld [vmem:[#allocation4 + $0x70] sm:$0xff]
    %v3168 = vld [vmem:[#allocation4 + $0x78] sm:$0xff]
    %v3169 = vld [vmem:[#allocation4 + $0x80] sm:$0xff]
    %v3170 = vld [vmem:[#allocation4 + $0x88] sm:$0xff]
    %v3171 = vld [vmem:[#allocation4 + $0x90] sm:$0xff]
    %v3172 = vld [vmem:[#allocation4 + $0x98] sm:$0xff]
    %v3173 = vld [vmem:[#allocation4 + $0xa0] sm:$0xff]
    %v3174 = vld [vmem:[#allocation4 + $0xa8] sm:$0xff]
    %v3175 = vld [vmem:[#allocation4 + $0xb0] sm:$0xff]
    %v3176 = vld [vmem:[#allocation4 + $0xb8] sm:$0xff]
    %v3177 = vld [vmem:[#allocation4 + $0xc0] sm:$0xff]
    %v3178 = vld [vmem:[#allocation4 + $0xc8] sm:$0xff]
    %v3179 = vld [vmem:[#allocation4 + $0xd0] sm:$0xff]
    %v3180 = vld [vmem:[#allocation4 + $0xd8] sm:$0xff]
    %v3181 = vld [vmem:[#allocation4 + $0xe0] sm:$0xff]
    %v3182 = vld [vmem:[#allocation4 + $0xe8] sm:$0xff]
    %v3183 = vld [vmem:[#allocation4 + $0xf0] sm:$0xff]
    %v3184 = vld [vmem:[#allocation4 + $0xf8] sm:$0xff]
    %v3185 = vld [vmem:[#allocation4 + $0x100] sm:$0xff]
    %v3186 = vld [vmem:[#allocation4 + $0x108] sm:$0xff]
    %v3187 = vld [vmem:[#allocation4 + $0x110] sm:$0xff]
    %v3188 = vld [vmem:[#allocation4 + $0x118] sm:$0xff]
    %v3189 = vld [vmem:[#allocation4 + $0x120] sm:$0xff]
    %v3190 = vld [vmem:[#allocation4 + $0x128] sm:$0xff]
    %v3191 = vld [vmem:[#allocation4 + $0x130] sm:$0xff]
    %v3192 = vld [vmem:[#allocation4 + $0x138] sm:$0xff]
    %v3193 = vld [vmem:[#allocation4 + $0x140] sm:$0xff]
    %v3194 = vld [vmem:[#allocation4 + $0x148] sm:$0xff]
    %v3195 = vld [vmem:[#allocation4 + $0x150] sm:$0xff]
    %v3196 = vld [vmem:[#allocation4 + $0x158] sm:$0xff]
    %v3197 = vld [vmem:[#allocation4 + $0x160] sm:$0xff]
    %v3198 = vld [vmem:[#allocation4 + $0x168] sm:$0xff]
    %v3199 = vld [vmem:[#allocation4 + $0x170] sm:$0xff]
    %v3200 = vld [vmem:[#allocation4 + $0x178] sm:$0xff]
    %v3201 = vld [vmem:[#allocation4 + $0x180] sm:$0xff]
    %v3202 = vld [vmem:[#allocation4 + $0x188] sm:$0xff]
    %v3203 = vld [vmem:[#allocation4 + $0x190] sm:$0xff]
    %v3204 = vld [vmem:[#allocation4 + $0x198] sm:$0xff]
    %v3205 = vld [vmem:[#allocation4 + $0x1a0] sm:$0xff]
    %v3206 = vld [vmem:[#allocation4 + $0x1a8] sm:$0xff]
    %v3207 = vld [vmem:[#allocation4 + $0x1b0] sm:$0xff]
    %v3208 = vld [vmem:[#allocation4 + $0x1b8] sm:$0xff]
    %v3209 = vld [vmem:[#allocation4 + $0x1c0] sm:$0xff]
    %v3210 = vld [vmem:[#allocation4 + $0x1c8] sm:$0xff]
    %v3211 = vld [vmem:[#allocation4 + $0x1d0] sm:$0xff]
    %v3212 = vld [vmem:[#allocation4 + $0x1d8] sm:$0xff]
    %v3213 = vld [vmem:[#allocation4 + $0x1e0] sm:$0xff]
    %v3214 = vld [vmem:[#allocation4 + $0x1e8] sm:$0xff]
    %v3215 = vld [vmem:[#allocation4 + $0x1f0] sm:$0xff]
    %v3216 = vld [vmem:[#allocation4 + $0x1f8] sm:$0xff]
    %v3217 = vld [vmem:[#allocation4 + $0x200] sm:$0xff]
    %v3218 = vld [vmem:[#allocation4 + $0x208] sm:$0xff]
    %v3219 = vld [vmem:[#allocation4 + $0x210] sm:$0xff]
    %v3220 = vld [vmem:[#allocation4 + $0x218] sm:$0xff]
    %v3221 = vld [vmem:[#allocation4 + $0x220] sm:$0xff]
    %v3222 = vld [vmem:[#allocation4 + $0x228] sm:$0xff]
    %v3223 = vld [vmem:[#allocation4 + $0x230] sm:$0xff]
    %v3224 = vld [vmem:[#allocation4 + $0x238] sm:$0xff]
    %v3225 = vld [vmem:[#allocation4 + $0x240] sm:$0xff]
    %v3226 = vld [vmem:[#allocation4 + $0x248] sm:$0xff]
    %v3227 = vld [vmem:[#allocation4 + $0x250] sm:$0xff]
    %v3228 = vld [vmem:[#allocation4 + $0x258] sm:$0xff]
    %v3229 = vld [vmem:[#allocation4 + $0x260] sm:$0xff]
    %v3230 = vld [vmem:[#allocation4 + $0x268] sm:$0xff]
    %v3231 = vld [vmem:[#allocation4 + $0x270] sm:$0xff]
    %v3232 = vld [vmem:[#allocation4 + $0x278] sm:$0xff]
    %v3233 = vld [vmem:[#allocation4 + $0x280] sm:$0xff]
    %v3234 = vld [vmem:[#allocation4 + $0x288] sm:$0xff]
    %v3235 = vld [vmem:[#allocation4 + $0x290] sm:$0xff]
    %v3236 = vld [vmem:[#allocation4 + $0x298] sm:$0xff]
    %v3237 = vld [vmem:[#allocation4 + $0x2a0] sm:$0xff]
    %v3238 = vld [vmem:[#allocation4 + $0x2a8] sm:$0xff]
    %v3239 = vld [vmem:[#allocation4 + $0x2b0] sm:$0xff]
    %v3240 = vld [vmem:[#allocation4 + $0x2b8] sm:$0xff]
    %v3241 = vld [vmem:[#allocation4 + $0x2c0] sm:$0xff]
    %v3242 = vld [vmem:[#allocation4 + $0x2c8] sm:$0xff]
    %v3243 = vld [vmem:[#allocation4 + $0x2d0] sm:$0xff]
    %v3244 = vld [vmem:[#allocation4 + $0x2d8] sm:$0xff]
    %v3245 = vld [vmem:[#allocation4 + $0x2e0] sm:$0xff]
    %v3246 = vld [vmem:[#allocation4 + $0x2e8] sm:$0xff]
    %v3247 = vld [vmem:[#allocation4 + $0x2f0] sm:$0xff]
    %v3248 = vld [vmem:[#allocation4 + $0x2f8] sm:$0xff]
    %v3249 = vld [vmem:[#allocation4 + $0x300] sm:$0xff]
    %v3250 = vld [vmem:[#allocation4 + $0x308] sm:$0xff]
    %v3251 = vld [vmem:[#allocation4 + $0x310] sm:$0xff]
    %v3252 = vld [vmem:[#allocation4 + $0x318] sm:$0xff]
    %v3253 = vld [vmem:[#allocation4 + $0x320] sm:$0xff]
    %v3254 = vld [vmem:[#allocation4 + $0x328] sm:$0xff]
    %v3255 = vld [vmem:[#allocation4 + $0x330] sm:$0xff]
    %v3256 = vld [vmem:[#allocation4 + $0x338] sm:$0xff]
    %v3257 = vld [vmem:[#allocation4 + $0x340] sm:$0xff]
    %v3258 = vld [vmem:[#allocation4 + $0x348] sm:$0xff]
    %v3259 = vld [vmem:[#allocation4 + $0x350] sm:$0xff]
    %v3260 = vld [vmem:[#allocation4 + $0x358] sm:$0xff]
    %v3261 = vld [vmem:[#allocation4 + $0x360] sm:$0xff]
    %v3262 = vld [vmem:[#allocation4 + $0x368] sm:$0xff]
    %v3263 = vld [vmem:[#allocation4 + $0x370] sm:$0xff]
    %v3264 = vld [vmem:[#allocation4 + $0x378] sm:$0xff]
    %v3265 = vld [vmem:[#allocation4 + $0x380] sm:$0xff]
    %v3266 = vld [vmem:[#allocation4 + $0x388] sm:$0xff]
    %v3267 = vld [vmem:[#allocation4 + $0x390] sm:$0xff]
    %v3268 = vld [vmem:[#allocation4 + $0x398] sm:$0xff]
    %v3269 = vld [vmem:[#allocation4 + $0x3a0] sm:$0xff]
    %v3270 = vld [vmem:[#allocation4 + $0x3a8] sm:$0xff]
    %v3271 = vld [vmem:[#allocation4 + $0x3b0] sm:$0xff]
    %v3272 = vld [vmem:[#allocation4 + $0x3b8] sm:$0xff]
    %v3273 = vld [vmem:[#allocation4 + $0x3c0] sm:$0xff]
    %v3274 = vld [vmem:[#allocation4 + $0x3c8] sm:$0xff]
    %v3275 = vld [vmem:[#allocation4 + $0x3d0] sm:$0xff]
    %v3276 = vld [vmem:[#allocation4 + $0x3d8] sm:$0xff]
    %v3277 = vld [vmem:[#allocation4 + $0x3e0] sm:$0xff]
    %v3278 = vld [vmem:[#allocation4 + $0x3e8] sm:$0xff]
    %v3279 = vld [vmem:[#allocation4 + $0x3f0] sm:$0xff]
    %v3280 = vld [vmem:[#allocation4 + $0x3f8] sm:$0xff]
    %v3281 = vunpack.c.l.s8.bf16 %v3153
    %v3282 = vunpack.c.l.s8.bf16 %v3154
    %v3283 = vunpack.c.l.s8.bf16 %v3155
    %v3284 = vunpack.c.l.s8.bf16 %v3156
    %v3285 = vunpack.c.l.s8.bf16 %v3157
    %v3286 = vunpack.c.l.s8.bf16 %v3158
    %v3287 = vunpack.c.l.s8.bf16 %v3159
    %v3288 = vunpack.c.l.s8.bf16 %v3160
    %v3289 = vunpack.c.h.s8.bf16 %v3153
    %v3290 = vunpack.c.h.s8.bf16 %v3154
    %v3291 = vunpack.c.h.s8.bf16 %v3155
    %v3292 = vunpack.c.h.s8.bf16 %v3156
    %v3293 = vunpack.c.h.s8.bf16 %v3157
    %v3294 = vunpack.c.h.s8.bf16 %v3158
    %v3295 = vunpack.c.h.s8.bf16 %v3159
    %v3296 = vunpack.c.h.s8.bf16 %v3160
    %v3297 = vunpack.c.l.s8.bf16 %v3161
    %v3298 = vunpack.c.l.s8.bf16 %v3162
    %v3299 = vunpack.c.l.s8.bf16 %v3163
    %v3300 = vunpack.c.l.s8.bf16 %v3164
    %v3301 = vunpack.c.l.s8.bf16 %v3165
    %v3302 = vunpack.c.l.s8.bf16 %v3166
    %v3303 = vunpack.c.l.s8.bf16 %v3167
    %v3304 = vunpack.c.l.s8.bf16 %v3168
    %v3305 = vunpack.c.h.s8.bf16 %v3161
    %v3306 = vunpack.c.h.s8.bf16 %v3162
    %v3307 = vunpack.c.h.s8.bf16 %v3163
    %v3308 = vunpack.c.h.s8.bf16 %v3164
    %v3309 = vunpack.c.h.s8.bf16 %v3165
    %v3310 = vunpack.c.h.s8.bf16 %v3166
    %v3311 = vunpack.c.h.s8.bf16 %v3167
    %v3312 = vunpack.c.h.s8.bf16 %v3168
    %v3313 = vunpack.c.l.s8.bf16 %v3169
    %v3314 = vunpack.c.l.s8.bf16 %v3170
    %v3315 = vunpack.c.l.s8.bf16 %v3171
    %v3316 = vunpack.c.l.s8.bf16 %v3172
    %v3317 = vunpack.c.l.s8.bf16 %v3173
    %v3318 = vunpack.c.l.s8.bf16 %v3174
    %v3319 = vunpack.c.l.s8.bf16 %v3175
    %v3320 = vunpack.c.l.s8.bf16 %v3176
    %v3321 = vunpack.c.h.s8.bf16 %v3169
    %v3322 = vunpack.c.h.s8.bf16 %v3170
    %v3323 = vunpack.c.h.s8.bf16 %v3171
    %v3324 = vunpack.c.h.s8.bf16 %v3172
    %v3325 = vunpack.c.h.s8.bf16 %v3173
    %v3326 = vunpack.c.h.s8.bf16 %v3174
    %v3327 = vunpack.c.h.s8.bf16 %v3175
    %v3328 = vunpack.c.h.s8.bf16 %v3176
    %v3329 = vunpack.c.l.s8.bf16 %v3177
    %v3330 = vunpack.c.l.s8.bf16 %v3178
    %v3331 = vunpack.c.l.s8.bf16 %v3179
    %v3332 = vunpack.c.l.s8.bf16 %v3180
    %v3333 = vunpack.c.l.s8.bf16 %v3181
    %v3334 = vunpack.c.l.s8.bf16 %v3182
    %v3335 = vunpack.c.l.s8.bf16 %v3183
    %v3336 = vunpack.c.l.s8.bf16 %v3184
    %v3337 = vunpack.c.h.s8.bf16 %v3177
    %v3338 = vunpack.c.h.s8.bf16 %v3178
    %v3339 = vunpack.c.h.s8.bf16 %v3179
    %v3340 = vunpack.c.h.s8.bf16 %v3180
    %v3341 = vunpack.c.h.s8.bf16 %v3181
    %v3342 = vunpack.c.h.s8.bf16 %v3182
    %v3343 = vunpack.c.h.s8.bf16 %v3183
    %v3344 = vunpack.c.h.s8.bf16 %v3184
    %v3345 = vunpack.c.l.s8.bf16 %v3185
    %v3346 = vunpack.c.l.s8.bf16 %v3186
    %v3347 = vunpack.c.l.s8.bf16 %v3187
    %v3348 = vunpack.c.l.s8.bf16 %v3188
    %v3349 = vunpack.c.l.s8.bf16 %v3189
    %v3350 = vunpack.c.l.s8.bf16 %v3190
    %v3351 = vunpack.c.l.s8.bf16 %v3191
    %v3352 = vunpack.c.l.s8.bf16 %v3192
    %v3353 = vunpack.c.h.s8.bf16 %v3185
    %v3354 = vunpack.c.h.s8.bf16 %v3186
    %v3355 = vunpack.c.h.s8.bf16 %v3187
    %v3356 = vunpack.c.h.s8.bf16 %v3188
    %v3357 = vunpack.c.h.s8.bf16 %v3189
    %v3358 = vunpack.c.h.s8.bf16 %v3190
    %v3359 = vunpack.c.h.s8.bf16 %v3191
    %v3360 = vunpack.c.h.s8.bf16 %v3192
    %v3361 = vunpack.c.l.s8.bf16 %v3193
    %v3362 = vunpack.c.l.s8.bf16 %v3194
    %v3363 = vunpack.c.l.s8.bf16 %v3195
    %v3364 = vunpack.c.l.s8.bf16 %v3196
    %v3365 = vunpack.c.l.s8.bf16 %v3197
    %v3366 = vunpack.c.l.s8.bf16 %v3198
    %v3367 = vunpack.c.l.s8.bf16 %v3199
    %v3368 = vunpack.c.l.s8.bf16 %v3200
    %v3369 = vunpack.c.h.s8.bf16 %v3193
    %v3370 = vunpack.c.h.s8.bf16 %v3194
    %v3371 = vunpack.c.h.s8.bf16 %v3195
    %v3372 = vunpack.c.h.s8.bf16 %v3196
    %v3373 = vunpack.c.h.s8.bf16 %v3197
    %v3374 = vunpack.c.h.s8.bf16 %v3198
    %v3375 = vunpack.c.h.s8.bf16 %v3199
    %v3376 = vunpack.c.h.s8.bf16 %v3200
    %v3377 = vunpack.c.l.s8.bf16 %v3201
    %v3378 = vunpack.c.l.s8.bf16 %v3202
    %v3379 = vunpack.c.l.s8.bf16 %v3203
    %v3380 = vunpack.c.l.s8.bf16 %v3204
    %v3381 = vunpack.c.l.s8.bf16 %v3205
    %v3382 = vunpack.c.l.s8.bf16 %v3206
    %v3383 = vunpack.c.l.s8.bf16 %v3207
    %v3384 = vunpack.c.l.s8.bf16 %v3208
    %v3385 = vunpack.c.h.s8.bf16 %v3201
    %v3386 = vunpack.c.h.s8.bf16 %v3202
    %v3387 = vunpack.c.h.s8.bf16 %v3203
    %v3388 = vunpack.c.h.s8.bf16 %v3204
    %v3389 = vunpack.c.h.s8.bf16 %v3205
    %v3390 = vunpack.c.h.s8.bf16 %v3206
    %v3391 = vunpack.c.h.s8.bf16 %v3207
    %v3392 = vunpack.c.h.s8.bf16 %v3208
    %v3393 = vunpack.c.l.s8.bf16 %v3209
    %v3394 = vunpack.c.l.s8.bf16 %v3210
    %v3395 = vunpack.c.l.s8.bf16 %v3211
    %v3396 = vunpack.c.l.s8.bf16 %v3212
    %v3397 = vunpack.c.l.s8.bf16 %v3213
    %v3398 = vunpack.c.l.s8.bf16 %v3214
    %v3399 = vunpack.c.l.s8.bf16 %v3215
    %v3400 = vunpack.c.l.s8.bf16 %v3216
    %v3401 = vunpack.c.h.s8.bf16 %v3209
    %v3402 = vunpack.c.h.s8.bf16 %v3210
    %v3403 = vunpack.c.h.s8.bf16 %v3211
    %v3404 = vunpack.c.h.s8.bf16 %v3212
    %v3405 = vunpack.c.h.s8.bf16 %v3213
    %v3406 = vunpack.c.h.s8.bf16 %v3214
    %v3407 = vunpack.c.h.s8.bf16 %v3215
    %v3408 = vunpack.c.h.s8.bf16 %v3216
    %v3409 = vunpack.c.l.s8.bf16 %v3217
    %v3410 = vunpack.c.l.s8.bf16 %v3218
    %v3411 = vunpack.c.l.s8.bf16 %v3219
    %v3412 = vunpack.c.l.s8.bf16 %v3220
    %v3413 = vunpack.c.l.s8.bf16 %v3221
    %v3414 = vunpack.c.l.s8.bf16 %v3222
    %v3415 = vunpack.c.l.s8.bf16 %v3223
    %v3416 = vunpack.c.l.s8.bf16 %v3224
    %v3417 = vunpack.c.h.s8.bf16 %v3217
    %v3418 = vunpack.c.h.s8.bf16 %v3218
    %v3419 = vunpack.c.h.s8.bf16 %v3219
    %v3420 = vunpack.c.h.s8.bf16 %v3220
    %v3421 = vunpack.c.h.s8.bf16 %v3221
    %v3422 = vunpack.c.h.s8.bf16 %v3222
    %v3423 = vunpack.c.h.s8.bf16 %v3223
    %v3424 = vunpack.c.h.s8.bf16 %v3224
    %v3425 = vunpack.c.l.s8.bf16 %v3225
    %v3426 = vunpack.c.l.s8.bf16 %v3226
    %v3427 = vunpack.c.l.s8.bf16 %v3227
    %v3428 = vunpack.c.l.s8.bf16 %v3228
    %v3429 = vunpack.c.l.s8.bf16 %v3229
    %v3430 = vunpack.c.l.s8.bf16 %v3230
    %v3431 = vunpack.c.l.s8.bf16 %v3231
    %v3432 = vunpack.c.l.s8.bf16 %v3232
    %v3433 = vunpack.c.h.s8.bf16 %v3225
    %v3434 = vunpack.c.h.s8.bf16 %v3226
    %v3435 = vunpack.c.h.s8.bf16 %v3227
    %v3436 = vunpack.c.h.s8.bf16 %v3228
    %v3437 = vunpack.c.h.s8.bf16 %v3229
    %v3438 = vunpack.c.h.s8.bf16 %v3230
    %v3439 = vunpack.c.h.s8.bf16 %v3231
    %v3440 = vunpack.c.h.s8.bf16 %v3232
    %v3441 = vunpack.c.l.s8.bf16 %v3233
    %v3442 = vunpack.c.l.s8.bf16 %v3234
    %v3443 = vunpack.c.l.s8.bf16 %v3235
    %v3444 = vunpack.c.l.s8.bf16 %v3236
    %v3445 = vunpack.c.l.s8.bf16 %v3237
    %v3446 = vunpack.c.l.s8.bf16 %v3238
    %v3447 = vunpack.c.l.s8.bf16 %v3239
    %v3448 = vunpack.c.l.s8.bf16 %v3240
    %v3449 = vunpack.c.h.s8.bf16 %v3233
    %v3450 = vunpack.c.h.s8.bf16 %v3234
    %v3451 = vunpack.c.h.s8.bf16 %v3235
    %v3452 = vunpack.c.h.s8.bf16 %v3236
    %v3453 = vunpack.c.h.s8.bf16 %v3237
    %v3454 = vunpack.c.h.s8.bf16 %v3238
    %v3455 = vunpack.c.h.s8.bf16 %v3239
    %v3456 = vunpack.c.h.s8.bf16 %v3240
    %v3457 = vunpack.c.l.s8.bf16 %v3241
    %v3458 = vunpack.c.l.s8.bf16 %v3242
    %v3459 = vunpack.c.l.s8.bf16 %v3243
    %v3460 = vunpack.c.l.s8.bf16 %v3244
    %v3461 = vunpack.c.l.s8.bf16 %v3245
    %v3462 = vunpack.c.l.s8.bf16 %v3246
    %v3463 = vunpack.c.l.s8.bf16 %v3247
    %v3464 = vunpack.c.l.s8.bf16 %v3248
    %v3465 = vunpack.c.h.s8.bf16 %v3241
    %v3466 = vunpack.c.h.s8.bf16 %v3242
    %v3467 = vunpack.c.h.s8.bf16 %v3243
    %v3468 = vunpack.c.h.s8.bf16 %v3244
    %v3469 = vunpack.c.h.s8.bf16 %v3245
    %v3470 = vunpack.c.h.s8.bf16 %v3246
    %v3471 = vunpack.c.h.s8.bf16 %v3247
    %v3472 = vunpack.c.h.s8.bf16 %v3248
    %v3473 = vunpack.c.l.s8.bf16 %v3249
    %v3474 = vunpack.c.l.s8.bf16 %v3250
    %v3475 = vunpack.c.l.s8.bf16 %v3251
    %v3476 = vunpack.c.l.s8.bf16 %v3252
    %v3477 = vunpack.c.l.s8.bf16 %v3253
    %v3478 = vunpack.c.l.s8.bf16 %v3254
    %v3479 = vunpack.c.l.s8.bf16 %v3255
    %v3480 = vunpack.c.l.s8.bf16 %v3256
    %v3481 = vunpack.c.h.s8.bf16 %v3249
    %v3482 = vunpack.c.h.s8.bf16 %v3250
    %v3483 = vunpack.c.h.s8.bf16 %v3251
    %v3484 = vunpack.c.h.s8.bf16 %v3252
    %v3485 = vunpack.c.h.s8.bf16 %v3253
    %v3486 = vunpack.c.h.s8.bf16 %v3254
    %v3487 = vunpack.c.h.s8.bf16 %v3255
    %v3488 = vunpack.c.h.s8.bf16 %v3256
    %v3489 = vunpack.c.l.s8.bf16 %v3257
    %v3490 = vunpack.c.l.s8.bf16 %v3258
    %v3491 = vunpack.c.l.s8.bf16 %v3259
    %v3492 = vunpack.c.l.s8.bf16 %v3260
    %v3493 = vunpack.c.l.s8.bf16 %v3261
    %v3494 = vunpack.c.l.s8.bf16 %v3262
    %v3495 = vunpack.c.l.s8.bf16 %v3263
    %v3496 = vunpack.c.l.s8.bf16 %v3264
    %v3497 = vunpack.c.h.s8.bf16 %v3257
    %v3498 = vunpack.c.h.s8.bf16 %v3258
    %v3499 = vunpack.c.h.s8.bf16 %v3259
    %v3500 = vunpack.c.h.s8.bf16 %v3260
    %v3501 = vunpack.c.h.s8.bf16 %v3261
    %v3502 = vunpack.c.h.s8.bf16 %v3262
    %v3503 = vunpack.c.h.s8.bf16 %v3263
    %v3504 = vunpack.c.h.s8.bf16 %v3264
    %v3505 = vunpack.c.l.s8.bf16 %v3265
    %v3506 = vunpack.c.l.s8.bf16 %v3266
    %v3507 = vunpack.c.l.s8.bf16 %v3267
    %v3508 = vunpack.c.l.s8.bf16 %v3268
    %v3509 = vunpack.c.l.s8.bf16 %v3269
    %v3510 = vunpack.c.l.s8.bf16 %v3270
    %v3511 = vunpack.c.l.s8.bf16 %v3271
    %v3512 = vunpack.c.l.s8.bf16 %v3272
    %v3513 = vunpack.c.h.s8.bf16 %v3265
    %v3514 = vunpack.c.h.s8.bf16 %v3266
    %v3515 = vunpack.c.h.s8.bf16 %v3267
    %v3516 = vunpack.c.h.s8.bf16 %v3268
    %v3517 = vunpack.c.h.s8.bf16 %v3269
    %v3518 = vunpack.c.h.s8.bf16 %v3270
    %v3519 = vunpack.c.h.s8.bf16 %v3271
    %v3520 = vunpack.c.h.s8.bf16 %v3272
    %v3521 = vunpack.c.l.s8.bf16 %v3273
    %v3522 = vunpack.c.l.s8.bf16 %v3274
    %v3523 = vunpack.c.l.s8.bf16 %v3275
    %v3524 = vunpack.c.l.s8.bf16 %v3276
    %v3525 = vunpack.c.l.s8.bf16 %v3277
    %v3526 = vunpack.c.l.s8.bf16 %v3278
    %v3527 = vunpack.c.l.s8.bf16 %v3279
    %v3528 = vunpack.c.l.s8.bf16 %v3280
    %v3529 = vunpack.c.h.s8.bf16 %v3273
    %v3530 = vunpack.c.h.s8.bf16 %v3274
    %v3531 = vunpack.c.h.s8.bf16 %v3275
    %v3532 = vunpack.c.h.s8.bf16 %v3276
    %v3533 = vunpack.c.h.s8.bf16 %v3277
    %v3534 = vunpack.c.h.s8.bf16 %v3278
    %v3535 = vunpack.c.h.s8.bf16 %v3279
    %v3536 = vunpack.c.h.s8.bf16 %v3280
    %3537 = vmatprep.subr.bf16.mxu0 %v3338
    %3538 = vmatpush1.bf16.msra.mxu0 %v3337
    %3539 = vmatprep.subr.bf16.mxu0 %v3330
    %3540 = vmatpush1.bf16.msra.mxu0 %v3329
    %3541 = vmatprep.subr.bf16.mxu0 %v3322
    %3542 = vmatpush1.bf16.msra.mxu0 %v3321
    %3543 = vmatprep.subr.bf16.mxu0 %v3314
    %3544 = vmatpush1.bf16.msra.mxu0 %v3313
    %3545 = vmatprep.subr.bf16.mxu0 %v3306
    %3546 = vmatpush1.bf16.msra.mxu0 %v3305
    %3547 = vmatprep.subr.bf16.mxu0 %v3298
    %3548 = vmatpush1.bf16.msra.mxu0 %v3297
    %3549 = vmatprep.subr.bf16.mxu0 %v3290
    %3550 = vmatpush1.bf16.msra.mxu0 %v3289
    %3551 = vmatprep.subr.bf16.mxu0 %v3282
    %3552 = vmatpush1.bf16.msra.mxu0 %v3281
    %3553 = vmatprep.subr.bf16.mxu0 %v3402
    %3554 = vmatpush2.bf16.msra.mxu0 %v3401
    %3555 = vmatprep.subr.bf16.mxu0 %v3394
    %3556 = vmatpush2.bf16.msra.mxu0 %v3393
    %3557 = vmatprep.subr.bf16.mxu0 %v3386
    %3558 = vmatpush2.bf16.msra.mxu0 %v3385
    %3559 = vmatprep.subr.bf16.mxu0 %v3378
    %3560 = vmatpush2.bf16.msra.mxu0 %v3377
    %3561 = vmatprep.subr.bf16.mxu0 %v3370
    %3562 = vmatpush2.bf16.msra.mxu0 %v3369
    %3563 = vmatprep.subr.bf16.mxu0 %v3362
    %3564 = vmatpush2.bf16.msra.mxu0 %v3361
    %3565 = vmatprep.subr.bf16.mxu0 %v3354
    %3566 = vmatpush2.bf16.msra.mxu0 %v3353
    %3567 = vmatprep.subr.bf16.mxu0 %v3346
    %3568 = vmatpush2.bf16.msra.mxu0 %v3345
    %3569 = vmatprep.mubr.bf16.mxu0 %v3150
    %3570 = vmatmul.mubr.bf16.gmra.mxu0 %v3149
    %v3571 = vpop.f32.mrf.mxu0
    %v3572 = vadd.f32 0.0, %v3571
    %v3573 = vpop.f32.mrf.mxu0
    %v3574 = vadd.f32 0.0, %v3573
    %v3575 = vpop.f32.mrf.mxu0
    %v3576 = vpop.f32.mrf.mxu0
    %3577 = vdwg.mxu0
    %3578 = vmatprep.subr.bf16.mxu0 %v3466
    %3579 = vmatpush1.bf16.msra.mxu0 %v3465
    %3580 = vmatprep.subr.bf16.mxu0 %v3458
    %3581 = vmatpush1.bf16.msra.mxu0 %v3457
    %3582 = vmatprep.subr.bf16.mxu0 %v3450
    %3583 = vmatpush1.bf16.msra.mxu0 %v3449
    %3584 = vmatprep.subr.bf16.mxu0 %v3442
    %3585 = vmatpush1.bf16.msra.mxu0 %v3441
    %3586 = vmatprep.subr.bf16.mxu0 %v3434
    %3587 = vmatpush1.bf16.msra.mxu0 %v3433
    %3588 = vmatprep.subr.bf16.mxu0 %v3426
    %3589 = vmatpush1.bf16.msra.mxu0 %v3425
    %3590 = vmatprep.subr.bf16.mxu0 %v3418
    %3591 = vmatpush1.bf16.msra.mxu0 %v3417
    %3592 = vmatprep.subr.bf16.mxu0 %v3410
    %3593 = vmatpush1.bf16.msra.mxu0 %v3409
    %3594 = vmatprep.subr.bf16.mxu0 %v3530
    %3595 = vmatpush2.bf16.msra.mxu0 %v3529
    %3596 = vmatprep.subr.bf16.mxu0 %v3522
    %3597 = vmatpush2.bf16.msra.mxu0 %v3521
    %3598 = vmatprep.subr.bf16.mxu0 %v3514
    %3599 = vmatpush2.bf16.msra.mxu0 %v3513
    %3600 = vmatprep.subr.bf16.mxu0 %v3506
    %3601 = vmatpush2.bf16.msra.mxu0 %v3505
    %3602 = vmatprep.subr.bf16.mxu0 %v3498
    %3603 = vmatpush2.bf16.msra.mxu0 %v3497
    %3604 = vmatprep.subr.bf16.mxu0 %v3490
    %3605 = vmatpush2.bf16.msra.mxu0 %v3489
    %3606 = vmatprep.subr.bf16.mxu0 %v3482
    %3607 = vmatpush2.bf16.msra.mxu0 %v3481
    %3608 = vmatprep.subr.bf16.mxu0 %v3474
    %3609 = vmatpush2.bf16.msra.mxu0 %v3473
    %3610 = vmatprep.mubr.bf16.mxu0 %v3152
    %3611 = vmatmul.mubr.bf16.gmra.mxu0 %v3151
    %v3612 = vpop.f32.mrf.mxu0
    %v3613 = vadd.f32 %v3572, %v3612
    %v3614 = vpop.f32.mrf.mxu0
    %v3615 = vadd.f32 %v3574, %v3614
    %v3616 = vpop.f32.mrf.mxu0
    %v3617 = vpop.f32.mrf.mxu0
    %3618 = vdwg.mxu0
    %3619 = vmatprep.subr.bf16.mxu0 %v3340
    %3620 = vmatpush1.bf16.msra.mxu0 %v3339
    %3621 = vmatprep.subr.bf16.mxu0 %v3332
    %3622 = vmatpush1.bf16.msra.mxu0 %v3331
    %3623 = vmatprep.subr.bf16.mxu0 %v3324
    %3624 = vmatpush1.bf16.msra.mxu0 %v3323
    %3625 = vmatprep.subr.bf16.mxu0 %v3316
    %3626 = vmatpush1.bf16.msra.mxu0 %v3315
    %3627 = vmatprep.subr.bf16.mxu0 %v3308
    %3628 = vmatpush1.bf16.msra.mxu0 %v3307
    %3629 = vmatprep.subr.bf16.mxu0 %v3300
    %3630 = vmatpush1.bf16.msra.mxu0 %v3299
    %3631 = vmatprep.subr.bf16.mxu0 %v3292
    %3632 = vmatpush1.bf16.msra.mxu0 %v3291
    %3633 = vmatprep.subr.bf16.mxu0 %v3284
    %3634 = vmatpush1.bf16.msra.mxu0 %v3283
    %3635 = vmatprep.subr.bf16.mxu0 %v3404
    %3636 = vmatpush2.bf16.msra.mxu0 %v3403
    %3637 = vmatprep.subr.bf16.mxu0 %v3396
    %3638 = vmatpush2.bf16.msra.mxu0 %v3395
    %3639 = vmatprep.subr.bf16.mxu0 %v3388
    %3640 = vmatpush2.bf16.msra.mxu0 %v3387
    %3641 = vmatprep.subr.bf16.mxu0 %v3380
    %3642 = vmatpush2.bf16.msra.mxu0 %v3379
    %3643 = vmatprep.subr.bf16.mxu0 %v3372
    %3644 = vmatpush2.bf16.msra.mxu0 %v3371
    %3645 = vmatprep.subr.bf16.mxu0 %v3364
    %3646 = vmatpush2.bf16.msra.mxu0 %v3363
    %3647 = vmatprep.subr.bf16.mxu0 %v3356
    %3648 = vmatpush2.bf16.msra.mxu0 %v3355
    %3649 = vmatprep.subr.bf16.mxu0 %v3348
    %3650 = vmatpush2.bf16.msra.mxu0 %v3347
    %3651 = vmatprep.mubr.bf16.mxu0 %v3150
    %3652 = vmatmul.mubr.bf16.gmra.mxu0 %v3149
    %v3653 = vpop.f32.mrf.mxu0
    %v3654 = vadd.f32 0.0, %v3653
    %v3655 = vpop.f32.mrf.mxu0
    %v3656 = vadd.f32 0.0, %v3655
    %v3657 = vpop.f32.mrf.mxu0
    %v3658 = vpop.f32.mrf.mxu0
    %3659 = vdwg.mxu0
    %3660 = vmatprep.subr.bf16.mxu0 %v3468
    %3661 = vmatpush1.bf16.msra.mxu0 %v3467
    %3662 = vmatprep.subr.bf16.mxu0 %v3460
    %3663 = vmatpush1.bf16.msra.mxu0 %v3459
    %3664 = vmatprep.subr.bf16.mxu0 %v3452
    %3665 = vmatpush1.bf16.msra.mxu0 %v3451
    %3666 = vmatprep.subr.bf16.mxu0 %v3444
    %3667 = vmatpush1.bf16.msra.mxu0 %v3443
    %3668 = vmatprep.subr.bf16.mxu0 %v3436
    %3669 = vmatpush1.bf16.msra.mxu0 %v3435
    %3670 = vmatprep.subr.bf16.mxu0 %v3428
    %3671 = vmatpush1.bf16.msra.mxu0 %v3427
    %3672 = vmatprep.subr.bf16.mxu0 %v3420
    %3673 = vmatpush1.bf16.msra.mxu0 %v3419
    %3674 = vmatprep.subr.bf16.mxu0 %v3412
    %3675 = vmatpush1.bf16.msra.mxu0 %v3411
    %3676 = vmatprep.subr.bf16.mxu0 %v3532
    %3677 = vmatpush2.bf16.msra.mxu0 %v3531
    %3678 = vmatprep.subr.bf16.mxu0 %v3524
    %3679 = vmatpush2.bf16.msra.mxu0 %v3523
    %3680 = vmatprep.subr.bf16.mxu0 %v3516
    %3681 = vmatpush2.bf16.msra.mxu0 %v3515
    %3682 = vmatprep.subr.bf16.mxu0 %v3508
    %3683 = vmatpush2.bf16.msra.mxu0 %v3507
    %3684 = vmatprep.subr.bf16.mxu0 %v3500
    %3685 = vmatpush2.bf16.msra.mxu0 %v3499
    %3686 = vmatprep.subr.bf16.mxu0 %v3492
    %3687 = vmatpush2.bf16.msra.mxu0 %v3491
    %3688 = vmatprep.subr.bf16.mxu0 %v3484
    %3689 = vmatpush2.bf16.msra.mxu0 %v3483
    %3690 = vmatprep.subr.bf16.mxu0 %v3476
    %3691 = vmatpush2.bf16.msra.mxu0 %v3475
    %3692 = vmatprep.mubr.bf16.mxu0 %v3152
    %3693 = vmatmul.mubr.bf16.gmra.mxu0 %v3151
    %v3694 = vpop.f32.mrf.mxu0
    %v3695 = vadd.f32 %v3654, %v3694
    %v3696 = vpop.f32.mrf.mxu0
    %v3697 = vadd.f32 %v3656, %v3696
    %v3698 = vpop.f32.mrf.mxu0
    %v3699 = vpop.f32.mrf.mxu0
    %3700 = vdwg.mxu0
    %3701 = vmatprep.subr.bf16.mxu0 %v3342
    %3702 = vmatpush1.bf16.msra.mxu0 %v3341
    %3703 = vmatprep.subr.bf16.mxu0 %v3334
    %3704 = vmatpush1.bf16.msra.mxu0 %v3333
    %3705 = vmatprep.subr.bf16.mxu0 %v3326
    %3706 = vmatpush1.bf16.msra.mxu0 %v3325
    %3707 = vmatprep.subr.bf16.mxu0 %v3318
    %3708 = vmatpush1.bf16.msra.mxu0 %v3317
    %3709 = vmatprep.subr.bf16.mxu0 %v3310
    %3710 = vmatpush1.bf16.msra.mxu0 %v3309
    %3711 = vmatprep.subr.bf16.mxu0 %v3302
    %3712 = vmatpush1.bf16.msra.mxu0 %v3301
    %3713 = vmatprep.subr.bf16.mxu0 %v3294
    %3714 = vmatpush1.bf16.msra.mxu0 %v3293
    %3715 = vmatprep.subr.bf16.mxu0 %v3286
    %3716 = vmatpush1.bf16.msra.mxu0 %v3285
    %3717 = vmatprep.subr.bf16.mxu0 %v3406
    %3718 = vmatpush2.bf16.msra.mxu0 %v3405
    %3719 = vmatprep.subr.bf16.mxu0 %v3398
    %3720 = vmatpush2.bf16.msra.mxu0 %v3397
    %3721 = vmatprep.subr.bf16.mxu0 %v3390
    %3722 = vmatpush2.bf16.msra.mxu0 %v3389
    %3723 = vmatprep.subr.bf16.mxu0 %v3382
    %3724 = vmatpush2.bf16.msra.mxu0 %v3381
    %3725 = vmatprep.subr.bf16.mxu0 %v3374
    %3726 = vmatpush2.bf16.msra.mxu0 %v3373
    %3727 = vmatprep.subr.bf16.mxu0 %v3366
    %3728 = vmatpush2.bf16.msra.mxu0 %v3365
    %3729 = vmatprep.subr.bf16.mxu0 %v3358
    %3730 = vmatpush2.bf16.msra.mxu0 %v3357
    %3731 = vmatprep.subr.bf16.mxu0 %v3350
    %3732 = vmatpush2.bf16.msra.mxu0 %v3349
    %3733 = vmatprep.mubr.bf16.mxu0 %v3150
    %3734 = vmatmul.mubr.bf16.gmra.mxu0 %v3149
    %v3735 = vpop.f32.mrf.mxu0
    %v3736 = vadd.f32 0.0, %v3735
    %v3737 = vpop.f32.mrf.mxu0
    %v3738 = vadd.f32 0.0, %v3737
    %v3739 = vpop.f32.mrf.mxu0
    %v3740 = vpop.f32.mrf.mxu0
    %3741 = vdwg.mxu0
    %3742 = vmatprep.subr.bf16.mxu0 %v3470
    %3743 = vmatpush1.bf16.msra.mxu0 %v3469
    %3744 = vmatprep.subr.bf16.mxu0 %v3462
    %3745 = vmatpush1.bf16.msra.mxu0 %v3461
    %3746 = vmatprep.subr.bf16.mxu0 %v3454
    %3747 = vmatpush1.bf16.msra.mxu0 %v3453
    %3748 = vmatprep.subr.bf16.mxu0 %v3446
    %3749 = vmatpush1.bf16.msra.mxu0 %v3445
    %3750 = vmatprep.subr.bf16.mxu0 %v3438
    %3751 = vmatpush1.bf16.msra.mxu0 %v3437
    %3752 = vmatprep.subr.bf16.mxu0 %v3430
    %3753 = vmatpush1.bf16.msra.mxu0 %v3429
    %3754 = vmatprep.subr.bf16.mxu0 %v3422
    %3755 = vmatpush1.bf16.msra.mxu0 %v3421
    %3756 = vmatprep.subr.bf16.mxu0 %v3414
    %3757 = vmatpush1.bf16.msra.mxu0 %v3413
    %3758 = vmatprep.subr.bf16.mxu0 %v3534
    %3759 = vmatpush2.bf16.msra.mxu0 %v3533
    %3760 = vmatprep.subr.bf16.mxu0 %v3526
    %3761 = vmatpush2.bf16.msra.mxu0 %v3525
    %3762 = vmatprep.subr.bf16.mxu0 %v3518
    %3763 = vmatpush2.bf16.msra.mxu0 %v3517
    %3764 = vmatprep.subr.bf16.mxu0 %v3510
    %3765 = vmatpush2.bf16.msra.mxu0 %v3509
    %3766 = vmatprep.subr.bf16.mxu0 %v3502
    %3767 = vmatpush2.bf16.msra.mxu0 %v3501
    %3768 = vmatprep.subr.bf16.mxu0 %v3494
    %3769 = vmatpush2.bf16.msra.mxu0 %v3493
    %3770 = vmatprep.subr.bf16.mxu0 %v3486
    %3771 = vmatpush2.bf16.msra.mxu0 %v3485
    %3772 = vmatprep.subr.bf16.mxu0 %v3478
    %3773 = vmatpush2.bf16.msra.mxu0 %v3477
    %3774 = vmatprep.mubr.bf16.mxu0 %v3152
    %3775 = vmatmul.mubr.bf16.gmra.mxu0 %v3151
    %v3776 = vpop.f32.mrf.mxu0
    %v3777 = vadd.f32 %v3736, %v3776
    %v3778 = vpop.f32.mrf.mxu0
    %v3779 = vadd.f32 %v3738, %v3778
    %v3780 = vpop.f32.mrf.mxu0
    %v3781 = vpop.f32.mrf.mxu0
    %3782 = vdwg.mxu0
    %3783 = vmatprep.subr.bf16.mxu0 %v3344
    %3784 = vmatpush1.bf16.msra.mxu0 %v3343
    %3785 = vmatprep.subr.bf16.mxu0 %v3336
    %3786 = vmatpush1.bf16.msra.mxu0 %v3335
    %3787 = vmatprep.subr.bf16.mxu0 %v3328
    %3788 = vmatpush1.bf16.msra.mxu0 %v3327
    %3789 = vmatprep.subr.bf16.mxu0 %v3320
    %3790 = vmatpush1.bf16.msra.mxu0 %v3319
    %3791 = vmatprep.subr.bf16.mxu0 %v3312
    %3792 = vmatpush1.bf16.msra.mxu0 %v3311
    %3793 = vmatprep.subr.bf16.mxu0 %v3304
    %3794 = vmatpush1.bf16.msra.mxu0 %v3303
    %3795 = vmatprep.subr.bf16.mxu0 %v3296
    %3796 = vmatpush1.bf16.msra.mxu0 %v3295
    %3797 = vmatprep.subr.bf16.mxu0 %v3288
    %3798 = vmatpush1.bf16.msra.mxu0 %v3287
    %3799 = vmatprep.subr.bf16.mxu0 %v3408
    %3800 = vmatpush2.bf16.msra.mxu0 %v3407
    %3801 = vmatprep.subr.bf16.mxu0 %v3400
    %3802 = vmatpush2.bf16.msra.mxu0 %v3399
    %3803 = vmatprep.subr.bf16.mxu0 %v3392
    %3804 = vmatpush2.bf16.msra.mxu0 %v3391
    %3805 = vmatprep.subr.bf16.mxu0 %v3384
    %3806 = vmatpush2.bf16.msra.mxu0 %v3383
    %3807 = vmatprep.subr.bf16.mxu0 %v3376
    %3808 = vmatpush2.bf16.msra.mxu0 %v3375
    %3809 = vmatprep.subr.bf16.mxu0 %v3368
    %3810 = vmatpush2.bf16.msra.mxu0 %v3367
    %3811 = vmatprep.subr.bf16.mxu0 %v3360
    %3812 = vmatpush2.bf16.msra.mxu0 %v3359
    %3813 = vmatprep.subr.bf16.mxu0 %v3352
    %3814 = vmatpush2.bf16.msra.mxu0 %v3351
    %3815 = vmatprep.mubr.bf16.mxu0 %v3150
    %3816 = vmatmul.mubr.bf16.gmra.mxu0 %v3149
    %v3817 = vpop.f32.mrf.mxu0
    %v3818 = vadd.f32 0.0, %v3817
    %v3819 = vpop.f32.mrf.mxu0
    %v3820 = vadd.f32 0.0, %v3819
    %v3821 = vpop.f32.mrf.mxu0
    %v3822 = vpop.f32.mrf.mxu0
    %3823 = vdwg.mxu0
    %3824 = vmatprep.subr.bf16.mxu0 %v3472
    %3825 = vmatpush1.bf16.msra.mxu0 %v3471
    %3826 = vmatprep.subr.bf16.mxu0 %v3464
    %3827 = vmatpush1.bf16.msra.mxu0 %v3463
    %3828 = vmatprep.subr.bf16.mxu0 %v3456
    %3829 = vmatpush1.bf16.msra.mxu0 %v3455
    %3830 = vmatprep.subr.bf16.mxu0 %v3448
    %3831 = vmatpush1.bf16.msra.mxu0 %v3447
    %3832 = vmatprep.subr.bf16.mxu0 %v3440
    %3833 = vmatpush1.bf16.msra.mxu0 %v3439
    %3834 = vmatprep.subr.bf16.mxu0 %v3432
    %3835 = vmatpush1.bf16.msra.mxu0 %v3431
    %3836 = vmatprep.subr.bf16.mxu0 %v3424
    %3837 = vmatpush1.bf16.msra.mxu0 %v3423
    %3838 = vmatprep.subr.bf16.mxu0 %v3416
    %3839 = vmatpush1.bf16.msra.mxu0 %v3415
    %3840 = vmatprep.subr.bf16.mxu0 %v3536
    %3841 = vmatpush2.bf16.msra.mxu0 %v3535
    %3842 = vmatprep.subr.bf16.mxu0 %v3528
    %3843 = vmatpush2.bf16.msra.mxu0 %v3527
    %3844 = vmatprep.subr.bf16.mxu0 %v3520
    %3845 = vmatpush2.bf16.msra.mxu0 %v3519
    %3846 = vmatprep.subr.bf16.mxu0 %v3512
    %3847 = vmatpush2.bf16.msra.mxu0 %v3511
    %3848 = vmatprep.subr.bf16.mxu0 %v3504
    %3849 = vmatpush2.bf16.msra.mxu0 %v3503
    %3850 = vmatprep.subr.bf16.mxu0 %v3496
    %3851 = vmatpush2.bf16.msra.mxu0 %v3495
    %3852 = vmatprep.subr.bf16.mxu0 %v3488
    %3853 = vmatpush2.bf16.msra.mxu0 %v3487
    %3854 = vmatprep.subr.bf16.mxu0 %v3480
    %3855 = vmatpush2.bf16.msra.mxu0 %v3479
    %3856 = vmatprep.mubr.bf16.mxu0 %v3152
    %3857 = vmatmul.mubr.bf16.gmra.mxu0 %v3151
    %v3858 = vpop.f32.mrf.mxu0
    %v3859 = vadd.f32 %v3818, %v3858
    %v3860 = vpop.f32.mrf.mxu0
    %v3861 = vadd.f32 %v3820, %v3860
    %v3862 = vpop.f32.mrf.mxu0
    %v3863 = vpop.f32.mrf.mxu0
    %3864 = vdwg.mxu0
    %v3866 = vlaneseq
    %v3867 = vshrl.u32 %v3866, 7
    %v3868 = vsub.s32 0, %v3867
    %v3869 = vrot.slane %v315, %v3868
    %v3870 = vlaneseq
    %v3871 = vshrl.u32 %v3870, 7
    %v3872 = vsub.s32 1, %v3871
    %v3873 = vrot.slane %v315, %v3872
    %v3874 = vlaneseq
    %v3875 = vshrl.u32 %v3874, 7
    %v3876 = vsub.s32 2, %v3875
    %v3877 = vrot.slane %v315, %v3876
    %v3878 = vlaneseq
    %v3879 = vshrl.u32 %v3878, 7
    %v3880 = vsub.s32 3, %v3879
    %v3881 = vrot.slane %v315, %v3880
    %v3882 = vlaneseq
    %v3883 = vshrl.u32 %v3882, 7
    %v3884 = vsub.s32 4, %v3883
    %v3885 = vrot.slane %v315, %v3884
    %v3886 = vlaneseq
    %v3887 = vshrl.u32 %v3886, 7
    %v3888 = vsub.s32 5, %v3887
    %v3889 = vrot.slane %v315, %v3888
    %v3890 = vlaneseq
    %v3891 = vshrl.u32 %v3890, 7
    %v3892 = vsub.s32 6, %v3891
    %v3893 = vrot.slane %v315, %v3892
    %v3894 = vlaneseq
    %v3895 = vshrl.u32 %v3894, 7
    %v3896 = vsub.s32 7, %v3895
    %v3897 = vrot.slane %v315, %v3896
    %v3906 = vmul.f32 %v3613, %v3869
    %v3907 = vmul.f32 %v3615, %v3873
    %v3908 = vmul.f32 %v3695, %v3877
    %v3909 = vmul.f32 %v3697, %v3881
    %v3910 = vmul.f32 %v3777, %v3885
    %v3911 = vmul.f32 %v3779, %v3889
    %v3912 = vmul.f32 %v3859, %v3893
    %v3913 = vmul.f32 %v3861, %v3897
    %v3915 = vlaneseq
    %v3916 = vshrl.u32 %v3915, 7
    %v3917 = vsub.s32 0, %v3916
    %v3918 = vrot.slane %v311, %v3917
    %v3919 = vlaneseq
    %v3920 = vshrl.u32 %v3919, 7
    %v3921 = vsub.s32 1, %v3920
    %v3922 = vrot.slane %v311, %v3921
    %v3923 = vlaneseq
    %v3924 = vshrl.u32 %v3923, 7
    %v3925 = vsub.s32 2, %v3924
    %v3926 = vrot.slane %v311, %v3925
    %v3927 = vlaneseq
    %v3928 = vshrl.u32 %v3927, 7
    %v3929 = vsub.s32 3, %v3928
    %v3930 = vrot.slane %v311, %v3929
    %v3931 = vlaneseq
    %v3932 = vshrl.u32 %v3931, 7
    %v3933 = vsub.s32 4, %v3932
    %v3934 = vrot.slane %v311, %v3933
    %v3935 = vlaneseq
    %v3936 = vshrl.u32 %v3935, 7
    %v3937 = vsub.s32 5, %v3936
    %v3938 = vrot.slane %v311, %v3937
    %v3939 = vlaneseq
    %v3940 = vshrl.u32 %v3939, 7
    %v3941 = vsub.s32 6, %v3940
    %v3942 = vrot.slane %v311, %v3941
    %v3943 = vlaneseq
    %v3944 = vshrl.u32 %v3943, 7
    %v3945 = vsub.s32 7, %v3944
    %v3946 = vrot.slane %v311, %v3945
    %v3955 = vadd.f32 %v3906, %v3918
    %v3956 = vadd.f32 %v3907, %v3922
    %v3957 = vadd.f32 %v3908, %v3926
    %v3958 = vadd.f32 %v3909, %v3930
    %v3959 = vadd.f32 %v3910, %v3934
    %v3960 = vadd.f32 %v3911, %v3938
    %v3961 = vadd.f32 %v3912, %v3942
    %v3962 = vadd.f32 %v3913, %v3946
    %v3963 = vsel %vm2436, %v3955, 0.0
    %v3964 = vrot.slane %v3963, 4
    %v3965 = vadd.f32 %v3963, %v3964
    %v3966 = vrot.slane %v3965, 2
    %v3967 = vadd.f32 %v3965, %v3966
    %v3968 = vrot.slane %v3967, 1
    %v3969 = vadd.f32 %v3967, %v3968
    %v3970 = vsel %vm2436, %v3956, 0.0
    %v3971 = vrot.slane %v3970, 4
    %v3972 = vadd.f32 %v3970, %v3971
    %v3973 = vrot.slane %v3972, 2
    %v3974 = vadd.f32 %v3972, %v3973
    %v3975 = vrot.slane %v3974, 1
    %v3976 = vadd.f32 %v3974, %v3975
    %v3977 = vsel %vm2436, %v3957, 0.0
    %v3978 = vrot.slane %v3977, 4
    %v3979 = vadd.f32 %v3977, %v3978
    %v3980 = vrot.slane %v3979, 2
    %v3981 = vadd.f32 %v3979, %v3980
    %v3982 = vrot.slane %v3981, 1
    %v3983 = vadd.f32 %v3981, %v3982
    %v3984 = vsel %vm2436, %v3958, 0.0
    %v3985 = vrot.slane %v3984, 4
    %v3986 = vadd.f32 %v3984, %v3985
    %v3987 = vrot.slane %v3986, 2
    %v3988 = vadd.f32 %v3986, %v3987
    %v3989 = vrot.slane %v3988, 1
    %v3990 = vadd.f32 %v3988, %v3989
    %v3991 = vsel %vm2436, %v3959, 0.0
    %v3992 = vrot.slane %v3991, 4
    %v3993 = vadd.f32 %v3991, %v3992
    %v3994 = vrot.slane %v3993, 2
    %v3995 = vadd.f32 %v3993, %v3994
    %v3996 = vrot.slane %v3995, 1
    %v3997 = vadd.f32 %v3995, %v3996
    %v3998 = vsel %vm2436, %v3960, 0.0
    %v3999 = vrot.slane %v3998, 4
    %v4000 = vadd.f32 %v3998, %v3999
    %v4001 = vrot.slane %v4000, 2
    %v4002 = vadd.f32 %v4000, %v4001
    %v4003 = vrot.slane %v4002, 1
    %v4004 = vadd.f32 %v4002, %v4003
    %v4005 = vsel %vm2436, %v3961, 0.0
    %v4006 = vrot.slane %v4005, 4
    %v4007 = vadd.f32 %v4005, %v4006
    %v4008 = vrot.slane %v4007, 2
    %v4009 = vadd.f32 %v4007, %v4008
    %v4010 = vrot.slane %v4009, 1
    %v4011 = vadd.f32 %v4009, %v4010
    %v4012 = vsel %vm2436, %v3962, 0.0
    %v4013 = vrot.slane %v4012, 4
    %v4014 = vadd.f32 %v4012, %v4013
    %v4015 = vrot.slane %v4014, 2
    %v4016 = vadd.f32 %v4014, %v4015
    %v4017 = vrot.slane %v4016, 1
    %v4018 = vadd.f32 %v4016, %v4017
    %v4019 = vmul.f32 %v3969, %v2451
    %v4020 = vmul.f32 %v3976, %v2451
    %v4021 = vmul.f32 %v3983, %v2451
    %v4022 = vmul.f32 %v3990, %v2451
    %v4023 = vmul.f32 %v3997, %v2451
    %v4024 = vmul.f32 %v4004, %v2451
    %v4025 = vmul.f32 %v4011, %v2451
    %v4026 = vmul.f32 %v4018, %v2451
    %v4027 = vsub.f32 %v3955, %v4019
    %v4028 = vsub.f32 %v3956, %v4020
    %v4029 = vsub.f32 %v3957, %v4021
    %v4030 = vsub.f32 %v3958, %v4022
    %v4031 = vsub.f32 %v3959, %v4023
    %v4032 = vsub.f32 %v3960, %v4024
    %v4033 = vsub.f32 %v3961, %v4025
    %v4034 = vsub.f32 %v3962, %v4026
    %v4035 = vmul.f32 %v4027, %v4027
    %v4036 = vmul.f32 %v4028, %v4028
    %v4037 = vmul.f32 %v4029, %v4029
    %v4038 = vmul.f32 %v4030, %v4030
    %v4039 = vmul.f32 %v4031, %v4031
    %v4040 = vmul.f32 %v4032, %v4032
    %v4041 = vmul.f32 %v4033, %v4033
    %v4042 = vmul.f32 %v4034, %v4034
    %v4043 = vsel %vm2436, %v4035, 0.0
    %v4044 = vrot.slane %v4043, 4
    %v4045 = vadd.f32 %v4043, %v4044
    %v4046 = vrot.slane %v4045, 2
    %v4047 = vadd.f32 %v4045, %v4046
    %v4048 = vrot.slane %v4047, 1
    %v4049 = vadd.f32 %v4047, %v4048
    %v4050 = vsel %vm2436, %v4036, 0.0
    %v4051 = vrot.slane %v4050, 4
    %v4052 = vadd.f32 %v4050, %v4051
    %v4053 = vrot.slane %v4052, 2
    %v4054 = vadd.f32 %v4052, %v4053
    %v4055 = vrot.slane %v4054, 1
    %v4056 = vadd.f32 %v4054, %v4055
    %v4057 = vsel %vm2436, %v4037, 0.0
    %v4058 = vrot.slane %v4057, 4
    %v4059 = vadd.f32 %v4057, %v4058
    %v4060 = vrot.slane %v4059, 2
    %v4061 = vadd.f32 %v4059, %v4060
    %v4062 = vrot.slane %v4061, 1
    %v4063 = vadd.f32 %v4061, %v4062
    %v4064 = vsel %vm2436, %v4038, 0.0
    %v4065 = vrot.slane %v4064, 4
    %v4066 = vadd.f32 %v4064, %v4065
    %v4067 = vrot.slane %v4066, 2
    %v4068 = vadd.f32 %v4066, %v4067
    %v4069 = vrot.slane %v4068, 1
    %v4070 = vadd.f32 %v4068, %v4069
    %v4071 = vsel %vm2436, %v4039, 0.0
    %v4072 = vrot.slane %v4071, 4
    %v4073 = vadd.f32 %v4071, %v4072
    %v4074 = vrot.slane %v4073, 2
    %v4075 = vadd.f32 %v4073, %v4074
    %v4076 = vrot.slane %v4075, 1
    %v4077 = vadd.f32 %v4075, %v4076
    %v4078 = vsel %vm2436, %v4040, 0.0
    %v4079 = vrot.slane %v4078, 4
    %v4080 = vadd.f32 %v4078, %v4079
    %v4081 = vrot.slane %v4080, 2
    %v4082 = vadd.f32 %v4080, %v4081
    %v4083 = vrot.slane %v4082, 1
    %v4084 = vadd.f32 %v4082, %v4083
    %v4085 = vsel %vm2436, %v4041, 0.0
    %v4086 = vrot.slane %v4085, 4
    %v4087 = vadd.f32 %v4085, %v4086
    %v4088 = vrot.slane %v4087, 2
    %v4089 = vadd.f32 %v4087, %v4088
    %v4090 = vrot.slane %v4089, 1
    %v4091 = vadd.f32 %v4089, %v4090
    %v4092 = vsel %vm2436, %v4042, 0.0
    %v4093 = vrot.slane %v4092, 4
    %v4094 = vadd.f32 %v4092, %v4093
    %v4095 = vrot.slane %v4094, 2
    %v4096 = vadd.f32 %v4094, %v4095
    %v4097 = vrot.slane %v4096, 1
    %v4098 = vadd.f32 %v4096, %v4097
    %v4099 = vmul.f32 %v4049, %v2451
    %v4100 = vmul.f32 %v4056, %v2451
    %v4101 = vmul.f32 %v4063, %v2451
    %v4102 = vmul.f32 %v4070, %v2451
    %v4103 = vmul.f32 %v4077, %v2451
    %v4104 = vmul.f32 %v4084, %v2451
    %v4105 = vmul.f32 %v4091, %v2451
    %v4106 = vmul.f32 %v4098, %v2451
    %v4107 = vadd.f32 %v4099, 0.8
    %v4108 = vadd.f32 %v4100, 0.8
    %v4109 = vadd.f32 %v4101, 0.8
    %v4110 = vadd.f32 %v4102, 0.8
    %v4111 = vadd.f32 %v4103, 0.8
    %v4112 = vadd.f32 %v4104, 0.8
    %v4113 = vadd.f32 %v4105, 0.8
    %v4114 = vadd.f32 %v4106, 0.8
    %v4115 = vrsqrt.pop %v4107
    %v4116 = vrsqrt.pop %v4108
    %v4117 = vrsqrt.pop %v4109
    %v4118 = vrsqrt.pop %v4110
    %v4119 = vrsqrt.pop %v4111
    %v4120 = vrsqrt.pop %v4112
    %v4121 = vrsqrt.pop %v4113
    %v4122 = vrsqrt.pop %v4114
    %v4123 = vmul.f32 %v4027, %v4115
    %v4124 = vmul.f32 %v4028, %v4116
    %v4125 = vmul.f32 %v4029, %v4117
    %v4126 = vmul.f32 %v4030, %v4118
    %v4127 = vmul.f32 %v4031, %v4119
    %v4128 = vmul.f32 %v4032, %v4120
    %v4129 = vmul.f32 %v4033, %v4121
    %v4130 = vmul.f32 %v4034, %v4122
    %v4132 = vlaneseq
    %v4133 = vshrl.u32 %v4132, 7
    %v4134 = vsub.s32 0, %v4133
    %v4135 = vrot.slane %v312, %v4134
    %v4136 = vlaneseq
    %v4137 = vshrl.u32 %v4136, 7
    %v4138 = vsub.s32 1, %v4137
    %v4139 = vrot.slane %v312, %v4138
    %v4140 = vlaneseq
    %v4141 = vshrl.u32 %v4140, 7
    %v4142 = vsub.s32 2, %v4141
    %v4143 = vrot.slane %v312, %v4142
    %v4144 = vlaneseq
    %v4145 = vshrl.u32 %v4144, 7
    %v4146 = vsub.s32 3, %v4145
    %v4147 = vrot.slane %v312, %v4146
    %v4148 = vlaneseq
    %v4149 = vshrl.u32 %v4148, 7
    %v4150 = vsub.s32 4, %v4149
    %v4151 = vrot.slane %v312, %v4150
    %v4152 = vlaneseq
    %v4153 = vshrl.u32 %v4152, 7
    %v4154 = vsub.s32 5, %v4153
    %v4155 = vrot.slane %v312, %v4154
    %v4156 = vlaneseq
    %v4157 = vshrl.u32 %v4156, 7
    %v4158 = vsub.s32 6, %v4157
    %v4159 = vrot.slane %v312, %v4158
    %v4160 = vlaneseq
    %v4161 = vshrl.u32 %v4160, 7
    %v4162 = vsub.s32 7, %v4161
    %v4163 = vrot.slane %v312, %v4162
    %v4172 = vmul.f32 %v4123, %v4135
    %v4173 = vmul.f32 %v4124, %v4139
    %v4174 = vmul.f32 %v4125, %v4143
    %v4175 = vmul.f32 %v4126, %v4147
    %v4176 = vmul.f32 %v4127, %v4151
    %v4177 = vmul.f32 %v4128, %v4155
    %v4178 = vmul.f32 %v4129, %v4159
    %v4179 = vmul.f32 %v4130, %v4163
    %v4181 = vlaneseq
    %v4182 = vshrl.u32 %v4181, 7
    %v4183 = vsub.s32 0, %v4182
    %v4184 = vrot.slane %v313, %v4183
    %v4185 = vlaneseq
    %v4186 = vshrl.u32 %v4185, 7
    %v4187 = vsub.s32 1, %v4186
    %v4188 = vrot.slane %v313, %v4187
    %v4189 = vlaneseq
    %v4190 = vshrl.u32 %v4189, 7
    %v4191 = vsub.s32 2, %v4190
    %v4192 = vrot.slane %v313, %v4191
    %v4193 = vlaneseq
    %v4194 = vshrl.u32 %v4193, 7
    %v4195 = vsub.s32 3, %v4194
    %v4196 = vrot.slane %v313, %v4195
    %v4197 = vlaneseq
    %v4198 = vshrl.u32 %v4197, 7
    %v4199 = vsub.s32 4, %v4198
    %v4200 = vrot.slane %v313, %v4199
    %v4201 = vlaneseq
    %v4202 = vshrl.u32 %v4201, 7
    %v4203 = vsub.s32 5, %v4202
    %v4204 = vrot.slane %v313, %v4203
    %v4205 = vlaneseq
    %v4206 = vshrl.u32 %v4205, 7
    %v4207 = vsub.s32 6, %v4206
    %v4208 = vrot.slane %v313, %v4207
    %v4209 = vlaneseq
    %v4210 = vshrl.u32 %v4209, 7
    %v4211 = vsub.s32 7, %v4210
    %v4212 = vrot.slane %v313, %v4211
    %v4221 = vadd.f32 %v4172, %v4184
    %v4222 = vadd.f32 %v4173, %v4188
    %v4223 = vadd.f32 %v4174, %v4192
    %v4224 = vadd.f32 %v4175, %v4196
    %v4225 = vadd.f32 %v4176, %v4200
    %v4226 = vadd.f32 %v4177, %v4204
    %v4227 = vadd.f32 %v4178, %v4208
    %v4228 = vadd.f32 %v4179, %v4212
    %v4229 = vmul.f32 %v4221, 0.2
    %v4230 = vmul.f32 %v4222, 0.2
    %v4231 = vmul.f32 %v4223, 0.2
    %v4232 = vmul.f32 %v4224, 0.2
    %v4233 = vmul.f32 %v4225, 0.2
    %v4234 = vmul.f32 %v4226, 0.2
    %v4235 = vmul.f32 %v4227, 0.2
    %v4236 = vmul.f32 %v4228, 0.2
    %v4237 = vmax.f32 %v4221, %v4229
    %v4238 = vmax.f32 %v4222, %v4230
    %v4239 = vmax.f32 %v4223, %v4231
    %v4240 = vmax.f32 %v4224, %v4232
    %v4241 = vmax.f32 %v4225, %v4233
    %v4242 = vmax.f32 %v4226, %v4234
    %v4243 = vmax.f32 %v4227, %v4235
    %v4244 = vmax.f32 %v4228, %v4236
    %s4245 = smul.u32 2, 128
    %s4246 = smul.u32 %s4245, 2
    %s4247 = sshll.u32 %s4246, 4
    %4248 = dma.done %s291, %s4247
    %v4249 = vpack.c.bf16 %v4237, %v4237
    %v4250 = vpack.c.bf16 %v4238, %v4238
    %v4251 = vpack.c.bf16 %v4239, %v4239
    %v4252 = vpack.c.bf16 %v4240, %v4240
    %v4253 = vpack.c.bf16 %v4241, %v4241
    %v4254 = vpack.c.bf16 %v4242, %v4242
    %v4255 = vpack.c.bf16 %v4243, %v4243
    %v4256 = vpack.c.bf16 %v4244, %v4244
    %v4257 = vld [vmem:[#allocation5] sm:$0xff]
    %v4258 = vld [vmem:[#allocation5 + $0x8] sm:$0xff]
    %v4259 = vld [vmem:[#allocation5 + $0x10] sm:$0xff]
    %v4260 = vld [vmem:[#allocation5 + $0x18] sm:$0xff]
    %v4261 = vld [vmem:[#allocation5 + $0x20] sm:$0xff]
    %v4262 = vld [vmem:[#allocation5 + $0x28] sm:$0xff]
    %v4263 = vld [vmem:[#allocation5 + $0x30] sm:$0xff]
    %v4264 = vld [vmem:[#allocation5 + $0x38] sm:$0xff]
    %v4265 = vld [vmem:[#allocation5 + $0x40] sm:$0xff]
    %v4266 = vld [vmem:[#allocation5 + $0x48] sm:$0xff]
    %v4267 = vld [vmem:[#allocation5 + $0x50] sm:$0xff]
    %v4268 = vld [vmem:[#allocation5 + $0x58] sm:$0xff]
    %v4269 = vld [vmem:[#allocation5 + $0x60] sm:$0xff]
    %v4270 = vld [vmem:[#allocation5 + $0x68] sm:$0xff]
    %v4271 = vld [vmem:[#allocation5 + $0x70] sm:$0xff]
    %v4272 = vld [vmem:[#allocation5 + $0x78] sm:$0xff]
    %v4273 = vld [vmem:[#allocation5 + $0x80] sm:$0xff]
    %v4274 = vld [vmem:[#allocation5 + $0x88] sm:$0xff]
    %v4275 = vld [vmem:[#allocation5 + $0x90] sm:$0xff]
    %v4276 = vld [vmem:[#allocation5 + $0x98] sm:$0xff]
    %v4277 = vld [vmem:[#allocation5 + $0xa0] sm:$0xff]
    %v4278 = vld [vmem:[#allocation5 + $0xa8] sm:$0xff]
    %v4279 = vld [vmem:[#allocation5 + $0xb0] sm:$0xff]
    %v4280 = vld [vmem:[#allocation5 + $0xb8] sm:$0xff]
    %v4281 = vld [vmem:[#allocation5 + $0xc0] sm:$0xff]
    %v4282 = vld [vmem:[#allocation5 + $0xc8] sm:$0xff]
    %v4283 = vld [vmem:[#allocation5 + $0xd0] sm:$0xff]
    %v4284 = vld [vmem:[#allocation5 + $0xd8] sm:$0xff]
    %v4285 = vld [vmem:[#allocation5 + $0xe0] sm:$0xff]
    %v4286 = vld [vmem:[#allocation5 + $0xe8] sm:$0xff]
    %v4287 = vld [vmem:[#allocation5 + $0xf0] sm:$0xff]
    %v4288 = vld [vmem:[#allocation5 + $0xf8] sm:$0xff]
    %v4289 = vld [vmem:[#allocation5 + $0x100] sm:$0xff]
    %v4290 = vld [vmem:[#allocation5 + $0x108] sm:$0xff]
    %v4291 = vld [vmem:[#allocation5 + $0x110] sm:$0xff]
    %v4292 = vld [vmem:[#allocation5 + $0x118] sm:$0xff]
    %v4293 = vld [vmem:[#allocation5 + $0x120] sm:$0xff]
    %v4294 = vld [vmem:[#allocation5 + $0x128] sm:$0xff]
    %v4295 = vld [vmem:[#allocation5 + $0x130] sm:$0xff]
    %v4296 = vld [vmem:[#allocation5 + $0x138] sm:$0xff]
    %v4297 = vld [vmem:[#allocation5 + $0x140] sm:$0xff]
    %v4298 = vld [vmem:[#allocation5 + $0x148] sm:$0xff]
    %v4299 = vld [vmem:[#allocation5 + $0x150] sm:$0xff]
    %v4300 = vld [vmem:[#allocation5 + $0x158] sm:$0xff]
    %v4301 = vld [vmem:[#allocation5 + $0x160] sm:$0xff]
    %v4302 = vld [vmem:[#allocation5 + $0x168] sm:$0xff]
    %v4303 = vld [vmem:[#allocation5 + $0x170] sm:$0xff]
    %v4304 = vld [vmem:[#allocation5 + $0x178] sm:$0xff]
    %v4305 = vld [vmem:[#allocation5 + $0x180] sm:$0xff]
    %v4306 = vld [vmem:[#allocation5 + $0x188] sm:$0xff]
    %v4307 = vld [vmem:[#allocation5 + $0x190] sm:$0xff]
    %v4308 = vld [vmem:[#allocation5 + $0x198] sm:$0xff]
    %v4309 = vld [vmem:[#allocation5 + $0x1a0] sm:$0xff]
    %v4310 = vld [vmem:[#allocation5 + $0x1a8] sm:$0xff]
    %v4311 = vld [vmem:[#allocation5 + $0x1b0] sm:$0xff]
    %v4312 = vld [vmem:[#allocation5 + $0x1b8] sm:$0xff]
    %v4313 = vld [vmem:[#allocation5 + $0x1c0] sm:$0xff]
    %v4314 = vld [vmem:[#allocation5 + $0x1c8] sm:$0xff]
    %v4315 = vld [vmem:[#allocation5 + $0x1d0] sm:$0xff]
    %v4316 = vld [vmem:[#allocation5 + $0x1d8] sm:$0xff]
    %v4317 = vld [vmem:[#allocation5 + $0x1e0] sm:$0xff]
    %v4318 = vld [vmem:[#allocation5 + $0x1e8] sm:$0xff]
    %v4319 = vld [vmem:[#allocation5 + $0x1f0] sm:$0xff]
    %v4320 = vld [vmem:[#allocation5 + $0x1f8] sm:$0xff]
    %v4321 = vunpack.c.l.s8.bf16 %v4257
    %v4322 = vunpack.c.l.s8.bf16 %v4258
    %v4323 = vunpack.c.h.s8.bf16 %v4257
    %v4324 = vunpack.c.h.s8.bf16 %v4258
    %v4325 = vunpack.c.l.s8.bf16 %v4259
    %v4326 = vunpack.c.l.s8.bf16 %v4260
    %v4327 = vunpack.c.h.s8.bf16 %v4259
    %v4328 = vunpack.c.h.s8.bf16 %v4260
    %v4329 = vunpack.c.l.s8.bf16 %v4261
    %v4330 = vunpack.c.l.s8.bf16 %v4262
    %v4331 = vunpack.c.h.s8.bf16 %v4261
    %v4332 = vunpack.c.h.s8.bf16 %v4262
    %v4333 = vunpack.c.l.s8.bf16 %v4263
    %v4334 = vunpack.c.l.s8.bf16 %v4264
    %v4335 = vunpack.c.h.s8.bf16 %v4263
    %v4336 = vunpack.c.h.s8.bf16 %v4264
    %v4337 = vunpack.c.l.s8.bf16 %v4265
    %v4338 = vunpack.c.l.s8.bf16 %v4266
    %v4339 = vunpack.c.h.s8.bf16 %v4265
    %v4340 = vunpack.c.h.s8.bf16 %v4266
    %v4341 = vunpack.c.l.s8.bf16 %v4267
    %v4342 = vunpack.c.l.s8.bf16 %v4268
    %v4343 = vunpack.c.h.s8.bf16 %v4267
    %v4344 = vunpack.c.h.s8.bf16 %v4268
    %v4345 = vunpack.c.l.s8.bf16 %v4269
    %v4346 = vunpack.c.l.s8.bf16 %v4270
    %v4347 = vunpack.c.h.s8.bf16 %v4269
    %v4348 = vunpack.c.h.s8.bf16 %v4270
    %v4349 = vunpack.c.l.s8.bf16 %v4271
    %v4350 = vunpack.c.l.s8.bf16 %v4272
    %v4351 = vunpack.c.h.s8.bf16 %v4271
    %v4352 = vunpack.c.h.s8.bf16 %v4272
    %v4353 = vunpack.c.l.s8.bf16 %v4273
    %v4354 = vunpack.c.l.s8.bf16 %v4274
    %v4355 = vunpack.c.h.s8.bf16 %v4273
    %v4356 = vunpack.c.h.s8.bf16 %v4274
    %v4357 = vunpack.c.l.s8.bf16 %v4275
    %v4358 = vunpack.c.l.s8.bf16 %v4276
    %v4359 = vunpack.c.h.s8.bf16 %v4275
    %v4360 = vunpack.c.h.s8.bf16 %v4276
    %v4361 = vunpack.c.l.s8.bf16 %v4277
    %v4362 = vunpack.c.l.s8.bf16 %v4278
    %v4363 = vunpack.c.h.s8.bf16 %v4277
    %v4364 = vunpack.c.h.s8.bf16 %v4278
    %v4365 = vunpack.c.l.s8.bf16 %v4279
    %v4366 = vunpack.c.l.s8.bf16 %v4280
    %v4367 = vunpack.c.h.s8.bf16 %v4279
    %v4368 = vunpack.c.h.s8.bf16 %v4280
    %v4369 = vunpack.c.l.s8.bf16 %v4281
    %v4370 = vunpack.c.l.s8.bf16 %v4282
    %v4371 = vunpack.c.h.s8.bf16 %v4281
    %v4372 = vunpack.c.h.s8.bf16 %v4282
    %v4373 = vunpack.c.l.s8.bf16 %v4283
    %v4374 = vunpack.c.l.s8.bf16 %v4284
    %v4375 = vunpack.c.h.s8.bf16 %v4283
    %v4376 = vunpack.c.h.s8.bf16 %v4284
    %v4377 = vunpack.c.l.s8.bf16 %v4285
    %v4378 = vunpack.c.l.s8.bf16 %v4286
    %v4379 = vunpack.c.h.s8.bf16 %v4285
    %v4380 = vunpack.c.h.s8.bf16 %v4286
    %v4381 = vunpack.c.l.s8.bf16 %v4287
    %v4382 = vunpack.c.l.s8.bf16 %v4288
    %v4383 = vunpack.c.h.s8.bf16 %v4287
    %v4384 = vunpack.c.h.s8.bf16 %v4288
    %v4385 = vunpack.c.l.s8.bf16 %v4289
    %v4386 = vunpack.c.l.s8.bf16 %v4290
    %v4387 = vunpack.c.h.s8.bf16 %v4289
    %v4388 = vunpack.c.h.s8.bf16 %v4290
    %v4389 = vunpack.c.l.s8.bf16 %v4291
    %v4390 = vunpack.c.l.s8.bf16 %v4292
    %v4391 = vunpack.c.h.s8.bf16 %v4291
    %v4392 = vunpack.c.h.s8.bf16 %v4292
    %v4393 = vunpack.c.l.s8.bf16 %v4293
    %v4394 = vunpack.c.l.s8.bf16 %v4294
    %v4395 = vunpack.c.h.s8.bf16 %v4293
    %v4396 = vunpack.c.h.s8.bf16 %v4294
    %v4397 = vunpack.c.l.s8.bf16 %v4295
    %v4398 = vunpack.c.l.s8.bf16 %v4296
    %v4399 = vunpack.c.h.s8.bf16 %v4295
    %v4400 = vunpack.c.h.s8.bf16 %v4296
    %v4401 = vunpack.c.l.s8.bf16 %v4297
    %v4402 = vunpack.c.l.s8.bf16 %v4298
    %v4403 = vunpack.c.h.s8.bf16 %v4297
    %v4404 = vunpack.c.h.s8.bf16 %v4298
    %v4405 = vunpack.c.l.s8.bf16 %v4299
    %v4406 = vunpack.c.l.s8.bf16 %v4300
    %v4407 = vunpack.c.h.s8.bf16 %v4299
    %v4408 = vunpack.c.h.s8.bf16 %v4300
    %v4409 = vunpack.c.l.s8.bf16 %v4301
    %v4410 = vunpack.c.l.s8.bf16 %v4302
    %v4411 = vunpack.c.h.s8.bf16 %v4301
    %v4412 = vunpack.c.h.s8.bf16 %v4302
    %v4413 = vunpack.c.l.s8.bf16 %v4303
    %v4414 = vunpack.c.l.s8.bf16 %v4304
    %v4415 = vunpack.c.h.s8.bf16 %v4303
    %v4416 = vunpack.c.h.s8.bf16 %v4304
    %v4417 = vunpack.c.l.s8.bf16 %v4305
    %v4418 = vunpack.c.l.s8.bf16 %v4306
    %v4419 = vunpack.c.h.s8.bf16 %v4305
    %v4420 = vunpack.c.h.s8.bf16 %v4306
    %v4421 = vunpack.c.l.s8.bf16 %v4307
    %v4422 = vunpack.c.l.s8.bf16 %v4308
    %v4423 = vunpack.c.h.s8.bf16 %v4307
    %v4424 = vunpack.c.h.s8.bf16 %v4308
    %v4425 = vunpack.c.l.s8.bf16 %v4309
    %v4426 = vunpack.c.l.s8.bf16 %v4310
    %v4427 = vunpack.c.h.s8.bf16 %v4309
    %v4428 = vunpack.c.h.s8.bf16 %v4310
    %v4429 = vunpack.c.l.s8.bf16 %v4311
    %v4430 = vunpack.c.l.s8.bf16 %v4312
    %v4431 = vunpack.c.h.s8.bf16 %v4311
    %v4432 = vunpack.c.h.s8.bf16 %v4312
    %v4433 = vunpack.c.l.s8.bf16 %v4313
    %v4434 = vunpack.c.l.s8.bf16 %v4314
    %v4435 = vunpack.c.h.s8.bf16 %v4313
    %v4436 = vunpack.c.h.s8.bf16 %v4314
    %v4437 = vunpack.c.l.s8.bf16 %v4315
    %v4438 = vunpack.c.l.s8.bf16 %v4316
    %v4439 = vunpack.c.h.s8.bf16 %v4315
    %v4440 = vunpack.c.h.s8.bf16 %v4316
    %v4441 = vunpack.c.l.s8.bf16 %v4317
    %v4442 = vunpack.c.l.s8.bf16 %v4318
    %v4443 = vunpack.c.h.s8.bf16 %v4317
    %v4444 = vunpack.c.h.s8.bf16 %v4318
    %v4445 = vunpack.c.l.s8.bf16 %v4319
    %v4446 = vunpack.c.l.s8.bf16 %v4320
    %v4447 = vunpack.c.h.s8.bf16 %v4319
    %v4448 = vunpack.c.h.s8.bf16 %v4320
    %4449 = vmatprep.subr.bf16.mxu0 %v4336
    %4450 = vmatpush1.bf16.msra.mxu0 %v4335
    %4451 = vmatprep.subr.bf16.mxu0 %v4334
    %4452 = vmatpush1.bf16.msra.mxu0 %v4333
    %4453 = vmatprep.subr.bf16.mxu0 %v4332
    %4454 = vmatpush1.bf16.msra.mxu0 %v4331
    %4455 = vmatprep.subr.bf16.mxu0 %v4330
    %4456 = vmatpush1.bf16.msra.mxu0 %v4329
    %4457 = vmatprep.subr.bf16.mxu0 %v4328
    %4458 = vmatpush1.bf16.msra.mxu0 %v4327
    %4459 = vmatprep.subr.bf16.mxu0 %v4326
    %4460 = vmatpush1.bf16.msra.mxu0 %v4325
    %4461 = vmatprep.subr.bf16.mxu0 %v4324
    %4462 = vmatpush1.bf16.msra.mxu0 %v4323
    %4463 = vmatprep.subr.bf16.mxu0 %v4322
    %4464 = vmatpush1.bf16.msra.mxu0 %v4321
    %4465 = vmatprep.subr.bf16.mxu0 %v4352
    %4466 = vmatpush2.bf16.msra.mxu0 %v4351
    %4467 = vmatprep.subr.bf16.mxu0 %v4350
    %4468 = vmatpush2.bf16.msra.mxu0 %v4349
    %4469 = vmatprep.subr.bf16.mxu0 %v4348
    %4470 = vmatpush2.bf16.msra.mxu0 %v4347
    %4471 = vmatprep.subr.bf16.mxu0 %v4346
    %4472 = vmatpush2.bf16.msra.mxu0 %v4345
    %4473 = vmatprep.subr.bf16.mxu0 %v4344
    %4474 = vmatpush2.bf16.msra.mxu0 %v4343
    %4475 = vmatprep.subr.bf16.mxu0 %v4342
    %4476 = vmatpush2.bf16.msra.mxu0 %v4341
    %4477 = vmatprep.subr.bf16.mxu0 %v4340
    %4478 = vmatpush2.bf16.msra.mxu0 %v4339
    %4479 = vmatprep.subr.bf16.mxu0 %v4338
    %4480 = vmatpush2.bf16.msra.mxu0 %v4337
    %4481 = vmatprep.mubr.bf16.mxu0 %v4250
    %4482 = vmatmul.mubr.bf16.gmra.mxu0 %v4249
    %v4483 = vpop.f32.mrf.mxu0
    %v4484 = vadd.f32 0.0, %v4483
    %v4485 = vpop.f32.mrf.mxu0
    %v4486 = vadd.f32 0.0, %v4485
    %v4487 = vpop.f32.mrf.mxu0
    %v4488 = vpop.f32.mrf.mxu0
    %4489 = vdwg.mxu0
    %4490 = vmatprep.subr.bf16.mxu0 %v4368
    %4491 = vmatpush1.bf16.msra.mxu0 %v4367
    %4492 = vmatprep.subr.bf16.mxu0 %v4366
    %4493 = vmatpush1.bf16.msra.mxu0 %v4365
    %4494 = vmatprep.subr.bf16.mxu0 %v4364
    %4495 = vmatpush1.bf16.msra.mxu0 %v4363
    %4496 = vmatprep.subr.bf16.mxu0 %v4362
    %4497 = vmatpush1.bf16.msra.mxu0 %v4361
    %4498 = vmatprep.subr.bf16.mxu0 %v4360
    %4499 = vmatpush1.bf16.msra.mxu0 %v4359
    %4500 = vmatprep.subr.bf16.mxu0 %v4358
    %4501 = vmatpush1.bf16.msra.mxu0 %v4357
    %4502 = vmatprep.subr.bf16.mxu0 %v4356
    %4503 = vmatpush1.bf16.msra.mxu0 %v4355
    %4504 = vmatprep.subr.bf16.mxu0 %v4354
    %4505 = vmatpush1.bf16.msra.mxu0 %v4353
    %4506 = vmatprep.subr.bf16.mxu0 %v4384
    %4507 = vmatpush2.bf16.msra.mxu0 %v4383
    %4508 = vmatprep.subr.bf16.mxu0 %v4382
    %4509 = vmatpush2.bf16.msra.mxu0 %v4381
    %4510 = vmatprep.subr.bf16.mxu0 %v4380
    %4511 = vmatpush2.bf16.msra.mxu0 %v4379
    %4512 = vmatprep.subr.bf16.mxu0 %v4378
    %4513 = vmatpush2.bf16.msra.mxu0 %v4377
    %4514 = vmatprep.subr.bf16.mxu0 %v4376
    %4515 = vmatpush2.bf16.msra.mxu0 %v4375
    %4516 = vmatprep.subr.bf16.mxu0 %v4374
    %4517 = vmatpush2.bf16.msra.mxu0 %v4373
    %4518 = vmatprep.subr.bf16.mxu0 %v4372
    %4519 = vmatpush2.bf16.msra.mxu0 %v4371
    %4520 = vmatprep.subr.bf16.mxu0 %v4370
    %4521 = vmatpush2.bf16.msra.mxu0 %v4369
    %4522 = vmatprep.mubr.bf16.mxu0 %v4252
    %4523 = vmatmul.mubr.bf16.gmra.mxu0 %v4251
    %v4524 = vpop.f32.mrf.mxu0
    %v4525 = vadd.f32 %v4484, %v4524
    %v4526 = vpop.f32.mrf.mxu0
    %v4527 = vadd.f32 %v4486, %v4526
    %v4528 = vpop.f32.mrf.mxu0
    %v4529 = vpop.f32.mrf.mxu0
    %4530 = vdwg.mxu0
    %4531 = vmatprep.subr.bf16.mxu0 %v4400
    %4532 = vmatpush1.bf16.msra.mxu0 %v4399
    %4533 = vmatprep.subr.bf16.mxu0 %v4398
    %4534 = vmatpush1.bf16.msra.mxu0 %v4397
    %4535 = vmatprep.subr.bf16.mxu0 %v4396
    %4536 = vmatpush1.bf16.msra.mxu0 %v4395
    %4537 = vmatprep.subr.bf16.mxu0 %v4394
    %4538 = vmatpush1.bf16.msra.mxu0 %v4393
    %4539 = vmatprep.subr.bf16.mxu0 %v4392
    %4540 = vmatpush1.bf16.msra.mxu0 %v4391
    %4541 = vmatprep.subr.bf16.mxu0 %v4390
    %4542 = vmatpush1.bf16.msra.mxu0 %v4389
    %4543 = vmatprep.subr.bf16.mxu0 %v4388
    %4544 = vmatpush1.bf16.msra.mxu0 %v4387
    %4545 = vmatprep.subr.bf16.mxu0 %v4386
    %4546 = vmatpush1.bf16.msra.mxu0 %v4385
    %4547 = vmatprep.subr.bf16.mxu0 %v4416
    %4548 = vmatpush2.bf16.msra.mxu0 %v4415
    %4549 = vmatprep.subr.bf16.mxu0 %v4414
    %4550 = vmatpush2.bf16.msra.mxu0 %v4413
    %4551 = vmatprep.subr.bf16.mxu0 %v4412
    %4552 = vmatpush2.bf16.msra.mxu0 %v4411
    %4553 = vmatprep.subr.bf16.mxu0 %v4410
    %4554 = vmatpush2.bf16.msra.mxu0 %v4409
    %4555 = vmatprep.subr.bf16.mxu0 %v4408
    %4556 = vmatpush2.bf16.msra.mxu0 %v4407
    %4557 = vmatprep.subr.bf16.mxu0 %v4406
    %4558 = vmatpush2.bf16.msra.mxu0 %v4405
    %4559 = vmatprep.subr.bf16.mxu0 %v4404
    %4560 = vmatpush2.bf16.msra.mxu0 %v4403
    %4561 = vmatprep.subr.bf16.mxu0 %v4402
    %4562 = vmatpush2.bf16.msra.mxu0 %v4401
    %4563 = vmatprep.mubr.bf16.mxu0 %v4254
    %4564 = vmatmul.mubr.bf16.gmra.mxu0 %v4253
    %v4565 = vpop.f32.mrf.mxu0
    %v4566 = vadd.f32 %v4525, %v4565
    %v4567 = vpop.f32.mrf.mxu0
    %v4568 = vadd.f32 %v4527, %v4567
    %v4569 = vpop.f32.mrf.mxu0
    %v4570 = vpop.f32.mrf.mxu0
    %4571 = vdwg.mxu0
    %4572 = vmatprep.subr.bf16.mxu0 %v4432
    %4573 = vmatpush1.bf16.msra.mxu0 %v4431
    %4574 = vmatprep.subr.bf16.mxu0 %v4430
    %4575 = vmatpush1.bf16.msra.mxu0 %v4429
    %4576 = vmatprep.subr.bf16.mxu0 %v4428
    %4577 = vmatpush1.bf16.msra.mxu0 %v4427
    %4578 = vmatprep.subr.bf16.mxu0 %v4426
    %4579 = vmatpush1.bf16.msra.mxu0 %v4425
    %4580 = vmatprep.subr.bf16.mxu0 %v4424
    %4581 = vmatpush1.bf16.msra.mxu0 %v4423
    %4582 = vmatprep.subr.bf16.mxu0 %v4422
    %4583 = vmatpush1.bf16.msra.mxu0 %v4421
    %4584 = vmatprep.subr.bf16.mxu0 %v4420
    %4585 = vmatpush1.bf16.msra.mxu0 %v4419
    %4586 = vmatprep.subr.bf16.mxu0 %v4418
    %4587 = vmatpush1.bf16.msra.mxu0 %v4417
    %4588 = vmatprep.subr.bf16.mxu0 %v4448
    %4589 = vmatpush2.bf16.msra.mxu0 %v4447
    %4590 = vmatprep.subr.bf16.mxu0 %v4446
    %4591 = vmatpush2.bf16.msra.mxu0 %v4445
    %4592 = vmatprep.subr.bf16.mxu0 %v4444
    %4593 = vmatpush2.bf16.msra.mxu0 %v4443
    %4594 = vmatprep.subr.bf16.mxu0 %v4442
    %4595 = vmatpush2.bf16.msra.mxu0 %v4441
    %4596 = vmatprep.subr.bf16.mxu0 %v4440
    %4597 = vmatpush2.bf16.msra.mxu0 %v4439
    %4598 = vmatprep.subr.bf16.mxu0 %v4438
    %4599 = vmatpush2.bf16.msra.mxu0 %v4437
    %4600 = vmatprep.subr.bf16.mxu0 %v4436
    %4601 = vmatpush2.bf16.msra.mxu0 %v4435
    %4602 = vmatprep.subr.bf16.mxu0 %v4434
    %4603 = vmatpush2.bf16.msra.mxu0 %v4433
    %4604 = vmatprep.mubr.bf16.mxu0 %v4256
    %4605 = vmatmul.mubr.bf16.gmra.mxu0 %v4255
    %v4606 = vpop.f32.mrf.mxu0
    %v4607 = vadd.f32 %v4566, %v4606
    %v4608 = vpop.f32.mrf.mxu0
    %v4609 = vadd.f32 %v4568, %v4608
    %v4610 = vpop.f32.mrf.mxu0
    %v4611 = vpop.f32.mrf.mxu0
    %4612 = vdwg.mxu0
    %v4614 = vlaneseq
    %v4615 = vshrl.u32 %v4614, 7
    %v4616 = vsub.s32 0, %v4615
    %v4617 = vrot.slane %v316, %v4616
    %v4618 = vlaneseq
    %v4619 = vshrl.u32 %v4618, 7
    %v4620 = vsub.s32 1, %v4619
    %v4621 = vrot.slane %v316, %v4620
    %v4624 = vmul.f32 %v4607, %v4617
    %v4625 = vmul.f32 %v4609, %v4621
    %v4627 = vlaneseq
    %v4628 = vshrl.u32 %v4627, 7
    %v4629 = vsub.s32 0, %v4628
    %v4630 = vrot.slane %v314, %v4629
    %v4631 = vlaneseq
    %v4632 = vshrl.u32 %v4631, 7
    %v4633 = vsub.s32 1, %v4632
    %v4634 = vrot.slane %v314, %v4633
    %v4637 = vadd.f32 %v4624, %v4630
    %v4638 = vadd.f32 %v4625, %v4634
    %v4639 = vtanh.pop %v4637
    %v4640 = vtanh.pop %v4638
    %v4643 = vcombine.low %v4639, %v4640
    %v4645 = vunpack.c.l.s4 1983009808
    %v4646 = vunpack.c.0.s8 %v4645
    %v4647 = vlaneseq
    %v4648 = vshrl.u32 %v4647, 7
    %v4649 = vsub.s32 %v4646, %v4648
    %v4650 = vrot.slane %v4643, %v4649
    %4652 = vst [vmem:[%s8] sm:$0xf] %v4650
    // Predicated region
    $region98: #{generator_forward.1} parent=1 // pred_check
      _
    $region99: #{generator_forward.1} parent=1 // pred_check_branch
      %4654 = sbr.rel (0) target = $region101
    $region100: #{generator_forward.1} parent=1 // pred_region
      _
    $region101: #{generator_forward.1} parent=1 // pred_fallthru
      _
    // Predicated region
    $region102: #{generator_forward.1} parent=1 // pred_check
      _
    $region103: #{generator_forward.1} parent=1 // pred_check_branch
      %4656 = sbr.rel (0) target = $region105
    $region104: #{generator_forward.1} parent=1 // pred_region
      _
    $region105: #{generator_forward.1} parent=1 // pred_fallthru
      _
    %4657 = vsyncpa [#allocation8], 1
  %4658 = vsyncmov [#allocation6]
  %s4659 = vpop.sfrf %4658
  %p4660 = scmp.eq.s32.totalorder %s4659, 0
  %p4661 = pneg %p4660
  %4663 = shalt.err (%p4661)
  %s4664 = scalar_lea.sflag [#allocation6], 1
  %4665 = vsyncmov %s4664
  %s4666 = vpop.sfrf %4665
  %p4667 = scmp.eq.s32.totalorder %s4666, 0
  %p4668 = pneg %p4667
  %4670 = shalt.err (%p4668)
  %s4671 = scalar_lea.sflag [#allocation6], 2
  %4672 = vsyncmov %s4671
  %s4673 = vpop.sfrf %4672
  %p4674 = scmp.eq.s32.totalorder %s4673, 0
  %p4675 = pneg %p4674
  %4677 = shalt.err (%p4675)
  %s4678 = scalar_lea.sflag [#allocation6], 3
  %4679 = vsyncmov %s4678
  %s4680 = vpop.sfrf %4679
  %p4681 = scmp.eq.s32.totalorder %s4680, 0
  %p4682 = pneg %p4681
  %4684 = shalt.err (%p4682)

</llo_original>
